<compile_context>
chip_gen: v5e
topology: v5e:2x2
jax: 0.10.0
libtpu: 0.0.40
codegen_flags: <defaults>
</compile_context>

<pallas_src>
import functools

import jax
import jax.numpy as jnp
from jax.experimental import pallas as pl
from jax.experimental.pallas import tpu as pltpu


def _group_norm_cf(x, num_groups, eps=1e-5):
    """GroupNorm normalization (no affine) for ONE sample, channels-first.

    x: (C, M) f32, groups are contiguous channel blocks of size C//num_groups.
    One-pass statistics: var = E[x^2] - mean^2 (single sweep over the tensor).
    Matches torch.nn.GroupNorm (biased variance) for unit-scale activations.
    """
    C, M = x.shape
    cg = C // num_groups

    def per_group_total(t):  # t: (C, 1) per-channel partial sums
        if cg == 1:
            return t
        tg = jnp.sum(t.reshape(num_groups, cg, 1), axis=1, keepdims=True)  # (G,1,1)
        return jnp.broadcast_to(tg, (num_groups, cg, 1)).reshape(C, 1)

    n_elems = jnp.float32(cg * M)
    sx = jnp.sum(x, axis=1, keepdims=True)
    sx2 = jnp.sum(x * x, axis=1, keepdims=True)
    mean = per_group_total(sx) / n_elems                       # (C, 1)
    var = per_group_total(sx2) / n_elems - mean * mean         # (C, 1)
    var = jnp.maximum(var, 0.0)
    return (x - mean) * jax.lax.rsqrt(var + eps)


def _attention_kernel(N, K, Gq1, Gk1, G2, G3,
                      feat_ref, gf_ref, gfo_ref, cnt_ref,
                      w_feat_ref, w_gf_ref, w_a_ref, w_b_ref, w_fo_ref,
                      cols_ref, out_ref):
    f32 = jnp.float32
    bf16 = jnp.bfloat16

    C1 = w_feat_ref.shape[0]
    C2 = w_gf_ref.shape[0]
    inter_C = w_a_ref.shape[0]
    C_out = w_fo_ref.shape[0]

    # ---- stacked bias / affine columns (static sublane slices, one DMA)
    off = [0]

    def col(n):
        v = cols_ref[pl.ds(off[0], n), :]
        off[0] += n
        return v

    b_feat = col(C1)
    b_gf = col(C2)
    b_a = col(inter_C)     # GN1 affine + conv bias pre-folded
    b_b = col(C_out)       # GN2 affine + conv bias pre-folded
    b_fo = col(C_out)
    gn3_g = col(C_out)
    gn3_b = col(C_out)

    feat = feat_ref[0]     # (C_in1, N)    bf16, query
    gf = gf_ref[0]         # (C_in2, K*N)  bf16, key   (K-major lanes)
    gfo = gfo_ref[0]       # (C_out, K*N)  bf16, value (K-major lanes)
    cnt = cnt_ref[0]       # (1, N)        int32, clamp(count, 1)

    # ---- query branch: kept at width N until after its slice of weight_conv #1
    q = jnp.dot(w_feat_ref[...], feat, preferred_element_type=f32) + b_feat
    q = jnp.maximum(q, 0.0)
    # GN1 groups never straddle the query/key boundary (asserted in wrapper);
    # stats over (cg, N) equal stats over the K-broadcast (cg, N*K) copy.
    q = _group_norm_cf(q, Gq1)
    ya_q = jnp.dot(w_a_ref[:, :C1], q.astype(bf16),
                   preferred_element_type=f32)                     # (inter_C, N)

    # ---- key branch: full K*N width, lane dense
    kx = jnp.dot(w_gf_ref[...], gf, preferred_element_type=f32) + b_gf
    kx = jnp.maximum(kx, 0.0)
    kx = _group_norm_cf(kx, Gk1)
    ya_k = jnp.dot(w_a_ref[:, C1:], kx.astype(bf16),
                   preferred_element_type=f32)                     # (inter_C, K*N)

    # ---- combine: replicate the per-point query as K contiguous lane blocks
    y = jnp.concatenate([ya_q] * K, axis=1) + ya_k + b_a           # (inter_C, K*N)
    y = jnp.maximum(y, 0.0)
    y = _group_norm_cf(y, G2)                                      # GN2 affine folded into w_b
    scores = jnp.dot(w_b_ref[...], y.astype(bf16),
                     preferred_element_type=f32) + b_b             # (C_out, K*N)

    # ---- value branch: conv -> GroupNorm (affine kept) -> ReLU
    v = jnp.dot(w_fo_ref[...], gfo, preferred_element_type=f32) + b_fo
    v = _group_norm_cf(v, G3) * gn3_g + gn3_b
    v = jnp.maximum(v, 0.0)                                        # (C_out, K*N)

    # ---- masked softmax over K + weighted sum: pure VPU work on lane-dense
    #      (C_out, N) slices (K-major layout => slice k = columns [k*N,(k+1)*N))
    s_k = []
    for k in range(K):
        sk = scores[:, k * N:(k + 1) * N]
        s_k.append(jnp.where(cnt > k, sk, f32(-1e9)))
    m = s_k[0]
    for k in range(1, K):
        m = jnp.maximum(m, s_k[k])
    denom = jnp.zeros_like(m)
    acc = jnp.zeros((C_out, N), f32)
    for k in range(K):
        e = jnp.exp(s_k[k] - m)
        denom = denom + e
        acc = acc + e * v[:, k * N:(k + 1) * N]

    out_ref[0] = acc * pl.reciprocal(denom, approx=True)           # (C_out, N), lane dense


def attention_forward(feat, grouped_feat, grouped_feat_out, count, params):
    """feat (B, C_in1, N), grouped_feat (B, C_in2, N, K),
    grouped_feat_out (B, C_out, N, K), count (B, N) int.
    Returns (B, C_out, N), matching the PyTorch AttentionModule forward."""
    B, C_in1, N = feat.shape
    _, C_in2, _, K = grouped_feat.shape
    C_out = grouped_feat_out.shape[1]

    (w_feat, b_feat, w_gf, b_gf, gn1_g, gn1_b, w_a, b_a,
     gn2_g, gn2_b, w_b, b_b, w_fo, b_fo, gn3_g, gn3_b) = [
        jnp.asarray(p, jnp.float32) for p in params]

    C1 = w_feat.shape[0]
    C2 = w_gf.shape[0]
    inter_C = w_a.shape[0]
    G1 = min(32, C1 + C2)
    G2 = min(32, inter_C)
    G3 = min(32, C_out)
    # TODO(synk): MyGroupNorm's partial-channel passthrough branch (channels not
    # divisible by groups) is not implemented by the in-kernel GroupNorm.
    assert (C1 + C2) % G1 == 0 and inter_C % G2 == 0 and C_out % G3 == 0
    cg1 = (C1 + C2) // G1
    # Query/key GN1 split is only valid if groups don't straddle the concat boundary.
    assert C1 % cg1 == 0, "GN1 groups straddle the feat/grouped_feat boundary"
    Gq1 = C1 // cg1
    Gk1 = C2 // cg1

    # Fold GN1/GN2 affine transforms into the 1x1 conv that follows them (f32).
    w_a_s = w_a * gn1_g[None, :]               # (inter_C, C1+C2)
    b_a_f = b_a + w_a @ gn1_b                  # (inter_C,)
    w_b_f = w_b * gn2_g[None, :]               # (C_out, inter_C)
    b_b_f = b_b + w_b @ gn2_b                  # (C_out,)

    # Consolidated parameters: bf16 conv weights + one stacked f32 bias column.
    bf16 = jnp.bfloat16
    weights = [w_feat.astype(bf16), w_gf.astype(bf16), w_a_s.astype(bf16),
               w_b_f.astype(bf16), w_fo.astype(bf16)]
    cols = jnp.concatenate([b_feat, b_gf, b_a_f, b_b_f, b_fo, gn3_g, gn3_b]
                           ).reshape(-1, 1).astype(jnp.float32)

    # Channels-first, K-major spatial layout (one XLA transpose per grouped
    # tensor, then a free reshape).  bf16 halves the dominant HBM traffic.
    feat_in = feat.astype(bf16)                                            # (B, C_in1, N)
    gf_in = jnp.transpose(grouped_feat, (0, 1, 3, 2)
                          ).reshape(B, C_in2, K * N).astype(bf16)          # (B, C_in2, K*N)
    gfo_in = jnp.transpose(grouped_feat_out, (0, 1, 3, 2)
                           ).reshape(B, C_out, K * N).astype(bf16)         # (B, C_out, K*N)
    cnt_in = jnp.maximum(count, 1).astype(jnp.int32).reshape(B, 1, N)      # (B, 1, N)

    data_specs = [
        pl.BlockSpec((1, C_in1, N), lambda b: (b, 0, 0)),
        pl.BlockSpec((1, C_in2, K * N), lambda b: (b, 0, 0)),
        pl.BlockSpec((1, C_out, K * N), lambda b: (b, 0, 0)),
        pl.BlockSpec((1, 1, N), lambda b: (b, 0, 0)),
    ]
    param_specs = [pl.BlockSpec(p.shape, lambda b: (0, 0))
                   for p in weights + [cols]]

    kernel = functools.partial(_attention_kernel, N, K, Gq1, Gk1, G2, G3)

    return pl.pallas_call(
        kernel,
        out_shape=jax.ShapeDtypeStruct((B, C_out, N), jnp.float32),
        grid=(B,),
        in_specs=data_specs + param_specs,
        out_specs=pl.BlockSpec((1, C_out, N), lambda b: (b, 0, 0)),
        compiler_params=pltpu.CompilerParams(
            dimension_semantics=("parallel",),
            vmem_limit_bytes=64 * 1024 * 1024),
    )(feat_in, gf_in, gfo_in, cnt_in, *weights, cols)


def reference_forward(feat, grouped_feat, grouped_feat_out, count, params):
    """Pure-JAX f32 reference mirroring the PyTorch AttentionModule forward."""
    (w_feat, b_feat, w_gf, b_gf, gn1_g, gn1_b, w_a, b_a,
     gn2_g, gn2_b, w_b, b_b, w_fo, b_fo, gn3_g, gn3_b) = params
    B, _, N = feat.shape
    K = grouped_feat.shape[-1]
    hi = jax.lax.Precision.HIGHEST

    def conv1x1(x, wgt, bias):                 # x: (B, C_in, N, K)
        return jnp.einsum('oc,bcnk->bonk', wgt, x, precision=hi) + bias[None, :, None, None]

    def group_norm(x, num_groups, g, b, eps=1e-5):
        B_, C, N_, K_ = x.shape
        xg = x.reshape(B_, num_groups, C // num_groups, N_, K_)
        mean = xg.mean(axis=(2, 3, 4), keepdims=True)
        var = ((xg - mean) ** 2).mean(axis=(2, 3, 4), keepdims=True)
        xn = ((xg - mean) / jnp.sqrt(var + eps)).reshape(B_, C, N_, K_)
        return xn * g[None, :, None, None] + b[None, :, None, None]

    feat1 = conv1x1(feat[:, :, :, None], w_feat, b_feat)
    feat1 = jnp.broadcast_to(feat1, (B, feat1.shape[1], N, K))
    gf1 = conv1x1(grouped_feat, w_gf, b_gf)
    total = jnp.concatenate([feat1, gf1], axis=1)

    x = jnp.maximum(total, 0.0)
    x = group_norm(x, min(32, total.shape[1]), gn1_g, gn1_b)
    x = conv1x1(x, w_a, b_a)
    x = jnp.maximum(x, 0.0)
    x = group_norm(x, min(32, x.shape[1]), gn2_g, gn2_b)
    scores = conv1x1(x, w_b, b_b)

    cnt = jnp.maximum(count, 1)
    mask = (jnp.arange(K)[None, None, :] < cnt[:, :, None]).astype(jnp.float32)
    mask = mask[:, None, :, :]
    scores = scores * mask + (-1000000000.0) * (1.0 - mask)
    weight = jax.nn.softmax(scores, axis=-1)

    v = conv1x1(grouped_feat_out, w_fo, b_fo)
    v = group_norm(v, min(32, v.shape[1]), gn3_g, gn3_b)
    v = jnp.maximum(v, 0.0)
    return (v * weight).sum(axis=-1)


if __name__ == "__main__":
    # Module config: AttentionModule(C_in1=8, C_in2=16, C1=16, C2=16, C_out=32)
    # N chosen as a multiple of 128 so K-slices and the output slab are lane dense.
    B, N, K = 2, 128, 8
    C_in1, C_in2 = 8, 16
    C1 = max(16, 32)            # C1 = max(C1, 32) in __init__
    C2 = max(16, 32)
    C_out = 32
    inter_C = min(C1 + C2, C_out)

    key = jax.random.PRNGKey(0)
    keys = jax.random.split(key, 20)

    feat = jax.random.normal(keys[0], (B, C_in1, N), dtype=jnp.float32)
    grouped_feat = jax.random.normal(keys[1], (B, C_in2, N, K), dtype=jnp.float32)
    grouped_feat_out = jax.random.normal(keys[2], (B, C_out, N, K), dtype=jnp.float32)
    count = jax.random.randint(keys[3], (B, N), 0, K + 1)

    def w(k, shape, scale=0.1):
        return scale * jax.random.normal(k, shape, dtype=jnp.float32)

    # Parameters in native PyTorch layout: conv weights (C_out, C_in); conv
    # biases and GroupNorm affine params (C,).
    params = (
        w(keys[4], (C1, C_in1)), w(keys[5], (C1,)),                    # feat_conv
        w(keys[6], (C2, C_in2)), w(keys[7], (C2,)),                    # grouped_feat_conv
        1.0 + w(keys[8], (C1 + C2,)), w(keys[9], (C1 + C2,)),          # GroupNorm 1
        w(keys[10], (inter_C, C1 + C2)), w(keys[11], (inter_C,)),      # weight_conv #1
        1.0 + w(keys[12], (inter_C,)), w(keys[13], (inter_C,)),        # GroupNorm 2
        w(keys[14], (C_out, inter_C)), w(keys[15], (C_out,)),          # weight_conv #2
        w(keys[16], (C_out, C_out)), w(keys[17], (C_out,)),            # feat_out_conv
        1.0 + w(keys[18], (C_out,)), w(keys[19], (C_out,)),            # GroupNorm 3
    )

    out = attention_forward(feat, grouped_feat, grouped_feat_out, count, params)
    out = jax.block_until_ready(out)
    assert out.shape == (B, C_out, N)
    assert bool(jnp.all(jnp.isfinite(out)))

    ref = reference_forward(feat, grouped_feat, grouped_feat_out, count, params)
    abs_err = jnp.abs(out - ref)
    max_err = float(jnp.max(abs_err))
    mean_err = float(jnp.mean(abs_err))
    # bf16 MXU inputs + approximate softmax reciprocal vs. an all-f32 HIGHEST
    # precision reference: allow a loose max-abs bound, tight mean-abs bound.
    assert max_err < 1e-1, f"max abs err vs reference: {max_err}"
    assert mean_err < 1e-2, f"mean abs err vs reference: {mean_err}"
    print("KERNEL_OK")
</pallas_src>

<mosaic_0001>
module attributes {stable_mosaic.version = 11 : i64} {
  func.func @_attention_kernel(%arg0: i32, %arg1: memref<1x8x128xbf16, #tpu.memory_space<vmem>>, %arg2: memref<1x16x1024xbf16, #tpu.memory_space<vmem>>, %arg3: memref<1x32x1024xbf16, #tpu.memory_space<vmem>>, %arg4: memref<1x1x128xi32, #tpu.memory_space<vmem>>, %arg5: memref<32x8xbf16, #tpu.memory_space<vmem>>, %arg6: memref<32x16xbf16, #tpu.memory_space<vmem>>, %arg7: memref<32x64xbf16, #tpu.memory_space<vmem>>, %arg8: memref<32x32xbf16, #tpu.memory_space<vmem>>, %arg9: memref<32x32xbf16, #tpu.memory_space<vmem>>, %arg10: memref<224x1xf32, #tpu.memory_space<vmem>>, %arg11: memref<1x32x128xf32, #tpu.memory_space<vmem>>) attributes {dimension_semantics = [#tpu.dimension_semantics<parallel>], iteration_bounds = array<i64: 2>, scalar_prefetch = 0 : i64, scratch_operands = 0 : i64, tpu.core_type = #tpu.core_type<tc>, window_params = [{transform_indices = @transform_0, window_bounds = array<i64: 1, 8, 128>}, {transform_indices = @transform_1, window_bounds = array<i64: 1, 16, 1024>}, {transform_indices = @transform_2, window_bounds = array<i64: 1, 32, 1024>}, {transform_indices = @transform_3, window_bounds = array<i64: 1, 1, 128>}, {pipeline_mode = #tpu.pipeline_mode<synchronous>, transform_indices = @transform_4, window_bounds = array<i64: 32, 8>}, {pipeline_mode = #tpu.pipeline_mode<synchronous>, transform_indices = @transform_5, window_bounds = array<i64: 32, 16>}, {pipeline_mode = #tpu.pipeline_mode<synchronous>, transform_indices = @transform_6, window_bounds = array<i64: 32, 64>}, {pipeline_mode = #tpu.pipeline_mode<synchronous>, transform_indices = @transform_7, window_bounds = array<i64: 32, 32>}, {pipeline_mode = #tpu.pipeline_mode<synchronous>, transform_indices = @transform_8, window_bounds = array<i64: 32, 32>}, {pipeline_mode = #tpu.pipeline_mode<synchronous>, transform_indices = @transform_9, window_bounds = array<i64: 224, 1>}, {transform_indices = @transform_10, window_bounds = array<i64: 1, 32, 128>}]} {
    %c0 = arith.constant 0 : index
    %c0_0 = arith.constant 0 : index
    %0 = vector.load %arg10[%c0, %c0_0] : memref<224x1xf32, #tpu.memory_space<vmem>>, vector<32x1xf32>
    %c32 = arith.constant 32 : index
    %c0_1 = arith.constant 0 : index
    %1 = vector.load %arg10[%c32, %c0_1] : memref<224x1xf32, #tpu.memory_space<vmem>>, vector<32x1xf32>
    %c64 = arith.constant 64 : index
    %c0_2 = arith.constant 0 : index
    %2 = vector.load %arg10[%c64, %c0_2] : memref<224x1xf32, #tpu.memory_space<vmem>>, vector<32x1xf32>
    %c96 = arith.constant 96 : index
    %c0_3 = arith.constant 0 : index
    %3 = vector.load %arg10[%c96, %c0_3] : memref<224x1xf32, #tpu.memory_space<vmem>>, vector<32x1xf32>
    %c128 = arith.constant 128 : index
    %c0_4 = arith.constant 0 : index
    %4 = vector.load %arg10[%c128, %c0_4] : memref<224x1xf32, #tpu.memory_space<vmem>>, vector<32x1xf32>
    %c160 = arith.constant 160 : index
    %c0_5 = arith.constant 0 : index
    %5 = vector.load %arg10[%c160, %c0_5] : memref<224x1xf32, #tpu.memory_space<vmem>>, vector<32x1xf32>
    %c192 = arith.constant 192 : index
    %c0_6 = arith.constant 0 : index
    %6 = vector.load %arg10[%c192, %c0_6] : memref<224x1xf32, #tpu.memory_space<vmem>>, vector<32x1xf32>
    %c0_7 = arith.constant 0 : index
    %c0_8 = arith.constant 0 : index
    %c0_9 = arith.constant 0 : index
    %7 = vector.load %arg1[%c0_7, %c0_8, %c0_9] : memref<1x8x128xbf16, #tpu.memory_space<vmem>>, vector<1x8x128xbf16>
    %8 = vector.shape_cast %7 : vector<1x8x128xbf16> to vector<8x128xbf16>
    %c0_10 = arith.constant 0 : index
    %c0_11 = arith.constant 0 : index
    %c0_12 = arith.constant 0 : index
    %9 = vector.load %arg2[%c0_10, %c0_11, %c0_12] : memref<1x16x1024xbf16, #tpu.memory_space<vmem>>, vector<1x16x1024xbf16>
    %10 = vector.shape_cast %9 : vector<1x16x1024xbf16> to vector<16x1024xbf16>
    %c0_13 = arith.constant 0 : index
    %c0_14 = arith.constant 0 : index
    %c0_15 = arith.constant 0 : index
    %11 = vector.load %arg3[%c0_13, %c0_14, %c0_15] : memref<1x32x1024xbf16, #tpu.memory_space<vmem>>, vector<1x32x1024xbf16>
    %12 = vector.shape_cast %11 : vector<1x32x1024xbf16> to vector<32x1024xbf16>
    %c0_16 = arith.constant 0 : index
    %c0_17 = arith.constant 0 : index
    %c0_18 = arith.constant 0 : index
    %13 = vector.load %arg4[%c0_16, %c0_17, %c0_18] : memref<1x1x128xi32, #tpu.memory_space<vmem>>, vector<1x1x128xi32>
    %14 = vector.shape_cast %13 : vector<1x1x128xi32> to vector<1x128xi32>
    %c0_19 = arith.constant 0 : index
    %c0_20 = arith.constant 0 : index
    %15 = vector.load %arg5[%c0_19, %c0_20] : memref<32x8xbf16, #tpu.memory_space<vmem>>, vector<32x8xbf16>
    %cst = arith.constant dense<0.000000e+00> : vector<32x128xf32>
    %16 = tpu.matmul %15, %8, %cst {dimension_numbers = #tpu.dot_dimension_numbers<[1], [0], [0], [1], [0, 0, 1, 1], [], []>} : vector<32x8xbf16>, vector<8x128xbf16>, vector<32x128xf32> -> vector<32x128xf32>
    %17 = vector.broadcast %0 : vector<32x1xf32> to vector<32x128xf32>
    %18 = arith.addf %16, %17 : vector<32x128xf32>
    %cst_21 = arith.constant 0.000000e+00 : f32
    %19 = vector.broadcast %cst_21 : f32 to vector<32x128xf32>
    %20 = arith.maximumf %18, %19 : vector<32x128xf32>
    %cst_22 = arith.constant dense<0.000000e+00> : vector<32xf32>
    %21 = vector.multi_reduction <add>, %20, %cst_22 [1] : vector<32x128xf32> to vector<32xf32>
    %22 = vector.shape_cast %21 : vector<32xf32> to vector<32x1xf32>
    %23 = arith.mulf %20, %20 : vector<32x128xf32>
    %cst_23 = arith.constant dense<0.000000e+00> : vector<32xf32>
    %24 = vector.multi_reduction <add>, %23, %cst_23 [1] : vector<32x128xf32> to vector<32xf32>
    %25 = vector.shape_cast %24 : vector<32xf32> to vector<32x1xf32>
    %26 = vector.shape_cast %22 : vector<32x1xf32> to vector<16x2x1xf32>
    %cst_24 = arith.constant dense<0.000000e+00> : vector<16x1xf32>
    %27 = vector.multi_reduction <add>, %26, %cst_24 [1] : vector<16x2x1xf32> to vector<16x1xf32>
    %28 = vector.shape_cast %27 : vector<16x1xf32> to vector<16x1x1xf32>
    %29 = vector.shape_cast %28 : vector<16x1x1xf32> to vector<16x1x1xf32>
    %30 = vector.broadcast %29 : vector<16x1x1xf32> to vector<16x2x1xf32>
    %31 = vector.shape_cast %30 : vector<16x2x1xf32> to vector<32x1xf32>
    %cst_25 = arith.constant 2.560000e+02 : f32
    %32 = vector.broadcast %cst_25 : f32 to vector<32x1xf32>
    %33 = arith.divf %31, %32 : vector<32x1xf32>
    %34 = vector.shape_cast %25 : vector<32x1xf32> to vector<16x2x1xf32>
    %cst_26 = arith.constant dense<0.000000e+00> : vector<16x1xf32>
    %35 = vector.multi_reduction <add>, %34, %cst_26 [1] : vector<16x2x1xf32> to vector<16x1xf32>
    %36 = vector.shape_cast %35 : vector<16x1xf32> to vector<16x1x1xf32>
    %37 = vector.shape_cast %36 : vector<16x1x1xf32> to vector<16x1x1xf32>
    %38 = vector.broadcast %37 : vector<16x1x1xf32> to vector<16x2x1xf32>
    %39 = vector.shape_cast %38 : vector<16x2x1xf32> to vector<32x1xf32>
    %cst_27 = arith.constant 2.560000e+02 : f32
    %40 = vector.broadcast %cst_27 : f32 to vector<32x1xf32>
    %41 = arith.divf %39, %40 : vector<32x1xf32>
    %42 = arith.mulf %33, %33 : vector<32x1xf32>
    %43 = arith.subf %41, %42 : vector<32x1xf32>
    %cst_28 = arith.constant 0.000000e+00 : f32
    %44 = vector.broadcast %cst_28 : f32 to vector<32x1xf32>
    %45 = arith.maximumf %43, %44 : vector<32x1xf32>
    %46 = vector.broadcast %33 : vector<32x1xf32> to vector<32x128xf32>
    %47 = arith.subf %20, %46 : vector<32x128xf32>
    %cst_29 = arith.constant 9.99999974E-6 : f32
    %48 = vector.broadcast %cst_29 : f32 to vector<32x1xf32>
    %49 = arith.addf %45, %48 : vector<32x1xf32>
    %50 = math.rsqrt %49 : vector<32x1xf32>
    %51 = vector.broadcast %50 : vector<32x1xf32> to vector<32x128xf32>
    %52 = arith.mulf %47, %51 : vector<32x128xf32>
    %c0_30 = arith.constant 0 : index
    %c0_31 = arith.constant 0 : index
    %53 = vector.load %arg7[%c0_30, %c0_31] : memref<32x64xbf16, #tpu.memory_space<vmem>>, vector<32x32xbf16>
    %54 = arith.truncf %52 : vector<32x128xf32> to vector<32x128xbf16>
    %cst_32 = arith.constant dense<0.000000e+00> : vector<32x128xf32>
    %55 = tpu.matmul %53, %54, %cst_32 {dimension_numbers = #tpu.dot_dimension_numbers<[1], [0], [0], [1], [0, 0, 1, 1], [], []>} : vector<32x32xbf16>, vector<32x128xbf16>, vector<32x128xf32> -> vector<32x128xf32>
    %c0_33 = arith.constant 0 : index
    %c0_34 = arith.constant 0 : index
    %56 = vector.load %arg6[%c0_33, %c0_34] : memref<32x16xbf16, #tpu.memory_space<vmem>>, vector<32x16xbf16>
    %cst_35 = arith.constant dense<0.000000e+00> : vector<32x1024xf32>
    %57 = tpu.matmul %56, %10, %cst_35 {dimension_numbers = #tpu.dot_dimension_numbers<[1], [0], [0], [1], [0, 0, 1, 1], [], []>} : vector<32x16xbf16>, vector<16x1024xbf16>, vector<32x1024xf32> -> vector<32x1024xf32>
    %58 = vector.broadcast %1 : vector<32x1xf32> to vector<32x1024xf32>
    %59 = arith.addf %57, %58 : vector<32x1024xf32>
    %cst_36 = arith.constant 0.000000e+00 : f32
    %60 = vector.broadcast %cst_36 : f32 to vector<32x1024xf32>
    %61 = arith.maximumf %59, %60 : vector<32x1024xf32>
    %cst_37 = arith.constant dense<0.000000e+00> : vector<32xf32>
    %62 = vector.multi_reduction <add>, %61, %cst_37 [1] : vector<32x1024xf32> to vector<32xf32>
    %63 = vector.shape_cast %62 : vector<32xf32> to vector<32x1xf32>
    %64 = arith.mulf %61, %61 : vector<32x1024xf32>
    %cst_38 = arith.constant dense<0.000000e+00> : vector<32xf32>
    %65 = vector.multi_reduction <add>, %64, %cst_38 [1] : vector<32x1024xf32> to vector<32xf32>
    %66 = vector.shape_cast %65 : vector<32xf32> to vector<32x1xf32>
    %67 = vector.shape_cast %63 : vector<32x1xf32> to vector<16x2x1xf32>
    %cst_39 = arith.constant dense<0.000000e+00> : vector<16x1xf32>
    %68 = vector.multi_reduction <add>, %67, %cst_39 [1] : vector<16x2x1xf32> to vector<16x1xf32>
    %69 = vector.shape_cast %68 : vector<16x1xf32> to vector<16x1x1xf32>
    %70 = vector.shape_cast %69 : vector<16x1x1xf32> to vector<16x1x1xf32>
    %71 = vector.broadcast %70 : vector<16x1x1xf32> to vector<16x2x1xf32>
    %72 = vector.shape_cast %71 : vector<16x2x1xf32> to vector<32x1xf32>
    %cst_40 = arith.constant 2.048000e+03 : f32
    %73 = vector.broadcast %cst_40 : f32 to vector<32x1xf32>
    %74 = arith.divf %72, %73 : vector<32x1xf32>
    %75 = vector.shape_cast %66 : vector<32x1xf32> to vector<16x2x1xf32>
    %cst_41 = arith.constant dense<0.000000e+00> : vector<16x1xf32>
    %76 = vector.multi_reduction <add>, %75, %cst_41 [1] : vector<16x2x1xf32> to vector<16x1xf32>
    %77 = vector.shape_cast %76 : vector<16x1xf32> to vector<16x1x1xf32>
    %78 = vector.shape_cast %77 : vector<16x1x1xf32> to vector<16x1x1xf32>
    %79 = vector.broadcast %78 : vector<16x1x1xf32> to vector<16x2x1xf32>
    %80 = vector.shape_cast %79 : vector<16x2x1xf32> to vector<32x1xf32>
    %cst_42 = arith.constant 2.048000e+03 : f32
    %81 = vector.broadcast %cst_42 : f32 to vector<32x1xf32>
    %82 = arith.divf %80, %81 : vector<32x1xf32>
    %83 = arith.mulf %74, %74 : vector<32x1xf32>
    %84 = arith.subf %82, %83 : vector<32x1xf32>
    %cst_43 = arith.constant 0.000000e+00 : f32
    %85 = vector.broadcast %cst_43 : f32 to vector<32x1xf32>
    %86 = arith.maximumf %84, %85 : vector<32x1xf32>
    %87 = vector.broadcast %74 : vector<32x1xf32> to vector<32x1024xf32>
    %88 = arith.subf %61, %87 : vector<32x1024xf32>
    %cst_44 = arith.constant 9.99999974E-6 : f32
    %89 = vector.broadcast %cst_44 : f32 to vector<32x1xf32>
    %90 = arith.addf %86, %89 : vector<32x1xf32>
    %91 = math.rsqrt %90 : vector<32x1xf32>
    %92 = vector.broadcast %91 : vector<32x1xf32> to vector<32x1024xf32>
    %93 = arith.mulf %88, %92 : vector<32x1024xf32>
    %c0_45 = arith.constant 0 : index
    %c32_46 = arith.constant 32 : index
    %94 = vector.load %arg7[%c0_45, %c32_46] : memref<32x64xbf16, #tpu.memory_space<vmem>>, vector<32x32xbf16>
    %95 = arith.truncf %93 : vector<32x1024xf32> to vector<32x1024xbf16>
    %cst_47 = arith.constant dense<0.000000e+00> : vector<32x1024xf32>
    %96 = tpu.matmul %94, %95, %cst_47 {dimension_numbers = #tpu.dot_dimension_numbers<[1], [0], [0], [1], [0, 0, 1, 1], [], []>} : vector<32x32xbf16>, vector<32x1024xbf16>, vector<32x1024xf32> -> vector<32x1024xf32>
    %97 = tpu.concatenate %55, %55, %55, %55, %55, %55, %55, %55 in 1 : vector<32x128xf32>, vector<32x128xf32>, vector<32x128xf32>, vector<32x128xf32>, vector<32x128xf32>, vector<32x128xf32>, vector<32x128xf32>, vector<32x128xf32> -> vector<32x1024xf32>
    %98 = arith.addf %97, %96 : vector<32x1024xf32>
    %99 = vector.broadcast %2 : vector<32x1xf32> to vector<32x1024xf32>
    %100 = arith.addf %98, %99 : vector<32x1024xf32>
    %cst_48 = arith.constant 0.000000e+00 : f32
    %101 = vector.broadcast %cst_48 : f32 to vector<32x1024xf32>
    %102 = arith.maximumf %100, %101 : vector<32x1024xf32>
    %cst_49 = arith.constant dense<0.000000e+00> : vector<32xf32>
    %103 = vector.multi_reduction <add>, %102, %cst_49 [1] : vector<32x1024xf32> to vector<32xf32>
    %104 = vector.shape_cast %103 : vector<32xf32> to vector<32x1xf32>
    %105 = arith.mulf %102, %102 : vector<32x1024xf32>
    %cst_50 = arith.constant dense<0.000000e+00> : vector<32xf32>
    %106 = vector.multi_reduction <add>, %105, %cst_50 [1] : vector<32x1024xf32> to vector<32xf32>
    %107 = vector.shape_cast %106 : vector<32xf32> to vector<32x1xf32>
    %cst_51 = arith.constant 1.024000e+03 : f32
    %108 = vector.broadcast %cst_51 : f32 to vector<32x1xf32>
    %109 = arith.divf %104, %108 : vector<32x1xf32>
    %cst_52 = arith.constant 1.024000e+03 : f32
    %110 = vector.broadcast %cst_52 : f32 to vector<32x1xf32>
    %111 = arith.divf %107, %110 : vector<32x1xf32>
    %112 = arith.mulf %109, %109 : vector<32x1xf32>
    %113 = arith.subf %111, %112 : vector<32x1xf32>
    %cst_53 = arith.constant 0.000000e+00 : f32
    %114 = vector.broadcast %cst_53 : f32 to vector<32x1xf32>
    %115 = arith.maximumf %113, %114 : vector<32x1xf32>
    %116 = vector.broadcast %109 : vector<32x1xf32> to vector<32x1024xf32>
    %117 = arith.subf %102, %116 : vector<32x1024xf32>
    %cst_54 = arith.constant 9.99999974E-6 : f32
    %118 = vector.broadcast %cst_54 : f32 to vector<32x1xf32>
    %119 = arith.addf %115, %118 : vector<32x1xf32>
    %120 = math.rsqrt %119 : vector<32x1xf32>
    %121 = vector.broadcast %120 : vector<32x1xf32> to vector<32x1024xf32>
    %122 = arith.mulf %117, %121 : vector<32x1024xf32>
    %c0_55 = arith.constant 0 : index
    %c0_56 = arith.constant 0 : index
    %123 = vector.load %arg8[%c0_55, %c0_56] : memref<32x32xbf16, #tpu.memory_space<vmem>>, vector<32x32xbf16>
    %124 = arith.truncf %122 : vector<32x1024xf32> to vector<32x1024xbf16>
    %cst_57 = arith.constant dense<0.000000e+00> : vector<32x1024xf32>
    %125 = tpu.matmul %123, %124, %cst_57 {dimension_numbers = #tpu.dot_dimension_numbers<[1], [0], [0], [1], [0, 0, 1, 1], [], []>} : vector<32x32xbf16>, vector<32x1024xbf16>, vector<32x1024xf32> -> vector<32x1024xf32>
    %126 = vector.broadcast %3 : vector<32x1xf32> to vector<32x1024xf32>
    %127 = arith.addf %125, %126 : vector<32x1024xf32>
    %c0_58 = arith.constant 0 : index
    %c0_59 = arith.constant 0 : index
    %128 = vector.load %arg9[%c0_58, %c0_59] : memref<32x32xbf16, #tpu.memory_space<vmem>>, vector<32x32xbf16>
    %cst_60 = arith.constant dense<0.000000e+00> : vector<32x1024xf32>
    %129 = tpu.matmul %128, %12, %cst_60 {dimension_numbers = #tpu.dot_dimension_numbers<[1], [0], [0], [1], [0, 0, 1, 1], [], []>} : vector<32x32xbf16>, vector<32x1024xbf16>, vector<32x1024xf32> -> vector<32x1024xf32>
    %130 = vector.broadcast %4 : vector<32x1xf32> to vector<32x1024xf32>
    %131 = arith.addf %129, %130 : vector<32x1024xf32>
    %cst_61 = arith.constant dense<0.000000e+00> : vector<32xf32>
    %132 = vector.multi_reduction <add>, %131, %cst_61 [1] : vector<32x1024xf32> to vector<32xf32>
    %133 = vector.shape_cast %132 : vector<32xf32> to vector<32x1xf32>
    %134 = arith.mulf %131, %131 : vector<32x1024xf32>
    %cst_62 = arith.constant dense<0.000000e+00> : vector<32xf32>
    %135 = vector.multi_reduction <add>, %134, %cst_62 [1] : vector<32x1024xf32> to vector<32xf32>
    %136 = vector.shape_cast %135 : vector<32xf32> to vector<32x1xf32>
    %cst_63 = arith.constant 1.024000e+03 : f32
    %137 = vector.broadcast %cst_63 : f32 to vector<32x1xf32>
    %138 = arith.divf %133, %137 : vector<32x1xf32>
    %cst_64 = arith.constant 1.024000e+03 : f32
    %139 = vector.broadcast %cst_64 : f32 to vector<32x1xf32>
    %140 = arith.divf %136, %139 : vector<32x1xf32>
    %141 = arith.mulf %138, %138 : vector<32x1xf32>
    %142 = arith.subf %140, %141 : vector<32x1xf32>
    %cst_65 = arith.constant 0.000000e+00 : f32
    %143 = vector.broadcast %cst_65 : f32 to vector<32x1xf32>
    %144 = arith.maximumf %142, %143 : vector<32x1xf32>
    %145 = vector.broadcast %138 : vector<32x1xf32> to vector<32x1024xf32>
    %146 = arith.subf %131, %145 : vector<32x1024xf32>
    %cst_66 = arith.constant 9.99999974E-6 : f32
    %147 = vector.broadcast %cst_66 : f32 to vector<32x1xf32>
    %148 = arith.addf %144, %147 : vector<32x1xf32>
    %149 = math.rsqrt %148 : vector<32x1xf32>
    %150 = vector.broadcast %149 : vector<32x1xf32> to vector<32x1024xf32>
    %151 = arith.mulf %146, %150 : vector<32x1024xf32>
    %152 = vector.broadcast %5 : vector<32x1xf32> to vector<32x1024xf32>
    %153 = arith.mulf %151, %152 : vector<32x1024xf32>
    %154 = vector.broadcast %6 : vector<32x1xf32> to vector<32x1024xf32>
    %155 = arith.addf %153, %154 : vector<32x1024xf32>
    %cst_67 = arith.constant 0.000000e+00 : f32
    %156 = vector.broadcast %cst_67 : f32 to vector<32x1024xf32>
    %157 = arith.maximumf %155, %156 : vector<32x1024xf32>
    %158 = vector.extract_strided_slice %127 {offsets = [0, 0], sizes = [32, 128], strides = [1, 1]} : vector<32x1024xf32> to vector<32x128xf32>
    %c0_i32 = arith.constant 0 : i32
    %159 = vector.broadcast %c0_i32 : i32 to vector<1x128xi32>
    %160 = arith.cmpi sgt, %14, %159 : vector<1x128xi32>
    %cst_68 = arith.constant -1.000000e+09 : f32
    %161 = vector.shape_cast %160 : vector<1x128xi1> to vector<1x128xi1>
    %162 = vector.broadcast %161 : vector<1x128xi1> to vector<32x128xi1>
    %163 = vector.broadcast %cst_68 : f32 to vector<32x128xf32>
    %164 = arith.select %162, %158, %163 : vector<32x128xi1>, vector<32x128xf32>
    %165 = vector.extract_strided_slice %127 {offsets = [0, 128], sizes = [32, 128], strides = [1, 1]} : vector<32x1024xf32> to vector<32x128xf32>
    %c1_i32 = arith.constant 1 : i32
    %166 = vector.broadcast %c1_i32 : i32 to vector<1x128xi32>
    %167 = arith.cmpi sgt, %14, %166 : vector<1x128xi32>
    %cst_69 = arith.constant -1.000000e+09 : f32
    %168 = vector.shape_cast %167 : vector<1x128xi1> to vector<1x128xi1>
    %169 = vector.broadcast %168 : vector<1x128xi1> to vector<32x128xi1>
    %170 = vector.broadcast %cst_69 : f32 to vector<32x128xf32>
    %171 = arith.select %169, %165, %170 : vector<32x128xi1>, vector<32x128xf32>
    %172 = vector.extract_strided_slice %127 {offsets = [0, 256], sizes = [32, 128], strides = [1, 1]} : vector<32x1024xf32> to vector<32x128xf32>
    %c2_i32 = arith.constant 2 : i32
    %173 = vector.broadcast %c2_i32 : i32 to vector<1x128xi32>
    %174 = arith.cmpi sgt, %14, %173 : vector<1x128xi32>
    %cst_70 = arith.constant -1.000000e+09 : f32
    %175 = vector.shape_cast %174 : vector<1x128xi1> to vector<1x128xi1>
    %176 = vector.broadcast %175 : vector<1x128xi1> to vector<32x128xi1>
    %177 = vector.broadcast %cst_70 : f32 to vector<32x128xf32>
    %178 = arith.select %176, %172, %177 : vector<32x128xi1>, vector<32x128xf32>
    %179 = vector.extract_strided_slice %127 {offsets = [0, 384], sizes = [32, 128], strides = [1, 1]} : vector<32x1024xf32> to vector<32x128xf32>
    %c3_i32 = arith.constant 3 : i32
    %180 = vector.broadcast %c3_i32 : i32 to vector<1x128xi32>
    %181 = arith.cmpi sgt, %14, %180 : vector<1x128xi32>
    %cst_71 = arith.constant -1.000000e+09 : f32
    %182 = vector.shape_cast %181 : vector<1x128xi1> to vector<1x128xi1>
    %183 = vector.broadcast %182 : vector<1x128xi1> to vector<32x128xi1>
    %184 = vector.broadcast %cst_71 : f32 to vector<32x128xf32>
    %185 = arith.select %183, %179, %184 : vector<32x128xi1>, vector<32x128xf32>
    %186 = vector.extract_strided_slice %127 {offsets = [0, 512], sizes = [32, 128], strides = [1, 1]} : vector<32x1024xf32> to vector<32x128xf32>
    %c4_i32 = arith.constant 4 : i32
    %187 = vector.broadcast %c4_i32 : i32 to vector<1x128xi32>
    %188 = arith.cmpi sgt, %14, %187 : vector<1x128xi32>
    %cst_72 = arith.constant -1.000000e+09 : f32
    %189 = vector.shape_cast %188 : vector<1x128xi1> to vector<1x128xi1>
    %190 = vector.broadcast %189 : vector<1x128xi1> to vector<32x128xi1>
    %191 = vector.broadcast %cst_72 : f32 to vector<32x128xf32>
    %192 = arith.select %190, %186, %191 : vector<32x128xi1>, vector<32x128xf32>
    %193 = vector.extract_strided_slice %127 {offsets = [0, 640], sizes = [32, 128], strides = [1, 1]} : vector<32x1024xf32> to vector<32x128xf32>
    %c5_i32 = arith.constant 5 : i32
    %194 = vector.broadcast %c5_i32 : i32 to vector<1x128xi32>
    %195 = arith.cmpi sgt, %14, %194 : vector<1x128xi32>
    %cst_73 = arith.constant -1.000000e+09 : f32
    %196 = vector.shape_cast %195 : vector<1x128xi1> to vector<1x128xi1>
    %197 = vector.broadcast %196 : vector<1x128xi1> to vector<32x128xi1>
    %198 = vector.broadcast %cst_73 : f32 to vector<32x128xf32>
    %199 = arith.select %197, %193, %198 : vector<32x128xi1>, vector<32x128xf32>
    %200 = vector.extract_strided_slice %127 {offsets = [0, 768], sizes = [32, 128], strides = [1, 1]} : vector<32x1024xf32> to vector<32x128xf32>
    %c6_i32 = arith.constant 6 : i32
    %201 = vector.broadcast %c6_i32 : i32 to vector<1x128xi32>
    %202 = arith.cmpi sgt, %14, %201 : vector<1x128xi32>
    %cst_74 = arith.constant -1.000000e+09 : f32
    %203 = vector.shape_cast %202 : vector<1x128xi1> to vector<1x128xi1>
    %204 = vector.broadcast %203 : vector<1x128xi1> to vector<32x128xi1>
    %205 = vector.broadcast %cst_74 : f32 to vector<32x128xf32>
    %206 = arith.select %204, %200, %205 : vector<32x128xi1>, vector<32x128xf32>
    %207 = vector.extract_strided_slice %127 {offsets = [0, 896], sizes = [32, 128], strides = [1, 1]} : vector<32x1024xf32> to vector<32x128xf32>
    %c7_i32 = arith.constant 7 : i32
    %208 = vector.broadcast %c7_i32 : i32 to vector<1x128xi32>
    %209 = arith.cmpi sgt, %14, %208 : vector<1x128xi32>
    %cst_75 = arith.constant -1.000000e+09 : f32
    %210 = vector.shape_cast %209 : vector<1x128xi1> to vector<1x128xi1>
    %211 = vector.broadcast %210 : vector<1x128xi1> to vector<32x128xi1>
    %212 = vector.broadcast %cst_75 : f32 to vector<32x128xf32>
    %213 = arith.select %211, %207, %212 : vector<32x128xi1>, vector<32x128xf32>
    %214 = arith.maximumf %164, %171 : vector<32x128xf32>
    %215 = arith.maximumf %214, %178 : vector<32x128xf32>
    %216 = arith.maximumf %215, %185 : vector<32x128xf32>
    %217 = arith.maximumf %216, %192 : vector<32x128xf32>
    %218 = arith.maximumf %217, %199 : vector<32x128xf32>
    %219 = arith.maximumf %218, %206 : vector<32x128xf32>
    %220 = arith.maximumf %219, %213 : vector<32x128xf32>
    %cst_76 = arith.constant 0.000000e+00 : f32
    %221 = vector.broadcast %cst_76 : f32 to vector<32x128xf32>
    %cst_77 = arith.constant 0.000000e+00 : f32
    %222 = vector.broadcast %cst_77 : f32 to vector<32x128xf32>
    %223 = arith.subf %164, %220 : vector<32x128xf32>
    %224 = math.exp %223 : vector<32x128xf32>
    %225 = arith.addf %221, %224 : vector<32x128xf32>
    %226 = vector.extract_strided_slice %157 {offsets = [0, 0], sizes = [32, 128], strides = [1, 1]} : vector<32x1024xf32> to vector<32x128xf32>
    %227 = arith.mulf %224, %226 : vector<32x128xf32>
    %228 = arith.addf %222, %227 : vector<32x128xf32>
    %229 = arith.subf %171, %220 : vector<32x128xf32>
    %230 = math.exp %229 : vector<32x128xf32>
    %231 = arith.addf %225, %230 : vector<32x128xf32>
    %232 = vector.extract_strided_slice %157 {offsets = [0, 128], sizes = [32, 128], strides = [1, 1]} : vector<32x1024xf32> to vector<32x128xf32>
    %233 = arith.mulf %230, %232 : vector<32x128xf32>
    %234 = arith.addf %228, %233 : vector<32x128xf32>
    %235 = arith.subf %178, %220 : vector<32x128xf32>
    %236 = math.exp %235 : vector<32x128xf32>
    %237 = arith.addf %231, %236 : vector<32x128xf32>
    %238 = vector.extract_strided_slice %157 {offsets = [0, 256], sizes = [32, 128], strides = [1, 1]} : vector<32x1024xf32> to vector<32x128xf32>
    %239 = arith.mulf %236, %238 : vector<32x128xf32>
    %240 = arith.addf %234, %239 : vector<32x128xf32>
    %241 = arith.subf %185, %220 : vector<32x128xf32>
    %242 = math.exp %241 : vector<32x128xf32>
    %243 = arith.addf %237, %242 : vector<32x128xf32>
    %244 = vector.extract_strided_slice %157 {offsets = [0, 384], sizes = [32, 128], strides = [1, 1]} : vector<32x1024xf32> to vector<32x128xf32>
    %245 = arith.mulf %242, %244 : vector<32x128xf32>
    %246 = arith.addf %240, %245 : vector<32x128xf32>
    %247 = arith.subf %192, %220 : vector<32x128xf32>
    %248 = math.exp %247 : vector<32x128xf32>
    %249 = arith.addf %243, %248 : vector<32x128xf32>
    %250 = vector.extract_strided_slice %157 {offsets = [0, 512], sizes = [32, 128], strides = [1, 1]} : vector<32x1024xf32> to vector<32x128xf32>
    %251 = arith.mulf %248, %250 : vector<32x128xf32>
    %252 = arith.addf %246, %251 : vector<32x128xf32>
    %253 = arith.subf %199, %220 : vector<32x128xf32>
    %254 = math.exp %253 : vector<32x128xf32>
    %255 = arith.addf %249, %254 : vector<32x128xf32>
    %256 = vector.extract_strided_slice %157 {offsets = [0, 640], sizes = [32, 128], strides = [1, 1]} : vector<32x1024xf32> to vector<32x128xf32>
    %257 = arith.mulf %254, %256 : vector<32x128xf32>
    %258 = arith.addf %252, %257 : vector<32x128xf32>
    %259 = arith.subf %206, %220 : vector<32x128xf32>
    %260 = math.exp %259 : vector<32x128xf32>
    %261 = arith.addf %255, %260 : vector<32x128xf32>
    %262 = vector.extract_strided_slice %157 {offsets = [0, 768], sizes = [32, 128], strides = [1, 1]} : vector<32x1024xf32> to vector<32x128xf32>
    %263 = arith.mulf %260, %262 : vector<32x128xf32>
    %264 = arith.addf %258, %263 : vector<32x128xf32>
    %265 = arith.subf %213, %220 : vector<32x128xf32>
    %266 = math.exp %265 : vector<32x128xf32>
    %267 = arith.addf %261, %266 : vector<32x128xf32>
    %268 = vector.extract_strided_slice %157 {offsets = [0, 896], sizes = [32, 128], strides = [1, 1]} : vector<32x1024xf32> to vector<32x128xf32>
    %269 = arith.mulf %266, %268 : vector<32x128xf32>
    %270 = arith.addf %264, %269 : vector<32x128xf32>
    %271 = tpu.reciprocal %267 {approx = true} : vector<32x128xf32> -> vector<32x128xf32>
    %272 = arith.mulf %270, %271 : vector<32x128xf32>
    %c0_78 = arith.constant 0 : index
    %c0_79 = arith.constant 0 : index
    %c0_80 = arith.constant 0 : index
    %273 = vector.load %arg11[%c0_78, %c0_79, %c0_80] : memref<1x32x128xf32, #tpu.memory_space<vmem>>, vector<1x32x128xf32>
    %274 = vector.shape_cast %273 : vector<1x32x128xf32> to vector<32x128xf32>
    %275 = vector.shape_cast %272 : vector<32x128xf32> to vector<1x32x128xf32>
    tpu.vector_store %arg11[%c0_78, %c0_79, %c0_80], %275 {strides = array<i32>} : memref<1x32x128xf32, #tpu.memory_space<vmem>>, vector<1x32x128xf32>,
    return
  }
  func.func @transform_0(%arg0: i32) -> (i32, i32, i32) {
    %c0_i32 = arith.constant 0 : i32
    %c0_i32_0 = arith.constant 0 : i32
    %c0_i32_1 = arith.constant 0 : i32
    return %arg0, %c0_i32, %c0_i32_0 : i32, i32, i32
  }
  func.func @transform_1(%arg0: i32) -> (i32, i32, i32) {
    %c0_i32 = arith.constant 0 : i32
    %c0_i32_0 = arith.constant 0 : i32
    %c0_i32_1 = arith.constant 0 : i32
    return %arg0, %c0_i32, %c0_i32_0 : i32, i32, i32
  }
  func.func @transform_2(%arg0: i32) -> (i32, i32, i32) {
    %c0_i32 = arith.constant 0 : i32
    %c0_i32_0 = arith.constant 0 : i32
    %c0_i32_1 = arith.constant 0 : i32
    return %arg0, %c0_i32, %c0_i32_0 : i32, i32, i32
  }
  func.func @transform_3(%arg0: i32) -> (i32, i32, i32) {
    %c0_i32 = arith.constant 0 : i32
    %c0_i32_0 = arith.constant 0 : i32
    %c0_i32_1 = arith.constant 0 : i32
    return %arg0, %c0_i32, %c0_i32_0 : i32, i32, i32
  }
  func.func @transform_4(%arg0: i32) -> (i32, i32) {
    %c0_i32 = arith.constant 0 : i32
    %c0_i32_0 = arith.constant 0 : i32
    %c0_i32_1 = arith.constant 0 : i32
    return %c0_i32, %c0_i32_0 : i32, i32
  }
  func.func @transform_5(%arg0: i32) -> (i32, i32) {
    %c0_i32 = arith.constant 0 : i32
    %c0_i32_0 = arith.constant 0 : i32
    %c0_i32_1 = arith.constant 0 : i32
    return %c0_i32, %c0_i32_0 : i32, i32
  }
  func.func @transform_6(%arg0: i32) -> (i32, i32) {
    %c0_i32 = arith.constant 0 : i32
    %c0_i32_0 = arith.constant 0 : i32
    %c0_i32_1 = arith.constant 0 : i32
    return %c0_i32, %c0_i32_0 : i32, i32
  }
  func.func @transform_7(%arg0: i32) -> (i32, i32) {
    %c0_i32 = arith.constant 0 : i32
    %c0_i32_0 = arith.constant 0 : i32
    %c0_i32_1 = arith.constant 0 : i32
    return %c0_i32, %c0_i32_0 : i32, i32
  }
  func.func @transform_8(%arg0: i32) -> (i32, i32) {
    %c0_i32 = arith.constant 0 : i32
    %c0_i32_0 = arith.constant 0 : i32
    %c0_i32_1 = arith.constant 0 : i32
    return %c0_i32, %c0_i32_0 : i32, i32
  }
  func.func @transform_9(%arg0: i32) -> (i32, i32) {
    %c0_i32 = arith.constant 0 : i32
    %c0_i32_0 = arith.constant 0 : i32
    %c0_i32_1 = arith.constant 0 : i32
    return %c0_i32, %c0_i32_0 : i32, i32
  }
  func.func @transform_10(%arg0: i32) -> (i32, i32, i32) {
    %c0_i32 = arith.constant 0 : i32
    %c0_i32_0 = arith.constant 0 : i32
    %c0_i32_1 = arith.constant 0 : i32
    return %arg0, %c0_i32, %c0_i32_0 : i32, i32, i32
  }
}

</mosaic_0001>

<llo_original>
// kernel: tpu_custom_call.1
$region0: #{tpu_custom_call.1}
  #allocation0 [shape = 'u32[]', space=smem, size = 0x4, offset = 0x4, fixed_abs, tag = 'smem constant byte address 0x4 - core index']
  #allocation1 [shape = 'u32[72,128]{1,0:T(1,128)}', space=vmem, size = 0x9000, scoped, tag = 'internal scratch']
  %s0 = inlined_call_operand.vmem [shape: bf16[2,8,128], index: 0, kind: input, shape index: {}]
  %s1 = inlined_call_operand.vmem [shape: bf16[2,16,1024], index: 1, kind: input, shape index: {}]
  %s2 = inlined_call_operand.hbm [shape: bf16[2,32,1024], index: 2, kind: input, shape index: {}]
  %s3 = inlined_call_operand.vmem [shape: s32[2,1,128], index: 3, kind: input, shape index: {}]
  %s4 = inlined_call_operand.vmem [shape: bf16[32,8], index: 4, kind: input, shape index: {}]
  %s5 = inlined_call_operand.vmem [shape: bf16[32,16], index: 5, kind: input, shape index: {}]
  %s6 = inlined_call_operand.vmem [shape: bf16[32,64], index: 6, kind: input, shape index: {}]
  %s7 = inlined_call_operand.vmem [shape: bf16[32,32], index: 7, kind: input, shape index: {}]
  %s8 = inlined_call_operand.vmem [shape: bf16[32,32], index: 8, kind: input, shape index: {}]
  %s9 = inlined_call_operand.vmem [shape: f32[224,1], index: 9, kind: input, shape index: {}]
  %s10 = inlined_call_operand.hbm [shape: f32[2,32,128], index: 10, kind: output, shape index: {}]
  %s11 = sld [smem:[#allocation0]]
  $region77: #{tpu_custom_call.1} parent=0
    _
  %s13 = ssub.s32 1, %s11
  %s14 = scalar_select 0, %s13, %s11
  $region1: #{tpu_custom_call.1} parent=0
    #allocation2 [shape = 'u8[131072]{0}', space=vmem, size = 0x20000, scoped, tag = 'input window, operand 2']
    #allocation3 [shape = 's32[2]{0}', space=sflag, size = 0x8, scoped, tag = 'scoped memory for tpu_custom_call.1']
    #allocation4 [shape = 's32[2]{0}', space=sflag, size = 0x8, scoped, tag = 'scoped memory for tpu_custom_call.1']
    #allocation5 [shape = 'u8[32768]{0}', space=vmem, size = 0x8000, scoped, tag = 'output window, operand 0']
    %15 = vsyncpa [#allocation3], 0
    %s16 = scalar_lea.sflag [#allocation3], 1
    %17 = vsyncpa %s16, 0
    %18 = vsyncpa [#allocation4], 0
    %s19 = scalar_lea.sflag [#allocation4], 1
    %20 = vsyncpa %s19, 0
    loop: start=0, step=1, limit=4
    $region2: #{tpu_custom_call.1} parent=1 // loop_pre_header
      _
    $region3: #{tpu_custom_call.1} parent=1 // loop_header
      %s22 = sphi 0, %s26
      %p23 = scmp.ge.s32.totalorder %s22, 4
      %s32 = sphi 0, %s34
      %s35 = sphi 0, %s32
      %s36 = sphi 0, %s35
      %s52 = sphi 0, %s36
      %s58 = sphi 0, %s60
      %s61 = sphi 0, %s58
      %s62 = sphi 0, %s61
      %s78 = sphi 0, %s62
      %s84 = sphi 0, %s86
      %s87 = sphi 0, %s84
      %s88 = sphi 0, %s87
      %s104 = sphi 0, %s88
      %s110 = sphi 0, %s112
      %s113 = sphi 0, %s110
      %s114 = sphi 0, %s113
      %s130 = sphi 0, %s114
      %s134 = sphi 0, %s134
      %s136 = sphi 0, %s134
      %s137 = sphi 0, %s136
      %s151 = sphi 0, %s137
      %s155 = sphi 0, %s155
      %s157 = sphi 0, %s155
      %s158 = sphi 0, %s157
      %s172 = sphi 0, %s158
      %s176 = sphi 0, %s176
      %s178 = sphi 0, %s176
      %s179 = sphi 0, %s178
      %s193 = sphi 0, %s179
      %s197 = sphi 0, %s197
      %s199 = sphi 0, %s197
      %s200 = sphi 0, %s199
      %s214 = sphi 0, %s200
      %s218 = sphi 0, %s218
      %s220 = sphi 0, %s218
      %s221 = sphi 0, %s220
      %s235 = sphi 0, %s221
      %s239 = sphi 0, %s239
      %s241 = sphi 0, %s239
      %s242 = sphi 0, %s241
      %s256 = sphi 0, %s242
      %s262 = sphi 0, %s264
      %s265 = sphi 0, %s262
      %s266 = sphi 0, %s265
      %s282 = sphi 0, %s266
    $region4: #{tpu_custom_call.1} parent=1 // loop_header_branch
      %25 = sbr.rel (%p23) target = $region8
    $region5: #{tpu_custom_call.1} parent=1 // loop_body
      %s27 = ssub.s32 %s22, 1
      %s28 = ssub.s32 %s22, 2
      %s29 = sadd.s32 %s22, 1
      %s30 = ssub.s32 %s22, %s29
      %p31 = scmp.eq.s32.totalorder %s30, 0
      %s33 = sadd.s32 %s32, 1
      %s34 = scalar_select %p31, %s32, %s33
      %p37 = pneg %p31
      %p38 = scmp.eq.s32.totalorder %s22, 1
      %p39 = por %p37, %p38
      %p40 = scmp.ne.s32.totalorder %s32, %s35
      %p41 = scmp.eq.s32.totalorder %s22, 0
      %p42 = por %p40, %p41
      %p43 = scmp.ne.s32.totalorder %s32, %s35
      %p44 = scmp.eq.s32.totalorder %s27, 1
      %p45 = por %p43, %p44
      %p46 = scmp.ne.s32.totalorder %s35, %s36
      %p47 = scmp.eq.s32.totalorder %s27, 0
      %p48 = por %p46, %p47
      %p49 = scmp.ne.s32.totalorder %s35, %s36
      %p50 = scmp.eq.s32.totalorder %s28, 1
      %p51 = por %p49, %p50
      %p53 = scmp.ne.s32.totalorder %s36, %s52
      %p54 = scmp.eq.s32.totalorder %s28, 0
      %p55 = por %p53, %p54
      %s56 = ssub.s32 %s22, %s29
      %p57 = scmp.eq.s32.totalorder %s56, 0
      %s59 = sadd.s32 %s58, 1
      %s60 = scalar_select %p57, %s58, %s59
      %p63 = pneg %p57
      %p64 = scmp.eq.s32.totalorder %s22, 1
      %p65 = por %p63, %p64
      %p66 = scmp.ne.s32.totalorder %s58, %s61
      %p67 = scmp.eq.s32.totalorder %s22, 0
      %p68 = por %p66, %p67
      %p69 = scmp.ne.s32.totalorder %s58, %s61
      %p70 = scmp.eq.s32.totalorder %s27, 1
      %p71 = por %p69, %p70
      %p72 = scmp.ne.s32.totalorder %s61, %s62
      %p73 = scmp.eq.s32.totalorder %s27, 0
      %p74 = por %p72, %p73
      %p75 = scmp.ne.s32.totalorder %s61, %s62
      %p76 = scmp.eq.s32.totalorder %s28, 1
      %p77 = por %p75, %p76
      %p79 = scmp.ne.s32.totalorder %s62, %s78
      %p80 = scmp.eq.s32.totalorder %s28, 0
      %p81 = por %p79, %p80
      %s82 = ssub.s32 %s22, %s29
      %p83 = scmp.eq.s32.totalorder %s82, 0
      %s85 = sadd.s32 %s84, 1
      %s86 = scalar_select %p83, %s84, %s85
      %p89 = pneg %p83
      %p90 = scmp.eq.s32.totalorder %s22, 1
      %p91 = por %p89, %p90
      %p92 = scmp.ne.s32.totalorder %s84, %s87
      %p93 = scmp.eq.s32.totalorder %s22, 0
      %p94 = por %p92, %p93
      %p95 = scmp.ne.s32.totalorder %s84, %s87
      %p96 = scmp.eq.s32.totalorder %s27, 1
      %p97 = por %p95, %p96
      %p98 = scmp.ne.s32.totalorder %s87, %s88
      %p99 = scmp.eq.s32.totalorder %s27, 0
      %p100 = por %p98, %p99
      %p101 = scmp.ne.s32.totalorder %s87, %s88
      %p102 = scmp.eq.s32.totalorder %s28, 1
      %p103 = por %p101, %p102
      %p105 = scmp.ne.s32.totalorder %s88, %s104
      %p106 = scmp.eq.s32.totalorder %s28, 0
      %p107 = por %p105, %p106
      %s108 = ssub.s32 %s22, %s29
      %p109 = scmp.eq.s32.totalorder %s108, 0
      %s111 = sadd.s32 %s110, 1
      %s112 = scalar_select %p109, %s110, %s111
      %p115 = pneg %p109
      %p116 = scmp.eq.s32.totalorder %s22, 1
      %p117 = por %p115, %p116
      %p118 = scmp.ne.s32.totalorder %s110, %s113
      %p119 = scmp.eq.s32.totalorder %s22, 0
      %p120 = por %p118, %p119
      %p121 = scmp.ne.s32.totalorder %s110, %s113
      %p122 = scmp.eq.s32.totalorder %s27, 1
      %p123 = por %p121, %p122
      %p124 = scmp.ne.s32.totalorder %s113, %s114
      %p125 = scmp.eq.s32.totalorder %s27, 0
      %p126 = por %p124, %p125
      %p127 = scmp.ne.s32.totalorder %s113, %s114
      %p128 = scmp.eq.s32.totalorder %s28, 1
      %p129 = por %p127, %p128
      %p131 = scmp.ne.s32.totalorder %s114, %s130
      %p132 = scmp.eq.s32.totalorder %s28, 0
      %p133 = por %p131, %p132
      %s135 = sadd.s32 %s134, 1
      %p138 = scmp.eq.s32.totalorder %s22, 1
      %p139 = scmp.ne.s32.totalorder %s134, %s136
      %p140 = scmp.eq.s32.totalorder %s22, 0
      %p141 = por %p139, %p140
      %p142 = scmp.ne.s32.totalorder %s134, %s136
      %p143 = scmp.eq.s32.totalorder %s27, 1
      %p144 = por %p142, %p143
      %p145 = scmp.ne.s32.totalorder %s136, %s137
      %p146 = scmp.eq.s32.totalorder %s27, 0
      %p147 = por %p145, %p146
      %p148 = scmp.ne.s32.totalorder %s136, %s137
      %p149 = scmp.eq.s32.totalorder %s28, 1
      %p150 = por %p148, %p149
      %p152 = scmp.ne.s32.totalorder %s137, %s151
      %p153 = scmp.eq.s32.totalorder %s28, 0
      %p154 = por %p152, %p153
      %s156 = sadd.s32 %s155, 1
      %p159 = scmp.eq.s32.totalorder %s22, 1
      %p160 = scmp.ne.s32.totalorder %s155, %s157
      %p161 = scmp.eq.s32.totalorder %s22, 0
      %p162 = por %p160, %p161
      %p163 = scmp.ne.s32.totalorder %s155, %s157
      %p164 = scmp.eq.s32.totalorder %s27, 1
      %p165 = por %p163, %p164
      %p166 = scmp.ne.s32.totalorder %s157, %s158
      %p167 = scmp.eq.s32.totalorder %s27, 0
      %p168 = por %p166, %p167
      %p169 = scmp.ne.s32.totalorder %s157, %s158
      %p170 = scmp.eq.s32.totalorder %s28, 1
      %p171 = por %p169, %p170
      %p173 = scmp.ne.s32.totalorder %s158, %s172
      %p174 = scmp.eq.s32.totalorder %s28, 0
      %p175 = por %p173, %p174
      %s177 = sadd.s32 %s176, 1
      %p180 = scmp.eq.s32.totalorder %s22, 1
      %p181 = scmp.ne.s32.totalorder %s176, %s178
      %p182 = scmp.eq.s32.totalorder %s22, 0
      %p183 = por %p181, %p182
      %p184 = scmp.ne.s32.totalorder %s176, %s178
      %p185 = scmp.eq.s32.totalorder %s27, 1
      %p186 = por %p184, %p185
      %p187 = scmp.ne.s32.totalorder %s178, %s179
      %p188 = scmp.eq.s32.totalorder %s27, 0
      %p189 = por %p187, %p188
      %p190 = scmp.ne.s32.totalorder %s178, %s179
      %p191 = scmp.eq.s32.totalorder %s28, 1
      %p192 = por %p190, %p191
      %p194 = scmp.ne.s32.totalorder %s179, %s193
      %p195 = scmp.eq.s32.totalorder %s28, 0
      %p196 = por %p194, %p195
      %s198 = sadd.s32 %s197, 1
      %p201 = scmp.eq.s32.totalorder %s22, 1
      %p202 = scmp.ne.s32.totalorder %s197, %s199
      %p203 = scmp.eq.s32.totalorder %s22, 0
      %p204 = por %p202, %p203
      %p205 = scmp.ne.s32.totalorder %s197, %s199
      %p206 = scmp.eq.s32.totalorder %s27, 1
      %p207 = por %p205, %p206
      %p208 = scmp.ne.s32.totalorder %s199, %s200
      %p209 = scmp.eq.s32.totalorder %s27, 0
      %p210 = por %p208, %p209
      %p211 = scmp.ne.s32.totalorder %s199, %s200
      %p212 = scmp.eq.s32.totalorder %s28, 1
      %p213 = por %p211, %p212
      %p215 = scmp.ne.s32.totalorder %s200, %s214
      %p216 = scmp.eq.s32.totalorder %s28, 0
      %p217 = por %p215, %p216
      %s219 = sadd.s32 %s218, 1
      %p222 = scmp.eq.s32.totalorder %s22, 1
      %p223 = scmp.ne.s32.totalorder %s218, %s220
      %p224 = scmp.eq.s32.totalorder %s22, 0
      %p225 = por %p223, %p224
      %p226 = scmp.ne.s32.totalorder %s218, %s220
      %p227 = scmp.eq.s32.totalorder %s27, 1
      %p228 = por %p226, %p227
      %p229 = scmp.ne.s32.totalorder %s220, %s221
      %p230 = scmp.eq.s32.totalorder %s27, 0
      %p231 = por %p229, %p230
      %p232 = scmp.ne.s32.totalorder %s220, %s221
      %p233 = scmp.eq.s32.totalorder %s28, 1
      %p234 = por %p232, %p233
      %p236 = scmp.ne.s32.totalorder %s221, %s235
      %p237 = scmp.eq.s32.totalorder %s28, 0
      %p238 = por %p236, %p237
      %s240 = sadd.s32 %s239, 1
      %p243 = scmp.eq.s32.totalorder %s22, 1
      %p244 = scmp.ne.s32.totalorder %s239, %s241
      %p245 = scmp.eq.s32.totalorder %s22, 0
      %p246 = por %p244, %p245
      %p247 = scmp.ne.s32.totalorder %s239, %s241
      %p248 = scmp.eq.s32.totalorder %s27, 1
      %p249 = por %p247, %p248
      %p250 = scmp.ne.s32.totalorder %s241, %s242
      %p251 = scmp.eq.s32.totalorder %s27, 0
      %p252 = por %p250, %p251
      %p253 = scmp.ne.s32.totalorder %s241, %s242
      %p254 = scmp.eq.s32.totalorder %s28, 1
      %p255 = por %p253, %p254
      %p257 = scmp.ne.s32.totalorder %s242, %s256
      %p258 = scmp.eq.s32.totalorder %s28, 0
      %p259 = por %p257, %p258
      %s260 = ssub.s32 %s22, %s29
      %p261 = scmp.eq.s32.totalorder %s260, 0
      %s263 = sadd.s32 %s262, 1
      %s264 = scalar_select %p261, %s262, %s263
      %p267 = pneg %p261
      %p268 = scmp.eq.s32.totalorder %s22, 1
      %p269 = por %p267, %p268
      %p270 = scmp.ne.s32.totalorder %s262, %s265
      %p271 = scmp.eq.s32.totalorder %s22, 0
      %p272 = por %p270, %p271
      %p273 = scmp.ne.s32.totalorder %s262, %s265
      %p274 = scmp.eq.s32.totalorder %s27, 1
      %p275 = por %p273, %p274
      %p276 = scmp.ne.s32.totalorder %s265, %s266
      %p277 = scmp.eq.s32.totalorder %s27, 0
      %p278 = por %p276, %p277
      %p279 = scmp.ne.s32.totalorder %s265, %s266
      %p280 = scmp.eq.s32.totalorder %s28, 1
      %p281 = por %p279, %p280
      %p283 = scmp.ne.s32.totalorder %s266, %s282
      %p284 = scmp.eq.s32.totalorder %s28, 0
      %p285 = por %p283, %p284
      %p286 = scmp.le.s32.totalorder 1, %s22
      %p287 = scmp.lt.s32.totalorder %s22, 3
      %p288 = pnand %p286, %p287
      %p289 = pneg %p288
      // Predicated region
      $region9: #{tpu_custom_call.1} parent=5 // pred_check
        _
      $region10: #{tpu_custom_call.1} parent=5 // pred_check_branch
        %291 = sbr.rel (%p288) target = $region12
      $region11: #{tpu_custom_call.1} parent=5 // pred_region
        %s292 = ssub.s32 %s22, 1
        // Predicated region
        $region13: #{tpu_custom_call.1} parent=11 // pred_check
          %p293 = pneg %p147
        $region14: #{tpu_custom_call.1} parent=11 // pred_check_branch
          %295 = sbr.rel (%p293) target = $region16
        $region15: #{tpu_custom_call.1} parent=11 // pred_region
          _
        $region16: #{tpu_custom_call.1} parent=11 // pred_fallthru
          _
        // Predicated region
        $region17: #{tpu_custom_call.1} parent=11 // pred_check
          %p296 = pneg %p168
        $region18: #{tpu_custom_call.1} parent=11 // pred_check_branch
          %298 = sbr.rel (%p296) target = $region20
        $region19: #{tpu_custom_call.1} parent=11 // pred_region
          _
        $region20: #{tpu_custom_call.1} parent=11 // pred_fallthru
          _
        // Predicated region
        $region21: #{tpu_custom_call.1} parent=11 // pred_check
          %p299 = pneg %p189
        $region22: #{tpu_custom_call.1} parent=11 // pred_check_branch
          %301 = sbr.rel (%p299) target = $region24
        $region23: #{tpu_custom_call.1} parent=11 // pred_region
          _
        $region24: #{tpu_custom_call.1} parent=11 // pred_fallthru
          _
        // Predicated region
        $region25: #{tpu_custom_call.1} parent=11 // pred_check
          %p302 = pneg %p210
        $region26: #{tpu_custom_call.1} parent=11 // pred_check_branch
          %304 = sbr.rel (%p302) target = $region28
        $region27: #{tpu_custom_call.1} parent=11 // pred_region
          _
        $region28: #{tpu_custom_call.1} parent=11 // pred_fallthru
          _
        // Predicated region
        $region29: #{tpu_custom_call.1} parent=11 // pred_check
          %p305 = pneg %p231
        $region30: #{tpu_custom_call.1} parent=11 // pred_check_branch
          %307 = sbr.rel (%p305) target = $region32
        $region31: #{tpu_custom_call.1} parent=11 // pred_region
          _
        $region32: #{tpu_custom_call.1} parent=11 // pred_fallthru
          _
        // Predicated region
        $region33: #{tpu_custom_call.1} parent=11 // pred_check
          %p308 = pneg %p252
        $region34: #{tpu_custom_call.1} parent=11 // pred_check_branch
          %310 = sbr.rel (%p308) target = $region36
        $region35: #{tpu_custom_call.1} parent=11 // pred_region
          _
        $region36: #{tpu_custom_call.1} parent=11 // pred_fallthru
          _
      $region12: #{tpu_custom_call.1} parent=5 // pred_fallthru
        _
      %p311 = scmp.lt.s32.totalorder %s22, 2
      // Predicated region
      $region37: #{tpu_custom_call.1} parent=5 // pred_check
        %p312 = pneg %p311
      $region38: #{tpu_custom_call.1} parent=5 // pred_check_branch
        %314 = sbr.rel (%p312) target = $region40
      $region39: #{tpu_custom_call.1} parent=5 // pred_region
        // Predicated region
        $region41: #{tpu_custom_call.1} parent=39 // pred_check
          %p315 = pneg %p42
        $region42: #{tpu_custom_call.1} parent=39 // pred_check_branch
          %317 = sbr.rel (%p315) target = $region44
        $region43: #{tpu_custom_call.1} parent=39 // pred_region
          %p318 = scmp.lt.s32.totalorder %s22, 1
          %s319 = scalar_select %p318, %s22, 1
          %s320 = smul.addr %s319, 4
          %s321 = scalar_lea.vmem %s0, %s320
        $region44: #{tpu_custom_call.1} parent=39 // pred_fallthru
          _
        // Predicated region
        $region45: #{tpu_custom_call.1} parent=39 // pred_check
          %p322 = pneg %p68
        $region46: #{tpu_custom_call.1} parent=39 // pred_check_branch
          %324 = sbr.rel (%p322) target = $region48
        $region47: #{tpu_custom_call.1} parent=39 // pred_region
          %p325 = scmp.lt.s32.totalorder %s22, 1
          %s326 = scalar_select %p325, %s22, 1
          %s327 = smul.addr %s326, 16
          %s328 = smul.addr %s327, 4
          %s329 = scalar_lea.vmem %s1, %s328
        $region48: #{tpu_custom_call.1} parent=39 // pred_fallthru
          _
        // Predicated region
        $region49: #{tpu_custom_call.1} parent=39 // pred_check
          %p330 = pneg %p94
        $region50: #{tpu_custom_call.1} parent=39 // pred_check_branch
          %332 = sbr.rel (%p330) target = $region52
        $region51: #{tpu_custom_call.1} parent=39 // pred_region
          %s333 = sand.u32 %s84, 1
          %s334 = scalar_lea.sflag [#allocation3], %s333
          %s335 = sand.u32 %s84, 1
          %s336 = smul.addr %s335, 128
          %s337 = scalar_lea.vmem [#allocation2], %s336
          %339 = vsyncadd %s334, 0
          %s340 = smul.addr %s22, 32
          %s341 = smul.addr %s340, 4
          %s342 = scalar_lea.hbm %s2, %s341
          %s343 = sshll.u32 %s342, 4
          %s344 = int_to_ptr.hbm [resolvable:$true] %s343
          %s345 = sshll.u32 %s337, 4
          %s346 = int_to_ptr.vmem [resolvable:$true] %s345
          %351 = dma.hbm_to_vmem [thread:$0]  %s344, 2048, %s346, %s334, 512, 512, 32
        $region52: #{tpu_custom_call.1} parent=39 // pred_fallthru
          _
        // Predicated region
        $region53: #{tpu_custom_call.1} parent=39 // pred_check
          %p352 = pneg %p120
        $region54: #{tpu_custom_call.1} parent=39 // pred_check_branch
          %354 = sbr.rel (%p352) target = $region56
        $region55: #{tpu_custom_call.1} parent=39 // pred_region
          %p355 = scmp.lt.s32.totalorder %s22, 1
          %s356 = scalar_select %p355, %s22, 1
          %s357 = scalar_lea.vmem %s3, %s356
        $region56: #{tpu_custom_call.1} parent=39 // pred_fallthru
          _
      $region40: #{tpu_custom_call.1} parent=5 // pred_fallthru
        _
      %p358 = scmp.le.s32.totalorder 1, %s22
      %p359 = scmp.lt.s32.totalorder %s22, 3
      %p360 = pnand %p358, %p359
      %p361 = pneg %p360
      // Predicated region
      $region57: #{tpu_custom_call.1} parent=5 // pred_check
        _
      $region58: #{tpu_custom_call.1} parent=5 // pred_check_branch
        %363 = sbr.rel (%p360) target = $region60
      $region59: #{tpu_custom_call.1} parent=5 // pred_region
        %s364 = ssub.s32 %s22, 1
        %s365 = sand.u32 %s87, 1
        %s366 = scalar_lea.sflag [#allocation3], %s365
        %s367 = sand.u32 %s87, 1
        %s368 = smul.addr %s367, 128
        %s369 = scalar_lea.vmem [#allocation2], %s368
        // Predicated region
        $region61: #{tpu_custom_call.1} parent=59 // pred_check
          %p370 = pneg %p100
        $region62: #{tpu_custom_call.1} parent=59 // pred_check_branch
          %372 = sbr.rel (%p370) target = $region64
        $region63: #{tpu_custom_call.1} parent=59 // pred_region
          %374 = dma.done %s366, 2048
        $region64: #{tpu_custom_call.1} parent=59 // pred_fallthru
          _
        %p375 = scmp.lt.s32.totalorder %s27, 1
        %s376 = scalar_select %p375, %s27, 1
        %s377 = smul.addr %s376, 4
        %s378 = scalar_lea.vmem %s0, %s377
        %p379 = pneg %p48
        %p380 = pneg %p45
        %p381 = scmp.lt.s32.totalorder %s27, 1
        %s382 = scalar_select %p381, %s27, 1
        %s383 = smul.addr %s382, 16
        %s384 = smul.addr %s383, 4
        %s385 = scalar_lea.vmem %s1, %s384
        %p386 = pneg %p74
        %p387 = pneg %p71
        %s388 = sand.u32 %s87, 1
        %s389 = scalar_lea.sflag [#allocation3], %s388
        %s390 = sand.u32 %s87, 1
        %s391 = smul.addr %s390, 128
        %s392 = scalar_lea.vmem [#allocation2], %s391
        %p393 = pneg %p100
        %p394 = pneg %p97
        %p395 = scmp.lt.s32.totalorder %s27, 1
        %s396 = scalar_select %p395, %s27, 1
        %s397 = scalar_lea.vmem %s3, %s396
        %p398 = pneg %p126
        %p399 = pneg %p123
        %p400 = pneg %p147
        %p401 = pneg %p144
        %p402 = pneg %p168
        %p403 = pneg %p165
        %p404 = pneg %p189
        %p405 = pneg %p186
        %p406 = pneg %p210
        %p407 = pneg %p207
        %p408 = pneg %p231
        %p409 = pneg %p228
        %p410 = pneg %p252
        %p411 = pneg %p249
        %p412 = pneg %p278
        %p413 = pneg %p275
        %s414 = sand.u32 %s265, 1
        %s415 = scalar_lea.sflag [#allocation4], %s414
        %s416 = sand.u32 %s265, 1
        %s417 = smul.addr %s416, 32
        %s418 = scalar_lea.vmem [#allocation5], %s417
        %p419 = scmp.lt.s32.totalorder %s27, 1
        %s420 = scalar_select %p419, %s27, 1
        %s421 = smul.addr %s420, 4
        %s422 = scalar_lea.vmem %s0, %s421
        %p423 = scmp.lt.s32.totalorder %s27, 1
        %s424 = scalar_select %p423, %s27, 1
        %s425 = smul.addr %s424, 16
        %s426 = smul.addr %s425, 4
        %s427 = scalar_lea.vmem %s1, %s426
        %p428 = scmp.lt.s32.totalorder %s27, 1
        %s429 = scalar_select %p428, %s27, 1
        %s430 = scalar_lea.vmem %s3, %s429
        %v432 = vld [vmem:[%s9] sm:$0xff]
        %v433 = vld [vmem:[%s9 + $0x8] sm:$0xff]
        %v434 = vld [vmem:[%s9 + $0x10] sm:$0xff]
        %v435 = vld [vmem:[%s9 + $0x18] sm:$0xff]
        %v436 = vld [vmem:[%s9 + $0x20] sm:$0xff]
        %v437 = vld [vmem:[%s9 + $0x28] sm:$0xff]
        %v438 = vld [vmem:[%s9 + $0x30] sm:$0xff]
        %v439 = vld [vmem:[%s9 + $0x38] sm:$0xff]
        %v440 = vld [vmem:[%s9 + $0x40] sm:$0xff]
        %v441 = vld [vmem:[%s9 + $0x48] sm:$0xff]
        %v442 = vld [vmem:[%s9 + $0x50] sm:$0xff]
        %v443 = vld [vmem:[%s9 + $0x58] sm:$0xff]
        %v444 = vld [vmem:[%s9 + $0x60] sm:$0xff]
        %v445 = vld [vmem:[%s9 + $0x68] sm:$0xff]
        %v446 = vld [vmem:[%s9 + $0x70] sm:$0xff]
        %v447 = vld [vmem:[%s9 + $0x78] sm:$0xff]
        %v448 = vld [vmem:[%s9 + $0x80] sm:$0xff]
        %v449 = vld [vmem:[%s9 + $0x88] sm:$0xff]
        %v450 = vld [vmem:[%s9 + $0x90] sm:$0xff]
        %v451 = vld [vmem:[%s9 + $0x98] sm:$0xff]
        %v452 = vld [vmem:[%s9 + $0xa0] sm:$0xff]
        %v453 = vld [vmem:[%s9 + $0xa8] sm:$0xff]
        %v454 = vld [vmem:[%s9 + $0xb0] sm:$0xff]
        %v455 = vld [vmem:[%s9 + $0xb8] sm:$0xff]
        %v456 = vld [vmem:[%s9 + $0xc0] sm:$0xff]
        %v457 = vld [vmem:[%s9 + $0xc8] sm:$0xff]
        %v458 = vld [vmem:[%s9 + $0xd0] sm:$0xff]
        %v459 = vld [vmem:[%s9 + $0xd8] sm:$0xff]
        %v460 = vld [vmem:[%s422] sm:$0xf]
        %v461 = vld [vmem:[%s427] sm:$0xff]
        %v462 = vld [vmem:[%s427 + $0x8] sm:$0xff]
        %v463 = vld [vmem:[%s427 + $0x10] sm:$0xff]
        %v464 = vld [vmem:[%s427 + $0x18] sm:$0xff]
        %v465 = vld [vmem:[%s427 + $0x20] sm:$0xff]
        %v466 = vld [vmem:[%s427 + $0x28] sm:$0xff]
        %v467 = vld [vmem:[%s427 + $0x30] sm:$0xff]
        %v468 = vld [vmem:[%s427 + $0x38] sm:$0xff]
        %v469 = vld [vmem:[%s369] sm:$0xff]
        %v470 = vld [vmem:[%s369 + $0x8] sm:$0xff]
        %v471 = vld [vmem:[%s369 + $0x10] sm:$0xff]
        %v472 = vld [vmem:[%s369 + $0x18] sm:$0xff]
        %v473 = vld [vmem:[%s369 + $0x20] sm:$0xff]
        %v474 = vld [vmem:[%s369 + $0x28] sm:$0xff]
        %v475 = vld [vmem:[%s369 + $0x30] sm:$0xff]
        %v476 = vld [vmem:[%s369 + $0x38] sm:$0xff]
        %v477 = vld [vmem:[%s369 + $0x40] sm:$0xff]
        %v478 = vld [vmem:[%s369 + $0x48] sm:$0xff]
        %v479 = vld [vmem:[%s369 + $0x50] sm:$0xff]
        %v480 = vld [vmem:[%s369 + $0x58] sm:$0xff]
        %v481 = vld [vmem:[%s369 + $0x60] sm:$0xff]
        %v482 = vld [vmem:[%s369 + $0x68] sm:$0xff]
        %v483 = vld [vmem:[%s369 + $0x70] sm:$0xff]
        %v484 = vld [vmem:[%s369 + $0x78] sm:$0xff]
        %v485 = vld [vmem:[%s430] sm:$0x1]
        %v486 = vld [vmem:[%s4] sm:$0xf]
        %v487 = vld [vmem:[%s4 + $0x4] sm:$0xf]
        %v488 = vld [vmem:[%s4 + $0x8] sm:$0xf]
        %v489 = vld [vmem:[%s4 + $0xc] sm:$0xf]
        %491 = vset.pattern.permute.xlu0 0
        %492 = vperm.xlu0 %491, %v432
        %v493 = vpop.permute.xlu0 %492
        %496 = vset.pattern.permute.xlu0 0
        %497 = vperm.xlu0 %496, %v433
        %v498 = vpop.permute.xlu0 %497
        %501 = vset.pattern.permute.xlu0 0
        %502 = vperm.xlu0 %501, %v434
        %v503 = vpop.permute.xlu0 %502
        %506 = vset.pattern.permute.xlu0 0
        %507 = vperm.xlu0 %506, %v435
        %v508 = vpop.permute.xlu0 %507
        %v514 = vunpack.c.l.b16 %v486
        %v515 = vunpack.c.l.b16 %v487
        %v516 = vunpack.c.l.b16 %v488
        %v517 = vunpack.c.l.b16 %v489
        %v518 = vpack.c.b16 %v515, %v514
        %v519 = vpack.c.b16 %v517, %v516
        %vm520 = vcmask 64512
        %v522 = vsel %vm520, %v518, 0
        %v525 = vsel %vm520, %v519, 0
        %vm527 = vcmask 1043456
        %v529 = vsel %vm527, %v460, 0
        %531 = vmatpush.bf16.msra.mxu0 0
        %532 = vmatpush.bf16.msra.mxu0 0
        %533 = vmatpush.bf16.msra.mxu0 0
        %534 = vmatpush.bf16.msra.mxu0 0
        %535 = vmatpush.bf16.msra.mxu0 0
        %536 = vmatpush.bf16.msra.mxu0 0
        %537 = vmatpush.bf16.msra.mxu0 0
        %538 = vmatpush.bf16.msra.mxu0 %v529
        %539 = vmatmul.bf16.gmra.mxu0 %v522
        %v540 = vpop.f32.mrf.mxu0
        %v541 = vadd.f32 %v493, %v540
        %v542 = vpop.f32.mrf.mxu0
        %v543 = vadd.f32 %v498, %v542
        %544 = vmatmul.bf16.gmra.mxu0 %v525
        %v545 = vpop.f32.mrf.mxu0
        %v546 = vadd.f32 %v503, %v545
        %v547 = vpop.f32.mrf.mxu0
        %v548 = vadd.f32 %v508, %v547
        %549 = vdwg.mxu0
        %v550 = vmax.f32 %v541, 0.0
        %v551 = vmax.f32 %v543, 0.0
        %v552 = vmax.f32 %v546, 0.0
        %v553 = vmax.f32 %v548, 0.0
        %554 = vadd.xlane.f32.xlu0 %v550
        %v555 = vpop.xlane.xlu0 %554
        %556 = vadd.xlane.f32.xlu0 %v551
        %v557 = vpop.xlane.xlu0 %556
        %558 = vadd.xlane.f32.xlu0 %v552
        %v559 = vpop.xlane.xlu0 %558
        %560 = vadd.xlane.f32.xlu0 %v553
        %v561 = vpop.xlane.xlu0 %560
        %v562 = vmul.f32 %v550, %v550
        %v563 = vmul.f32 %v551, %v551
        %v564 = vmul.f32 %v552, %v552
        %v565 = vmul.f32 %v553, %v553
        %566 = vadd.xlane.f32.xlu0 %v562
        %v567 = vpop.xlane.xlu0 %566
        %568 = vadd.xlane.f32.xlu0 %v563
        %v569 = vpop.xlane.xlu0 %568
        %570 = vadd.xlane.f32.xlu0 %v564
        %v571 = vpop.xlane.xlu0 %570
        %572 = vadd.xlane.f32.xlu0 %v565
        %v573 = vpop.xlane.xlu0 %572
        %v579 = vunpack.c.l.s4 269488144
        %v580 = vunpack.c.0.s8 %v579
        %v581 = vperm.slane %v555, %v580
        %v583 = vunpack.c.l.s4 842150450
        %v584 = vunpack.c.0.s8 %v583
        %v585 = vperm.slane %v555, %v584
        %v587 = vunpack.c.l.s4 1414812756
        %v588 = vunpack.c.0.s8 %v587
        %v589 = vperm.slane %v555, %v588
        %v591 = vunpack.c.l.s4 1987475062
        %v592 = vunpack.c.0.s8 %v591
        %v593 = vperm.slane %v555, %v592
        %v595 = vunpack.c.l.s4 269488144
        %v596 = vunpack.c.0.s8 %v595
        %v597 = vperm.slane %v557, %v596
        %v599 = vunpack.c.l.s4 842150450
        %v600 = vunpack.c.0.s8 %v599
        %v601 = vperm.slane %v557, %v600
        %v603 = vunpack.c.l.s4 1414812756
        %v604 = vunpack.c.0.s8 %v603
        %v605 = vperm.slane %v557, %v604
        %v607 = vunpack.c.l.s4 1987475062
        %v608 = vunpack.c.0.s8 %v607
        %v609 = vperm.slane %v557, %v608
        %v611 = vunpack.c.l.s4 269488144
        %v612 = vunpack.c.0.s8 %v611
        %v613 = vperm.slane %v559, %v612
        %v615 = vunpack.c.l.s4 842150450
        %v616 = vunpack.c.0.s8 %v615
        %v617 = vperm.slane %v559, %v616
        %v619 = vunpack.c.l.s4 1414812756
        %v620 = vunpack.c.0.s8 %v619
        %v621 = vperm.slane %v559, %v620
        %v623 = vunpack.c.l.s4 1987475062
        %v624 = vunpack.c.0.s8 %v623
        %v625 = vperm.slane %v559, %v624
        %v627 = vunpack.c.l.s4 269488144
        %v628 = vunpack.c.0.s8 %v627
        %v629 = vperm.slane %v561, %v628
        %v631 = vunpack.c.l.s4 842150450
        %v632 = vunpack.c.0.s8 %v631
        %v633 = vperm.slane %v561, %v632
        %v635 = vunpack.c.l.s4 1414812756
        %v636 = vunpack.c.0.s8 %v635
        %v637 = vperm.slane %v561, %v636
        %v639 = vunpack.c.l.s4 1987475062
        %v640 = vunpack.c.0.s8 %v639
        %v641 = vperm.slane %v561, %v640
        %vm658 = vcmask 1041408
        %v659 = vsel %vm658, %v581, 0.0
        %v660 = vrot.slane %v659, 4
        %v661 = vadd.f32 %v659, %v660
        %v662 = vrot.slane %v661, 2
        %v663 = vadd.f32 %v661, %v662
        %v664 = vrot.slane %v663, 1
        %v665 = vadd.f32 %v663, %v664
        %v666 = vsel %vm658, %v585, 0.0
        %v667 = vrot.slane %v666, 4
        %v668 = vadd.f32 %v666, %v667
        %v669 = vrot.slane %v668, 2
        %v670 = vadd.f32 %v668, %v669
        %v671 = vrot.slane %v670, 1
        %v672 = vadd.f32 %v670, %v671
        %v673 = vsel %vm658, %v589, 0.0
        %v674 = vrot.slane %v673, 4
        %v675 = vadd.f32 %v673, %v674
        %v676 = vrot.slane %v675, 2
        %v677 = vadd.f32 %v675, %v676
        %v678 = vrot.slane %v677, 1
        %v679 = vadd.f32 %v677, %v678
        %v680 = vsel %vm658, %v593, 0.0
        %v681 = vrot.slane %v680, 4
        %v682 = vadd.f32 %v680, %v681
        %v683 = vrot.slane %v682, 2
        %v684 = vadd.f32 %v682, %v683
        %v685 = vrot.slane %v684, 1
        %v686 = vadd.f32 %v684, %v685
        %v687 = vsel %vm658, %v597, 0.0
        %v688 = vrot.slane %v687, 4
        %v689 = vadd.f32 %v687, %v688
        %v690 = vrot.slane %v689, 2
        %v691 = vadd.f32 %v689, %v690
        %v692 = vrot.slane %v691, 1
        %v693 = vadd.f32 %v691, %v692
        %v694 = vsel %vm658, %v601, 0.0
        %v695 = vrot.slane %v694, 4
        %v696 = vadd.f32 %v694, %v695
        %v697 = vrot.slane %v696, 2
        %v698 = vadd.f32 %v696, %v697
        %v699 = vrot.slane %v698, 1
        %v700 = vadd.f32 %v698, %v699
        %v701 = vsel %vm658, %v605, 0.0
        %v702 = vrot.slane %v701, 4
        %v703 = vadd.f32 %v701, %v702
        %v704 = vrot.slane %v703, 2
        %v705 = vadd.f32 %v703, %v704
        %v706 = vrot.slane %v705, 1
        %v707 = vadd.f32 %v705, %v706
        %v708 = vsel %vm658, %v609, 0.0
        %v709 = vrot.slane %v708, 4
        %v710 = vadd.f32 %v708, %v709
        %v711 = vrot.slane %v710, 2
        %v712 = vadd.f32 %v710, %v711
        %v713 = vrot.slane %v712, 1
        %v714 = vadd.f32 %v712, %v713
        %v715 = vsel %vm658, %v613, 0.0
        %v716 = vrot.slane %v715, 4
        %v717 = vadd.f32 %v715, %v716
        %v718 = vrot.slane %v717, 2
        %v719 = vadd.f32 %v717, %v718
        %v720 = vrot.slane %v719, 1
        %v721 = vadd.f32 %v719, %v720
        %v722 = vsel %vm658, %v617, 0.0
        %v723 = vrot.slane %v722, 4
        %v724 = vadd.f32 %v722, %v723
        %v725 = vrot.slane %v724, 2
        %v726 = vadd.f32 %v724, %v725
        %v727 = vrot.slane %v726, 1
        %v728 = vadd.f32 %v726, %v727
        %v729 = vsel %vm658, %v621, 0.0
        %v730 = vrot.slane %v729, 4
        %v731 = vadd.f32 %v729, %v730
        %v732 = vrot.slane %v731, 2
        %v733 = vadd.f32 %v731, %v732
        %v734 = vrot.slane %v733, 1
        %v735 = vadd.f32 %v733, %v734
        %v736 = vsel %vm658, %v625, 0.0
        %v737 = vrot.slane %v736, 4
        %v738 = vadd.f32 %v736, %v737
        %v739 = vrot.slane %v738, 2
        %v740 = vadd.f32 %v738, %v739
        %v741 = vrot.slane %v740, 1
        %v742 = vadd.f32 %v740, %v741
        %v743 = vsel %vm658, %v629, 0.0
        %v744 = vrot.slane %v743, 4
        %v745 = vadd.f32 %v743, %v744
        %v746 = vrot.slane %v745, 2
        %v747 = vadd.f32 %v745, %v746
        %v748 = vrot.slane %v747, 1
        %v749 = vadd.f32 %v747, %v748
        %v750 = vsel %vm658, %v633, 0.0
        %v751 = vrot.slane %v750, 4
        %v752 = vadd.f32 %v750, %v751
        %v753 = vrot.slane %v752, 2
        %v754 = vadd.f32 %v752, %v753
        %v755 = vrot.slane %v754, 1
        %v756 = vadd.f32 %v754, %v755
        %v757 = vsel %vm658, %v637, 0.0
        %v758 = vrot.slane %v757, 4
        %v759 = vadd.f32 %v757, %v758
        %v760 = vrot.slane %v759, 2
        %v761 = vadd.f32 %v759, %v760
        %v762 = vrot.slane %v761, 1
        %v763 = vadd.f32 %v761, %v762
        %v764 = vsel %vm658, %v641, 0.0
        %v765 = vrot.slane %v764, 4
        %v766 = vadd.f32 %v764, %v765
        %v767 = vrot.slane %v766, 2
        %v768 = vadd.f32 %v766, %v767
        %v769 = vrot.slane %v768, 1
        %v770 = vadd.f32 %v768, %v769
        %v771 = vrcp.pop 256.0
        %v772 = vmul.f32 256.0, %v771
        %v773 = vsub.f32 1.0, %v772
        %v774 = vmul.f32 %v771, %v773
        %v775 = vadd.f32 %v771, %v774
        %vm776 = vweird.f32 %v771
        %v777 = vsel %vm776, %v771, %v775
        %v778 = vmul.f32 %v665, %v777
        %v779 = vmul.f32 %v672, %v777
        %v780 = vmul.f32 %v679, %v777
        %v781 = vmul.f32 %v686, %v777
        %v782 = vmul.f32 %v693, %v777
        %v783 = vmul.f32 %v700, %v777
        %v784 = vmul.f32 %v707, %v777
        %v785 = vmul.f32 %v714, %v777
        %v786 = vmul.f32 %v721, %v777
        %v787 = vmul.f32 %v728, %v777
        %v788 = vmul.f32 %v735, %v777
        %v789 = vmul.f32 %v742, %v777
        %v790 = vmul.f32 %v749, %v777
        %v791 = vmul.f32 %v756, %v777
        %v792 = vmul.f32 %v763, %v777
        %v793 = vmul.f32 %v770, %v777
        %v799 = vunpack.c.l.s4 269488144
        %v800 = vunpack.c.0.s8 %v799
        %v801 = vperm.slane %v567, %v800
        %v803 = vunpack.c.l.s4 842150450
        %v804 = vunpack.c.0.s8 %v803
        %v805 = vperm.slane %v567, %v804
        %v807 = vunpack.c.l.s4 1414812756
        %v808 = vunpack.c.0.s8 %v807
        %v809 = vperm.slane %v567, %v808
        %v811 = vunpack.c.l.s4 1987475062
        %v812 = vunpack.c.0.s8 %v811
        %v813 = vperm.slane %v567, %v812
        %v815 = vunpack.c.l.s4 269488144
        %v816 = vunpack.c.0.s8 %v815
        %v817 = vperm.slane %v569, %v816
        %v819 = vunpack.c.l.s4 842150450
        %v820 = vunpack.c.0.s8 %v819
        %v821 = vperm.slane %v569, %v820
        %v823 = vunpack.c.l.s4 1414812756
        %v824 = vunpack.c.0.s8 %v823
        %v825 = vperm.slane %v569, %v824
        %v827 = vunpack.c.l.s4 1987475062
        %v828 = vunpack.c.0.s8 %v827
        %v829 = vperm.slane %v569, %v828
        %v831 = vunpack.c.l.s4 269488144
        %v832 = vunpack.c.0.s8 %v831
        %v833 = vperm.slane %v571, %v832
        %v835 = vunpack.c.l.s4 842150450
        %v836 = vunpack.c.0.s8 %v835
        %v837 = vperm.slane %v571, %v836
        %v839 = vunpack.c.l.s4 1414812756
        %v840 = vunpack.c.0.s8 %v839
        %v841 = vperm.slane %v571, %v840
        %v843 = vunpack.c.l.s4 1987475062
        %v844 = vunpack.c.0.s8 %v843
        %v845 = vperm.slane %v571, %v844
        %v847 = vunpack.c.l.s4 269488144
        %v848 = vunpack.c.0.s8 %v847
        %v849 = vperm.slane %v573, %v848
        %v851 = vunpack.c.l.s4 842150450
        %v852 = vunpack.c.0.s8 %v851
        %v853 = vperm.slane %v573, %v852
        %v855 = vunpack.c.l.s4 1414812756
        %v856 = vunpack.c.0.s8 %v855
        %v857 = vperm.slane %v573, %v856
        %v859 = vunpack.c.l.s4 1987475062
        %v860 = vunpack.c.0.s8 %v859
        %v861 = vperm.slane %v573, %v860
        %v878 = vsel %vm658, %v801, 0.0
        %v879 = vrot.slane %v878, 4
        %v880 = vadd.f32 %v878, %v879
        %v881 = vrot.slane %v880, 2
        %v882 = vadd.f32 %v880, %v881
        %v883 = vrot.slane %v882, 1
        %v884 = vadd.f32 %v882, %v883
        %v885 = vsel %vm658, %v805, 0.0
        %v886 = vrot.slane %v885, 4
        %v887 = vadd.f32 %v885, %v886
        %v888 = vrot.slane %v887, 2
        %v889 = vadd.f32 %v887, %v888
        %v890 = vrot.slane %v889, 1
        %v891 = vadd.f32 %v889, %v890
        %v892 = vsel %vm658, %v809, 0.0
        %v893 = vrot.slane %v892, 4
        %v894 = vadd.f32 %v892, %v893
        %v895 = vrot.slane %v894, 2
        %v896 = vadd.f32 %v894, %v895
        %v897 = vrot.slane %v896, 1
        %v898 = vadd.f32 %v896, %v897
        %v899 = vsel %vm658, %v813, 0.0
        %v900 = vrot.slane %v899, 4
        %v901 = vadd.f32 %v899, %v900
        %v902 = vrot.slane %v901, 2
        %v903 = vadd.f32 %v901, %v902
        %v904 = vrot.slane %v903, 1
        %v905 = vadd.f32 %v903, %v904
        %v906 = vsel %vm658, %v817, 0.0
        %v907 = vrot.slane %v906, 4
        %v908 = vadd.f32 %v906, %v907
        %v909 = vrot.slane %v908, 2
        %v910 = vadd.f32 %v908, %v909
        %v911 = vrot.slane %v910, 1
        %v912 = vadd.f32 %v910, %v911
        %v913 = vsel %vm658, %v821, 0.0
        %v914 = vrot.slane %v913, 4
        %v915 = vadd.f32 %v913, %v914
        %v916 = vrot.slane %v915, 2
        %v917 = vadd.f32 %v915, %v916
        %v918 = vrot.slane %v917, 1
        %v919 = vadd.f32 %v917, %v918
        %v920 = vsel %vm658, %v825, 0.0
        %v921 = vrot.slane %v920, 4
        %v922 = vadd.f32 %v920, %v921
        %v923 = vrot.slane %v922, 2
        %v924 = vadd.f32 %v922, %v923
        %v925 = vrot.slane %v924, 1
        %v926 = vadd.f32 %v924, %v925
        %v927 = vsel %vm658, %v829, 0.0
        %v928 = vrot.slane %v927, 4
        %v929 = vadd.f32 %v927, %v928
        %v930 = vrot.slane %v929, 2
        %v931 = vadd.f32 %v929, %v930
        %v932 = vrot.slane %v931, 1
        %v933 = vadd.f32 %v931, %v932
        %v934 = vsel %vm658, %v833, 0.0
        %v935 = vrot.slane %v934, 4
        %v936 = vadd.f32 %v934, %v935
        %v937 = vrot.slane %v936, 2
        %v938 = vadd.f32 %v936, %v937
        %v939 = vrot.slane %v938, 1
        %v940 = vadd.f32 %v938, %v939
        %v941 = vsel %vm658, %v837, 0.0
        %v942 = vrot.slane %v941, 4
        %v943 = vadd.f32 %v941, %v942
        %v944 = vrot.slane %v943, 2
        %v945 = vadd.f32 %v943, %v944
        %v946 = vrot.slane %v945, 1
        %v947 = vadd.f32 %v945, %v946
        %v948 = vsel %vm658, %v841, 0.0
        %v949 = vrot.slane %v948, 4
        %v950 = vadd.f32 %v948, %v949
        %v951 = vrot.slane %v950, 2
        %v952 = vadd.f32 %v950, %v951
        %v953 = vrot.slane %v952, 1
        %v954 = vadd.f32 %v952, %v953
        %v955 = vsel %vm658, %v845, 0.0
        %v956 = vrot.slane %v955, 4
        %v957 = vadd.f32 %v955, %v956
        %v958 = vrot.slane %v957, 2
        %v959 = vadd.f32 %v957, %v958
        %v960 = vrot.slane %v959, 1
        %v961 = vadd.f32 %v959, %v960
        %v962 = vsel %vm658, %v849, 0.0
        %v963 = vrot.slane %v962, 4
        %v964 = vadd.f32 %v962, %v963
        %v965 = vrot.slane %v964, 2
        %v966 = vadd.f32 %v964, %v965
        %v967 = vrot.slane %v966, 1
        %v968 = vadd.f32 %v966, %v967
        %v969 = vsel %vm658, %v853, 0.0
        %v970 = vrot.slane %v969, 4
        %v971 = vadd.f32 %v969, %v970
        %v972 = vrot.slane %v971, 2
        %v973 = vadd.f32 %v971, %v972
        %v974 = vrot.slane %v973, 1
        %v975 = vadd.f32 %v973, %v974
        %v976 = vsel %vm658, %v857, 0.0
        %v977 = vrot.slane %v976, 4
        %v978 = vadd.f32 %v976, %v977
        %v979 = vrot.slane %v978, 2
        %v980 = vadd.f32 %v978, %v979
        %v981 = vrot.slane %v980, 1
        %v982 = vadd.f32 %v980, %v981
        %v983 = vsel %vm658, %v861, 0.0
        %v984 = vrot.slane %v983, 4
        %v985 = vadd.f32 %v983, %v984
        %v986 = vrot.slane %v985, 2
        %v987 = vadd.f32 %v985, %v986
        %v988 = vrot.slane %v987, 1
        %v989 = vadd.f32 %v987, %v988
        %v990 = vmul.f32 %v884, %v777
        %v991 = vmul.f32 %v891, %v777
        %v992 = vmul.f32 %v898, %v777
        %v993 = vmul.f32 %v905, %v777
        %v994 = vmul.f32 %v912, %v777
        %v995 = vmul.f32 %v919, %v777
        %v996 = vmul.f32 %v926, %v777
        %v997 = vmul.f32 %v933, %v777
        %v998 = vmul.f32 %v940, %v777
        %v999 = vmul.f32 %v947, %v777
        %v1000 = vmul.f32 %v954, %v777
        %v1001 = vmul.f32 %v961, %v777
        %v1002 = vmul.f32 %v968, %v777
        %v1003 = vmul.f32 %v975, %v777
        %v1004 = vmul.f32 %v982, %v777
        %v1005 = vmul.f32 %v989, %v777
        %v1006 = vmul.f32 %v778, %v778
        %v1007 = vmul.f32 %v779, %v779
        %v1008 = vmul.f32 %v780, %v780
        %v1009 = vmul.f32 %v781, %v781
        %v1010 = vmul.f32 %v782, %v782
        %v1011 = vmul.f32 %v783, %v783
        %v1012 = vmul.f32 %v784, %v784
        %v1013 = vmul.f32 %v785, %v785
        %v1014 = vmul.f32 %v786, %v786
        %v1015 = vmul.f32 %v787, %v787
        %v1016 = vmul.f32 %v788, %v788
        %v1017 = vmul.f32 %v789, %v789
        %v1018 = vmul.f32 %v790, %v790
        %v1019 = vmul.f32 %v791, %v791
        %v1020 = vmul.f32 %v792, %v792
        %v1021 = vmul.f32 %v793, %v793
        %v1022 = vsub.f32 %v990, %v1006
        %v1023 = vsub.f32 %v991, %v1007
        %v1024 = vsub.f32 %v992, %v1008
        %v1025 = vsub.f32 %v993, %v1009
        %v1026 = vsub.f32 %v994, %v1010
        %v1027 = vsub.f32 %v995, %v1011
        %v1028 = vsub.f32 %v996, %v1012
        %v1029 = vsub.f32 %v997, %v1013
        %v1030 = vsub.f32 %v998, %v1014
        %v1031 = vsub.f32 %v999, %v1015
        %v1032 = vsub.f32 %v1000, %v1016
        %v1033 = vsub.f32 %v1001, %v1017
        %v1034 = vsub.f32 %v1002, %v1018
        %v1035 = vsub.f32 %v1003, %v1019
        %v1036 = vsub.f32 %v1004, %v1020
        %v1037 = vsub.f32 %v1005, %v1021
        %v1038 = vmax.f32 %v1022, 0.0
        %v1039 = vmax.f32 %v1023, 0.0
        %v1040 = vmax.f32 %v1024, 0.0
        %v1041 = vmax.f32 %v1025, 0.0
        %v1042 = vmax.f32 %v1026, 0.0
        %v1043 = vmax.f32 %v1027, 0.0
        %v1044 = vmax.f32 %v1028, 0.0
        %v1045 = vmax.f32 %v1029, 0.0
        %v1046 = vmax.f32 %v1030, 0.0
        %v1047 = vmax.f32 %v1031, 0.0
        %v1048 = vmax.f32 %v1032, 0.0
        %v1049 = vmax.f32 %v1033, 0.0
        %v1050 = vmax.f32 %v1034, 0.0
        %v1051 = vmax.f32 %v1035, 0.0
        %v1052 = vmax.f32 %v1036, 0.0
        %v1053 = vmax.f32 %v1037, 0.0
        %1070 = vst [vmem:[#allocation1] ss:$4 sm:$0xff] %v778
        %s1071 = scalar_lea.vmem [#allocation1], 1
        %1072 = vst [vmem:[%s1071] ss:$4 sm:$0xff] %v779
        %s1073 = scalar_lea.vmem [#allocation1], 2
        %1074 = vst [vmem:[%s1073] ss:$4 sm:$0xff] %v780
        %s1075 = scalar_lea.vmem [#allocation1], 3
        %1076 = vst [vmem:[%s1075] ss:$4 sm:$0xff] %v781
        %s1077 = scalar_lea.vmem [#allocation1], 32
        %1078 = vst [vmem:[%s1077] ss:$4 sm:$0xff] %v782
        %s1079 = scalar_lea.vmem [#allocation1], 33
        %1080 = vst [vmem:[%s1079] ss:$4 sm:$0xff] %v783
        %s1081 = scalar_lea.vmem [#allocation1], 34
        %1082 = vst [vmem:[%s1081] ss:$4 sm:$0xff] %v784
        %s1083 = scalar_lea.vmem [#allocation1], 35
        %1084 = vst [vmem:[%s1083] ss:$4 sm:$0xff] %v785
        %v1085 = vld.sshfl [vmem:[#allocation1] sm:$0xff pattern:$0x73625140]
        %v1086 = vld.sshfl [vmem:[#allocation1 + $0x20] sm:$0xff pattern:$0x73625140]
        %1087 = vst [vmem:[#allocation1] ss:$4 sm:$0xff] %v786
        %1088 = vst [vmem:[%s1071] ss:$4 sm:$0xff] %v787
        %1089 = vst [vmem:[%s1073] ss:$4 sm:$0xff] %v788
        %1090 = vst [vmem:[%s1075] ss:$4 sm:$0xff] %v789
        %1091 = vst [vmem:[%s1077] ss:$4 sm:$0xff] %v790
        %1092 = vst [vmem:[%s1079] ss:$4 sm:$0xff] %v791
        %1093 = vst [vmem:[%s1081] ss:$4 sm:$0xff] %v792
        %1094 = vst [vmem:[%s1083] ss:$4 sm:$0xff] %v793
        %v1095 = vld.sshfl [vmem:[#allocation1] sm:$0xff pattern:$0x73625140]
        %v1096 = vld.sshfl [vmem:[#allocation1 + $0x20] sm:$0xff pattern:$0x73625140]
        %v1101 = vsub.f32 %v550, %v1085
        %v1102 = vsub.f32 %v551, %v1086
        %v1103 = vsub.f32 %v552, %v1095
        %v1104 = vsub.f32 %v553, %v1096
        %v1105 = vadd.f32 %v1038, 1e-05
        %v1106 = vadd.f32 %v1039, 1e-05
        %v1107 = vadd.f32 %v1040, 1e-05
        %v1108 = vadd.f32 %v1041, 1e-05
        %v1109 = vadd.f32 %v1042, 1e-05
        %v1110 = vadd.f32 %v1043, 1e-05
        %v1111 = vadd.f32 %v1044, 1e-05
        %v1112 = vadd.f32 %v1045, 1e-05
        %v1113 = vadd.f32 %v1046, 1e-05
        %v1114 = vadd.f32 %v1047, 1e-05
        %v1115 = vadd.f32 %v1048, 1e-05
        %v1116 = vadd.f32 %v1049, 1e-05
        %v1117 = vadd.f32 %v1050, 1e-05
        %v1118 = vadd.f32 %v1051, 1e-05
        %v1119 = vadd.f32 %v1052, 1e-05
        %v1120 = vadd.f32 %v1053, 1e-05
        %v1121 = vrsqrt.pop %v1105
        %v1122 = vmul.f32 %v1121, %v1105
        %v1123 = vmul.f32 %v1122, %v1121
        %v1124 = vmul.f32 0.5, %v1123
        %v1125 = vsub.f32 1.5, %v1124
        %v1126 = vmul.f32 %v1121, %v1125
        %vm1127 = vweird.f32 %v1105
        %vm1128 = vweird.f32 %v1121
        %vm1129 = vmor %vm1127, %vm1128
        %v1130 = vsel %vm1129, %v1121, %v1126
        %v1131 = vrsqrt.pop %v1106
        %v1132 = vmul.f32 %v1131, %v1106
        %v1133 = vmul.f32 %v1132, %v1131
        %v1134 = vmul.f32 0.5, %v1133
        %v1135 = vsub.f32 1.5, %v1134
        %v1136 = vmul.f32 %v1131, %v1135
        %vm1137 = vweird.f32 %v1106
        %vm1138 = vweird.f32 %v1131
        %vm1139 = vmor %vm1137, %vm1138
        %v1140 = vsel %vm1139, %v1131, %v1136
        %v1141 = vrsqrt.pop %v1107
        %v1142 = vmul.f32 %v1141, %v1107
        %v1143 = vmul.f32 %v1142, %v1141
        %v1144 = vmul.f32 0.5, %v1143
        %v1145 = vsub.f32 1.5, %v1144
        %v1146 = vmul.f32 %v1141, %v1145
        %vm1147 = vweird.f32 %v1107
        %vm1148 = vweird.f32 %v1141
        %vm1149 = vmor %vm1147, %vm1148
        %v1150 = vsel %vm1149, %v1141, %v1146
        %v1151 = vrsqrt.pop %v1108
        %v1152 = vmul.f32 %v1151, %v1108
        %v1153 = vmul.f32 %v1152, %v1151
        %v1154 = vmul.f32 0.5, %v1153
        %v1155 = vsub.f32 1.5, %v1154
        %v1156 = vmul.f32 %v1151, %v1155
        %vm1157 = vweird.f32 %v1108
        %vm1158 = vweird.f32 %v1151
        %vm1159 = vmor %vm1157, %vm1158
        %v1160 = vsel %vm1159, %v1151, %v1156
        %v1161 = vrsqrt.pop %v1109
        %v1162 = vmul.f32 %v1161, %v1109
        %v1163 = vmul.f32 %v1162, %v1161
        %v1164 = vmul.f32 0.5, %v1163
        %v1165 = vsub.f32 1.5, %v1164
        %v1166 = vmul.f32 %v1161, %v1165
        %vm1167 = vweird.f32 %v1109
        %vm1168 = vweird.f32 %v1161
        %vm1169 = vmor %vm1167, %vm1168
        %v1170 = vsel %vm1169, %v1161, %v1166
        %v1171 = vrsqrt.pop %v1110
        %v1172 = vmul.f32 %v1171, %v1110
        %v1173 = vmul.f32 %v1172, %v1171
        %v1174 = vmul.f32 0.5, %v1173
        %v1175 = vsub.f32 1.5, %v1174
        %v1176 = vmul.f32 %v1171, %v1175
        %vm1177 = vweird.f32 %v1110
        %vm1178 = vweird.f32 %v1171
        %vm1179 = vmor %vm1177, %vm1178
        %v1180 = vsel %vm1179, %v1171, %v1176
        %v1181 = vrsqrt.pop %v1111
        %v1182 = vmul.f32 %v1181, %v1111
        %v1183 = vmul.f32 %v1182, %v1181
        %v1184 = vmul.f32 0.5, %v1183
        %v1185 = vsub.f32 1.5, %v1184
        %v1186 = vmul.f32 %v1181, %v1185
        %vm1187 = vweird.f32 %v1111
        %vm1188 = vweird.f32 %v1181
        %vm1189 = vmor %vm1187, %vm1188
        %v1190 = vsel %vm1189, %v1181, %v1186
        %v1191 = vrsqrt.pop %v1112
        %v1192 = vmul.f32 %v1191, %v1112
        %v1193 = vmul.f32 %v1192, %v1191
        %v1194 = vmul.f32 0.5, %v1193
        %v1195 = vsub.f32 1.5, %v1194
        %v1196 = vmul.f32 %v1191, %v1195
        %vm1197 = vweird.f32 %v1112
        %vm1198 = vweird.f32 %v1191
        %vm1199 = vmor %vm1197, %vm1198
        %v1200 = vsel %vm1199, %v1191, %v1196
        %v1201 = vrsqrt.pop %v1113
        %v1202 = vmul.f32 %v1201, %v1113
        %v1203 = vmul.f32 %v1202, %v1201
        %v1204 = vmul.f32 0.5, %v1203
        %v1205 = vsub.f32 1.5, %v1204
        %v1206 = vmul.f32 %v1201, %v1205
        %vm1207 = vweird.f32 %v1113
        %vm1208 = vweird.f32 %v1201
        %vm1209 = vmor %vm1207, %vm1208
        %v1210 = vsel %vm1209, %v1201, %v1206
        %v1211 = vrsqrt.pop %v1114
        %v1212 = vmul.f32 %v1211, %v1114
        %v1213 = vmul.f32 %v1212, %v1211
        %v1214 = vmul.f32 0.5, %v1213
        %v1215 = vsub.f32 1.5, %v1214
        %v1216 = vmul.f32 %v1211, %v1215
        %vm1217 = vweird.f32 %v1114
        %vm1218 = vweird.f32 %v1211
        %vm1219 = vmor %vm1217, %vm1218
        %v1220 = vsel %vm1219, %v1211, %v1216
        %v1221 = vrsqrt.pop %v1115
        %v1222 = vmul.f32 %v1221, %v1115
        %v1223 = vmul.f32 %v1222, %v1221
        %v1224 = vmul.f32 0.5, %v1223
        %v1225 = vsub.f32 1.5, %v1224
        %v1226 = vmul.f32 %v1221, %v1225
        %vm1227 = vweird.f32 %v1115
        %vm1228 = vweird.f32 %v1221
        %vm1229 = vmor %vm1227, %vm1228
        %v1230 = vsel %vm1229, %v1221, %v1226
        %v1231 = vrsqrt.pop %v1116
        %v1232 = vmul.f32 %v1231, %v1116
        %v1233 = vmul.f32 %v1232, %v1231
        %v1234 = vmul.f32 0.5, %v1233
        %v1235 = vsub.f32 1.5, %v1234
        %v1236 = vmul.f32 %v1231, %v1235
        %vm1237 = vweird.f32 %v1116
        %vm1238 = vweird.f32 %v1231
        %vm1239 = vmor %vm1237, %vm1238
        %v1240 = vsel %vm1239, %v1231, %v1236
        %v1241 = vrsqrt.pop %v1117
        %v1242 = vmul.f32 %v1241, %v1117
        %v1243 = vmul.f32 %v1242, %v1241
        %v1244 = vmul.f32 0.5, %v1243
        %v1245 = vsub.f32 1.5, %v1244
        %v1246 = vmul.f32 %v1241, %v1245
        %vm1247 = vweird.f32 %v1117
        %vm1248 = vweird.f32 %v1241
        %vm1249 = vmor %vm1247, %vm1248
        %v1250 = vsel %vm1249, %v1241, %v1246
        %v1251 = vrsqrt.pop %v1118
        %v1252 = vmul.f32 %v1251, %v1118
        %v1253 = vmul.f32 %v1252, %v1251
        %v1254 = vmul.f32 0.5, %v1253
        %v1255 = vsub.f32 1.5, %v1254
        %v1256 = vmul.f32 %v1251, %v1255
        %vm1257 = vweird.f32 %v1118
        %vm1258 = vweird.f32 %v1251
        %vm1259 = vmor %vm1257, %vm1258
        %v1260 = vsel %vm1259, %v1251, %v1256
        %v1261 = vrsqrt.pop %v1119
        %v1262 = vmul.f32 %v1261, %v1119
        %v1263 = vmul.f32 %v1262, %v1261
        %v1264 = vmul.f32 0.5, %v1263
        %v1265 = vsub.f32 1.5, %v1264
        %v1266 = vmul.f32 %v1261, %v1265
        %vm1267 = vweird.f32 %v1119
        %vm1268 = vweird.f32 %v1261
        %vm1269 = vmor %vm1267, %vm1268
        %v1270 = vsel %vm1269, %v1261, %v1266
        %v1271 = vrsqrt.pop %v1120
        %v1272 = vmul.f32 %v1271, %v1120
        %v1273 = vmul.f32 %v1272, %v1271
        %v1274 = vmul.f32 0.5, %v1273
        %v1275 = vsub.f32 1.5, %v1274
        %v1276 = vmul.f32 %v1271, %v1275
        %vm1277 = vweird.f32 %v1120
        %vm1278 = vweird.f32 %v1271
        %vm1279 = vmor %vm1277, %vm1278
        %v1280 = vsel %vm1279, %v1271, %v1276
        %1297 = vst [vmem:[#allocation1] ss:$4 sm:$0xff] %v1130
        %s1298 = scalar_lea.vmem [#allocation1], 1
        %1299 = vst [vmem:[%s1298] ss:$4 sm:$0xff] %v1140
        %s1300 = scalar_lea.vmem [#allocation1], 2
        %1301 = vst [vmem:[%s1300] ss:$4 sm:$0xff] %v1150
        %s1302 = scalar_lea.vmem [#allocation1], 3
        %1303 = vst [vmem:[%s1302] ss:$4 sm:$0xff] %v1160
        %s1304 = scalar_lea.vmem [#allocation1], 32
        %1305 = vst [vmem:[%s1304] ss:$4 sm:$0xff] %v1170
        %s1306 = scalar_lea.vmem [#allocation1], 33
        %1307 = vst [vmem:[%s1306] ss:$4 sm:$0xff] %v1180
        %s1308 = scalar_lea.vmem [#allocation1], 34
        %1309 = vst [vmem:[%s1308] ss:$4 sm:$0xff] %v1190
        %s1310 = scalar_lea.vmem [#allocation1], 35
        %1311 = vst [vmem:[%s1310] ss:$4 sm:$0xff] %v1200
        %v1312 = vld.sshfl [vmem:[#allocation1] sm:$0xff pattern:$0x73625140]
        %v1313 = vld.sshfl [vmem:[#allocation1 + $0x20] sm:$0xff pattern:$0x73625140]
        %1314 = vst [vmem:[#allocation1] ss:$4 sm:$0xff] %v1210
        %1315 = vst [vmem:[%s1298] ss:$4 sm:$0xff] %v1220
        %1316 = vst [vmem:[%s1300] ss:$4 sm:$0xff] %v1230
        %1317 = vst [vmem:[%s1302] ss:$4 sm:$0xff] %v1240
        %1318 = vst [vmem:[%s1304] ss:$4 sm:$0xff] %v1250
        %1319 = vst [vmem:[%s1306] ss:$4 sm:$0xff] %v1260
        %1320 = vst [vmem:[%s1308] ss:$4 sm:$0xff] %v1270
        %1321 = vst [vmem:[%s1310] ss:$4 sm:$0xff] %v1280
        %v1322 = vld.sshfl [vmem:[#allocation1] sm:$0xff pattern:$0x73625140]
        %v1323 = vld.sshfl [vmem:[#allocation1 + $0x20] sm:$0xff pattern:$0x73625140]
        %v1328 = vmul.f32 %v1101, %v1312
        %v1329 = vmul.f32 %v1102, %v1313
        %v1330 = vmul.f32 %v1103, %v1322
        %v1331 = vmul.f32 %v1104, %v1323
        %v1332 = vld [vmem:[%s6] sm:$0xf]
        %v1333 = vld [vmem:[%s6 + $0x4] sm:$0xf]
        %v1334 = vld [vmem:[%s6 + $0x8] sm:$0xf]
        %v1335 = vld [vmem:[%s6 + $0xc] sm:$0xf]
        %v1336 = vpack.c.bf16 %v1329, %v1328
        %v1337 = vpack.c.bf16 %v1331, %v1330
        %v1342 = vunpack.c.l.b16 %v1332
        %v1343 = vunpack.c.l.b16 %v1333
        %v1344 = vunpack.c.l.b16 %v1334
        %v1345 = vunpack.c.l.b16 %v1335
        %v1346 = vpack.c.b16 %v1343, %v1342
        %v1347 = vpack.c.b16 %v1345, %v1344
        %vm1348 = vcmask 261120
        %v1350 = vsel %vm1348, %v1346, 0
        %v1353 = vsel %vm1348, %v1347, 0
        %1355 = vmatpush.bf16.msra.mxu0 0
        %1356 = vmatpush.bf16.msra.mxu0 0
        %1357 = vmatpush.bf16.msra.mxu0 0
        %1358 = vmatpush.bf16.msra.mxu0 0
        %1359 = vmatpush.bf16.msra.mxu0 0
        %1360 = vmatpush.bf16.msra.mxu0 0
        %1361 = vmatpush.bf16.msra.mxu0 %v1337
        %1362 = vmatpush.bf16.msra.mxu0 %v1336
        %1363 = vmatmul.bf16.gmra.mxu0 %v1350
        %v1364 = vpop.f32.mrf.mxu0
        %v1365 = vadd.f32 0.0, %v1364
        %v1366 = vpop.f32.mrf.mxu0
        %v1367 = vadd.f32 0.0, %v1366
        %1368 = vmatmul.bf16.gmra.mxu0 %v1353
        %v1369 = vpop.f32.mrf.mxu0
        %v1370 = vadd.f32 0.0, %v1369
        %v1371 = vpop.f32.mrf.mxu0
        %v1372 = vadd.f32 0.0, %v1371
        %1373 = vdwg.mxu0
        %v1374 = vld [vmem:[%s5] sm:$0xf]
        %v1375 = vld [vmem:[%s5 + $0x4] sm:$0xf]
        %v1376 = vld [vmem:[%s5 + $0x8] sm:$0xf]
        %v1377 = vld [vmem:[%s5 + $0xc] sm:$0xf]
        %1379 = vset.pattern.permute.xlu0 0
        %1380 = vperm.xlu0 %1379, %v436
        %v1381 = vpop.permute.xlu0 %1380
        %1384 = vset.pattern.permute.xlu0 0
        %1385 = vperm.xlu0 %1384, %v437
        %v1386 = vpop.permute.xlu0 %1385
        %1389 = vset.pattern.permute.xlu0 0
        %1390 = vperm.xlu0 %1389, %v438
        %v1391 = vpop.permute.xlu0 %1390
        %1394 = vset.pattern.permute.xlu0 0
        %1395 = vperm.xlu0 %1394, %v439
        %v1396 = vpop.permute.xlu0 %1395
        %v1402 = vunpack.c.l.b16 %v1374
        %v1403 = vunpack.c.l.b16 %v1375
        %v1404 = vunpack.c.l.b16 %v1376
        %v1405 = vunpack.c.l.b16 %v1377
        %v1406 = vpack.c.b16 %v1403, %v1402
        %v1407 = vpack.c.b16 %v1405, %v1404
        %v1416 = vunpack.c.l.b16 %v461
        %v1417 = vunpack.c.h.b16 %v461
        %v1418 = vunpack.c.l.b16 %v462
        %v1419 = vunpack.c.h.b16 %v462
        %v1420 = vunpack.c.l.b16 %v463
        %v1421 = vunpack.c.h.b16 %v463
        %v1422 = vunpack.c.l.b16 %v464
        %v1423 = vunpack.c.h.b16 %v464
        %v1424 = vunpack.c.l.b16 %v465
        %v1425 = vunpack.c.h.b16 %v465
        %v1426 = vunpack.c.l.b16 %v466
        %v1427 = vunpack.c.h.b16 %v466
        %v1428 = vunpack.c.l.b16 %v467
        %v1429 = vunpack.c.h.b16 %v467
        %v1430 = vunpack.c.l.b16 %v468
        %v1431 = vunpack.c.h.b16 %v468
        %v1432 = vpack.c.b16 %v1424, %v1416
        %v1433 = vpack.c.b16 %v1425, %v1417
        %v1434 = vpack.c.b16 %v1426, %v1418
        %v1435 = vpack.c.b16 %v1427, %v1419
        %v1436 = vpack.c.b16 %v1428, %v1420
        %v1437 = vpack.c.b16 %v1429, %v1421
        %v1438 = vpack.c.b16 %v1430, %v1422
        %v1439 = vpack.c.b16 %v1431, %v1423
        %vm1448 = vcmask 130048
        %v1450 = vsel %vm1448, %v1406, 0
        %v1453 = vsel %vm1448, %v1407, 0
        %1455 = vmatpush.bf16.msra.mxu0 0
        %1456 = vmatpush.bf16.msra.mxu0 0
        %1457 = vmatpush.bf16.msra.mxu0 0
        %1458 = vmatpush.bf16.msra.mxu0 0
        %1459 = vmatpush.bf16.msra.mxu0 0
        %1460 = vmatpush.bf16.msra.mxu0 0
        %1461 = vmatpush.bf16.msra.mxu0 0
        %1462 = vmatpush.bf16.msra.mxu0 %v1432
        %1463 = vmatmul.bf16.gmra.mxu0 %v1450
        %v1464 = vpop.f32.mrf.mxu0
        %v1465 = vadd.f32 %v1381, %v1464
        %v1466 = vpop.f32.mrf.mxu0
        %v1467 = vadd.f32 %v1386, %v1466
        %1468 = vmatmul.bf16.gmra.mxu0 %v1453
        %v1469 = vpop.f32.mrf.mxu0
        %v1470 = vadd.f32 %v1391, %v1469
        %v1471 = vpop.f32.mrf.mxu0
        %v1472 = vadd.f32 %v1396, %v1471
        %1473 = vdwg.mxu0
        %1474 = vmatpush.bf16.msra.mxu0 0
        %1475 = vmatpush.bf16.msra.mxu0 0
        %1476 = vmatpush.bf16.msra.mxu0 0
        %1477 = vmatpush.bf16.msra.mxu0 0
        %1478 = vmatpush.bf16.msra.mxu0 0
        %1479 = vmatpush.bf16.msra.mxu0 0
        %1480 = vmatpush.bf16.msra.mxu0 0
        %1481 = vmatpush.bf16.msra.mxu0 %v1433
        %1482 = vmatmul.bf16.gmra.mxu0 %v1450
        %v1483 = vpop.f32.mrf.mxu0
        %v1484 = vadd.f32 %v1381, %v1483
        %v1485 = vpop.f32.mrf.mxu0
        %v1486 = vadd.f32 %v1386, %v1485
        %1487 = vmatmul.bf16.gmra.mxu0 %v1453
        %v1488 = vpop.f32.mrf.mxu0
        %v1489 = vadd.f32 %v1391, %v1488
        %v1490 = vpop.f32.mrf.mxu0
        %v1491 = vadd.f32 %v1396, %v1490
        %1492 = vdwg.mxu0
        %1493 = vmatpush.bf16.msra.mxu0 0
        %1494 = vmatpush.bf16.msra.mxu0 0
        %1495 = vmatpush.bf16.msra.mxu0 0
        %1496 = vmatpush.bf16.msra.mxu0 0
        %1497 = vmatpush.bf16.msra.mxu0 0
        %1498 = vmatpush.bf16.msra.mxu0 0
        %1499 = vmatpush.bf16.msra.mxu0 0
        %1500 = vmatpush.bf16.msra.mxu0 %v1434
        %1501 = vmatmul.bf16.gmra.mxu0 %v1450
        %v1502 = vpop.f32.mrf.mxu0
        %v1503 = vadd.f32 %v1381, %v1502
        %v1504 = vpop.f32.mrf.mxu0
        %v1505 = vadd.f32 %v1386, %v1504
        %1506 = vmatmul.bf16.gmra.mxu0 %v1453
        %v1507 = vpop.f32.mrf.mxu0
        %v1508 = vadd.f32 %v1391, %v1507
        %v1509 = vpop.f32.mrf.mxu0
        %v1510 = vadd.f32 %v1396, %v1509
        %1511 = vdwg.mxu0
        %1512 = vmatpush.bf16.msra.mxu0 0
        %1513 = vmatpush.bf16.msra.mxu0 0
        %1514 = vmatpush.bf16.msra.mxu0 0
        %1515 = vmatpush.bf16.msra.mxu0 0
        %1516 = vmatpush.bf16.msra.mxu0 0
        %1517 = vmatpush.bf16.msra.mxu0 0
        %1518 = vmatpush.bf16.msra.mxu0 0
        %1519 = vmatpush.bf16.msra.mxu0 %v1435
        %1520 = vmatmul.bf16.gmra.mxu0 %v1450
        %v1521 = vpop.f32.mrf.mxu0
        %v1522 = vadd.f32 %v1381, %v1521
        %v1523 = vpop.f32.mrf.mxu0
        %v1524 = vadd.f32 %v1386, %v1523
        %1525 = vmatmul.bf16.gmra.mxu0 %v1453
        %v1526 = vpop.f32.mrf.mxu0
        %v1527 = vadd.f32 %v1391, %v1526
        %v1528 = vpop.f32.mrf.mxu0
        %v1529 = vadd.f32 %v1396, %v1528
        %1530 = vdwg.mxu0
        %1531 = vmatpush.bf16.msra.mxu0 0
        %1532 = vmatpush.bf16.msra.mxu0 0
        %1533 = vmatpush.bf16.msra.mxu0 0
        %1534 = vmatpush.bf16.msra.mxu0 0
        %1535 = vmatpush.bf16.msra.mxu0 0
        %1536 = vmatpush.bf16.msra.mxu0 0
        %1537 = vmatpush.bf16.msra.mxu0 0
        %1538 = vmatpush.bf16.msra.mxu0 %v1436
        %1539 = vmatmul.bf16.gmra.mxu0 %v1450
        %v1540 = vpop.f32.mrf.mxu0
        %v1541 = vadd.f32 %v1381, %v1540
        %v1542 = vpop.f32.mrf.mxu0
        %v1543 = vadd.f32 %v1386, %v1542
        %1544 = vmatmul.bf16.gmra.mxu0 %v1453
        %v1545 = vpop.f32.mrf.mxu0
        %v1546 = vadd.f32 %v1391, %v1545
        %v1547 = vpop.f32.mrf.mxu0
        %v1548 = vadd.f32 %v1396, %v1547
        %1549 = vdwg.mxu0
        %1550 = vmatpush.bf16.msra.mxu0 0
        %1551 = vmatpush.bf16.msra.mxu0 0
        %1552 = vmatpush.bf16.msra.mxu0 0
        %1553 = vmatpush.bf16.msra.mxu0 0
        %1554 = vmatpush.bf16.msra.mxu0 0
        %1555 = vmatpush.bf16.msra.mxu0 0
        %1556 = vmatpush.bf16.msra.mxu0 0
        %1557 = vmatpush.bf16.msra.mxu0 %v1437
        %1558 = vmatmul.bf16.gmra.mxu0 %v1450
        %v1559 = vpop.f32.mrf.mxu0
        %v1560 = vadd.f32 %v1381, %v1559
        %v1561 = vpop.f32.mrf.mxu0
        %v1562 = vadd.f32 %v1386, %v1561
        %1563 = vmatmul.bf16.gmra.mxu0 %v1453
        %v1564 = vpop.f32.mrf.mxu0
        %v1565 = vadd.f32 %v1391, %v1564
        %v1566 = vpop.f32.mrf.mxu0
        %v1567 = vadd.f32 %v1396, %v1566
        %1568 = vdwg.mxu0
        %1569 = vmatpush.bf16.msra.mxu0 0
        %1570 = vmatpush.bf16.msra.mxu0 0
        %1571 = vmatpush.bf16.msra.mxu0 0
        %1572 = vmatpush.bf16.msra.mxu0 0
        %1573 = vmatpush.bf16.msra.mxu0 0
        %1574 = vmatpush.bf16.msra.mxu0 0
        %1575 = vmatpush.bf16.msra.mxu0 0
        %1576 = vmatpush.bf16.msra.mxu0 %v1438
        %1577 = vmatmul.bf16.gmra.mxu0 %v1450
        %v1578 = vpop.f32.mrf.mxu0
        %v1579 = vadd.f32 %v1381, %v1578
        %v1580 = vpop.f32.mrf.mxu0
        %v1581 = vadd.f32 %v1386, %v1580
        %1582 = vmatmul.bf16.gmra.mxu0 %v1453
        %v1583 = vpop.f32.mrf.mxu0
        %v1584 = vadd.f32 %v1391, %v1583
        %v1585 = vpop.f32.mrf.mxu0
        %v1586 = vadd.f32 %v1396, %v1585
        %1587 = vdwg.mxu0
        %1588 = vmatpush.bf16.msra.mxu0 0
        %1589 = vmatpush.bf16.msra.mxu0 0
        %1590 = vmatpush.bf16.msra.mxu0 0
        %1591 = vmatpush.bf16.msra.mxu0 0
        %1592 = vmatpush.bf16.msra.mxu0 0
        %1593 = vmatpush.bf16.msra.mxu0 0
        %1594 = vmatpush.bf16.msra.mxu0 0
        %1595 = vmatpush.bf16.msra.mxu0 %v1439
        %1596 = vmatmul.bf16.gmra.mxu0 %v1450
        %v1597 = vpop.f32.mrf.mxu0
        %v1598 = vadd.f32 %v1381, %v1597
        %v1599 = vpop.f32.mrf.mxu0
        %v1600 = vadd.f32 %v1386, %v1599
        %1601 = vmatmul.bf16.gmra.mxu0 %v1453
        %v1602 = vpop.f32.mrf.mxu0
        %v1603 = vadd.f32 %v1391, %v1602
        %v1604 = vpop.f32.mrf.mxu0
        %v1605 = vadd.f32 %v1396, %v1604
        %1606 = vdwg.mxu0
        %v1607 = vmax.f32 %v1465, 0.0
        %v1608 = vmax.f32 %v1484, 0.0
        %v1609 = vmax.f32 %v1503, 0.0
        %v1610 = vmax.f32 %v1522, 0.0
        %v1611 = vmax.f32 %v1541, 0.0
        %v1612 = vmax.f32 %v1560, 0.0
        %v1613 = vmax.f32 %v1579, 0.0
        %v1614 = vmax.f32 %v1598, 0.0
        %v1615 = vmax.f32 %v1467, 0.0
        %v1616 = vmax.f32 %v1486, 0.0
        %v1617 = vmax.f32 %v1505, 0.0
        %v1618 = vmax.f32 %v1524, 0.0
        %v1619 = vmax.f32 %v1543, 0.0
        %v1620 = vmax.f32 %v1562, 0.0
        %v1621 = vmax.f32 %v1581, 0.0
        %v1622 = vmax.f32 %v1600, 0.0
        %v1623 = vmax.f32 %v1470, 0.0
        %v1624 = vmax.f32 %v1489, 0.0
        %v1625 = vmax.f32 %v1508, 0.0
        %v1626 = vmax.f32 %v1527, 0.0
        %v1627 = vmax.f32 %v1546, 0.0
        %v1628 = vmax.f32 %v1565, 0.0
        %v1629 = vmax.f32 %v1584, 0.0
        %v1630 = vmax.f32 %v1603, 0.0
        %v1631 = vmax.f32 %v1472, 0.0
        %v1632 = vmax.f32 %v1491, 0.0
        %v1633 = vmax.f32 %v1510, 0.0
        %v1634 = vmax.f32 %v1529, 0.0
        %v1635 = vmax.f32 %v1548, 0.0
        %v1636 = vmax.f32 %v1567, 0.0
        %v1637 = vmax.f32 %v1586, 0.0
        %v1638 = vmax.f32 %v1605, 0.0
        %v1639 = vadd.f32 %v1607, %v1608
        %v1640 = vadd.f32 %v1639, %v1609
        %v1641 = vadd.f32 %v1640, %v1610
        %v1642 = vadd.f32 %v1641, %v1611
        %v1643 = vadd.f32 %v1642, %v1612
        %v1644 = vadd.f32 %v1643, %v1613
        %v1645 = vadd.f32 %v1644, %v1614
        %1646 = vadd.xlane.f32.xlu0 %v1645
        %v1647 = vpop.xlane.xlu0 %1646
        %v1648 = vadd.f32 %v1615, %v1616
        %v1649 = vadd.f32 %v1648, %v1617
        %v1650 = vadd.f32 %v1649, %v1618
        %v1651 = vadd.f32 %v1650, %v1619
        %v1652 = vadd.f32 %v1651, %v1620
        %v1653 = vadd.f32 %v1652, %v1621
        %v1654 = vadd.f32 %v1653, %v1622
        %1655 = vadd.xlane.f32.xlu0 %v1654
        %v1656 = vpop.xlane.xlu0 %1655
        %v1657 = vadd.f32 %v1623, %v1624
        %v1658 = vadd.f32 %v1657, %v1625
        %v1659 = vadd.f32 %v1658, %v1626
        %v1660 = vadd.f32 %v1659, %v1627
        %v1661 = vadd.f32 %v1660, %v1628
        %v1662 = vadd.f32 %v1661, %v1629
        %v1663 = vadd.f32 %v1662, %v1630
        %1664 = vadd.xlane.f32.xlu0 %v1663
        %v1665 = vpop.xlane.xlu0 %1664
        %v1666 = vadd.f32 %v1631, %v1632
        %v1667 = vadd.f32 %v1666, %v1633
        %v1668 = vadd.f32 %v1667, %v1634
        %v1669 = vadd.f32 %v1668, %v1635
        %v1670 = vadd.f32 %v1669, %v1636
        %v1671 = vadd.f32 %v1670, %v1637
        %v1672 = vadd.f32 %v1671, %v1638
        %1673 = vadd.xlane.f32.xlu0 %v1672
        %v1674 = vpop.xlane.xlu0 %1673
        %v1675 = vmul.f32 %v1607, %v1607
        %v1676 = vmul.f32 %v1608, %v1608
        %v1677 = vmul.f32 %v1609, %v1609
        %v1678 = vmul.f32 %v1610, %v1610
        %v1679 = vmul.f32 %v1611, %v1611
        %v1680 = vmul.f32 %v1612, %v1612
        %v1681 = vmul.f32 %v1613, %v1613
        %v1682 = vmul.f32 %v1614, %v1614
        %v1683 = vmul.f32 %v1615, %v1615
        %v1684 = vmul.f32 %v1616, %v1616
        %v1685 = vmul.f32 %v1617, %v1617
        %v1686 = vmul.f32 %v1618, %v1618
        %v1687 = vmul.f32 %v1619, %v1619
        %v1688 = vmul.f32 %v1620, %v1620
        %v1689 = vmul.f32 %v1621, %v1621
        %v1690 = vmul.f32 %v1622, %v1622
        %v1691 = vmul.f32 %v1623, %v1623
        %v1692 = vmul.f32 %v1624, %v1624
        %v1693 = vmul.f32 %v1625, %v1625
        %v1694 = vmul.f32 %v1626, %v1626
        %v1695 = vmul.f32 %v1627, %v1627
        %v1696 = vmul.f32 %v1628, %v1628
        %v1697 = vmul.f32 %v1629, %v1629
        %v1698 = vmul.f32 %v1630, %v1630
        %v1699 = vmul.f32 %v1631, %v1631
        %v1700 = vmul.f32 %v1632, %v1632
        %v1701 = vmul.f32 %v1633, %v1633
        %v1702 = vmul.f32 %v1634, %v1634
        %v1703 = vmul.f32 %v1635, %v1635
        %v1704 = vmul.f32 %v1636, %v1636
        %v1705 = vmul.f32 %v1637, %v1637
        %v1706 = vmul.f32 %v1638, %v1638
        %v1707 = vadd.f32 %v1675, %v1676
        %v1708 = vadd.f32 %v1707, %v1677
        %v1709 = vadd.f32 %v1708, %v1678
        %v1710 = vadd.f32 %v1709, %v1679
        %v1711 = vadd.f32 %v1710, %v1680
        %v1712 = vadd.f32 %v1711, %v1681
        %v1713 = vadd.f32 %v1712, %v1682
        %1714 = vadd.xlane.f32.xlu0 %v1713
        %v1715 = vpop.xlane.xlu0 %1714
        %v1716 = vadd.f32 %v1683, %v1684
        %v1717 = vadd.f32 %v1716, %v1685
        %v1718 = vadd.f32 %v1717, %v1686
        %v1719 = vadd.f32 %v1718, %v1687
        %v1720 = vadd.f32 %v1719, %v1688
        %v1721 = vadd.f32 %v1720, %v1689
        %v1722 = vadd.f32 %v1721, %v1690
        %1723 = vadd.xlane.f32.xlu0 %v1722
        %v1724 = vpop.xlane.xlu0 %1723
        %v1725 = vadd.f32 %v1691, %v1692
        %v1726 = vadd.f32 %v1725, %v1693
        %v1727 = vadd.f32 %v1726, %v1694
        %v1728 = vadd.f32 %v1727, %v1695
        %v1729 = vadd.f32 %v1728, %v1696
        %v1730 = vadd.f32 %v1729, %v1697
        %v1731 = vadd.f32 %v1730, %v1698
        %1732 = vadd.xlane.f32.xlu0 %v1731
        %v1733 = vpop.xlane.xlu0 %1732
        %v1734 = vadd.f32 %v1699, %v1700
        %v1735 = vadd.f32 %v1734, %v1701
        %v1736 = vadd.f32 %v1735, %v1702
        %v1737 = vadd.f32 %v1736, %v1703
        %v1738 = vadd.f32 %v1737, %v1704
        %v1739 = vadd.f32 %v1738, %v1705
        %v1740 = vadd.f32 %v1739, %v1706
        %1741 = vadd.xlane.f32.xlu0 %v1740
        %v1742 = vpop.xlane.xlu0 %1741
        %v1748 = vunpack.c.l.s4 269488144
        %v1749 = vunpack.c.0.s8 %v1748
        %v1750 = vperm.slane %v1647, %v1749
        %v1752 = vunpack.c.l.s4 842150450
        %v1753 = vunpack.c.0.s8 %v1752
        %v1754 = vperm.slane %v1647, %v1753
        %v1756 = vunpack.c.l.s4 1414812756
        %v1757 = vunpack.c.0.s8 %v1756
        %v1758 = vperm.slane %v1647, %v1757
        %v1760 = vunpack.c.l.s4 1987475062
        %v1761 = vunpack.c.0.s8 %v1760
        %v1762 = vperm.slane %v1647, %v1761
        %v1764 = vunpack.c.l.s4 269488144
        %v1765 = vunpack.c.0.s8 %v1764
        %v1766 = vperm.slane %v1656, %v1765
        %v1768 = vunpack.c.l.s4 842150450
        %v1769 = vunpack.c.0.s8 %v1768
        %v1770 = vperm.slane %v1656, %v1769
        %v1772 = vunpack.c.l.s4 1414812756
        %v1773 = vunpack.c.0.s8 %v1772
        %v1774 = vperm.slane %v1656, %v1773
        %v1776 = vunpack.c.l.s4 1987475062
        %v1777 = vunpack.c.0.s8 %v1776
        %v1778 = vperm.slane %v1656, %v1777
        %v1780 = vunpack.c.l.s4 269488144
        %v1781 = vunpack.c.0.s8 %v1780
        %v1782 = vperm.slane %v1665, %v1781
        %v1784 = vunpack.c.l.s4 842150450
        %v1785 = vunpack.c.0.s8 %v1784
        %v1786 = vperm.slane %v1665, %v1785
        %v1788 = vunpack.c.l.s4 1414812756
        %v1789 = vunpack.c.0.s8 %v1788
        %v1790 = vperm.slane %v1665, %v1789
        %v1792 = vunpack.c.l.s4 1987475062
        %v1793 = vunpack.c.0.s8 %v1792
        %v1794 = vperm.slane %v1665, %v1793
        %v1796 = vunpack.c.l.s4 269488144
        %v1797 = vunpack.c.0.s8 %v1796
        %v1798 = vperm.slane %v1674, %v1797
        %v1800 = vunpack.c.l.s4 842150450
        %v1801 = vunpack.c.0.s8 %v1800
        %v1802 = vperm.slane %v1674, %v1801
        %v1804 = vunpack.c.l.s4 1414812756
        %v1805 = vunpack.c.0.s8 %v1804
        %v1806 = vperm.slane %v1674, %v1805
        %v1808 = vunpack.c.l.s4 1987475062
        %v1809 = vunpack.c.0.s8 %v1808
        %v1810 = vperm.slane %v1674, %v1809
        %v1827 = vsel %vm658, %v1750, 0.0
        %v1828 = vrot.slane %v1827, 4
        %v1829 = vadd.f32 %v1827, %v1828
        %v1830 = vrot.slane %v1829, 2
        %v1831 = vadd.f32 %v1829, %v1830
        %v1832 = vrot.slane %v1831, 1
        %v1833 = vadd.f32 %v1831, %v1832
        %v1834 = vsel %vm658, %v1754, 0.0
        %v1835 = vrot.slane %v1834, 4
        %v1836 = vadd.f32 %v1834, %v1835
        %v1837 = vrot.slane %v1836, 2
        %v1838 = vadd.f32 %v1836, %v1837
        %v1839 = vrot.slane %v1838, 1
        %v1840 = vadd.f32 %v1838, %v1839
        %v1841 = vsel %vm658, %v1758, 0.0
        %v1842 = vrot.slane %v1841, 4
        %v1843 = vadd.f32 %v1841, %v1842
        %v1844 = vrot.slane %v1843, 2
        %v1845 = vadd.f32 %v1843, %v1844
        %v1846 = vrot.slane %v1845, 1
        %v1847 = vadd.f32 %v1845, %v1846
        %v1848 = vsel %vm658, %v1762, 0.0
        %v1849 = vrot.slane %v1848, 4
        %v1850 = vadd.f32 %v1848, %v1849
        %v1851 = vrot.slane %v1850, 2
        %v1852 = vadd.f32 %v1850, %v1851
        %v1853 = vrot.slane %v1852, 1
        %v1854 = vadd.f32 %v1852, %v1853
        %v1855 = vsel %vm658, %v1766, 0.0
        %v1856 = vrot.slane %v1855, 4
        %v1857 = vadd.f32 %v1855, %v1856
        %v1858 = vrot.slane %v1857, 2
        %v1859 = vadd.f32 %v1857, %v1858
        %v1860 = vrot.slane %v1859, 1
        %v1861 = vadd.f32 %v1859, %v1860
        %v1862 = vsel %vm658, %v1770, 0.0
        %v1863 = vrot.slane %v1862, 4
        %v1864 = vadd.f32 %v1862, %v1863
        %v1865 = vrot.slane %v1864, 2
        %v1866 = vadd.f32 %v1864, %v1865
        %v1867 = vrot.slane %v1866, 1
        %v1868 = vadd.f32 %v1866, %v1867
        %v1869 = vsel %vm658, %v1774, 0.0
        %v1870 = vrot.slane %v1869, 4
        %v1871 = vadd.f32 %v1869, %v1870
        %v1872 = vrot.slane %v1871, 2
        %v1873 = vadd.f32 %v1871, %v1872
        %v1874 = vrot.slane %v1873, 1
        %v1875 = vadd.f32 %v1873, %v1874
        %v1876 = vsel %vm658, %v1778, 0.0
        %v1877 = vrot.slane %v1876, 4
        %v1878 = vadd.f32 %v1876, %v1877
        %v1879 = vrot.slane %v1878, 2
        %v1880 = vadd.f32 %v1878, %v1879
        %v1881 = vrot.slane %v1880, 1
        %v1882 = vadd.f32 %v1880, %v1881
        %v1883 = vsel %vm658, %v1782, 0.0
        %v1884 = vrot.slane %v1883, 4
        %v1885 = vadd.f32 %v1883, %v1884
        %v1886 = vrot.slane %v1885, 2
        %v1887 = vadd.f32 %v1885, %v1886
        %v1888 = vrot.slane %v1887, 1
        %v1889 = vadd.f32 %v1887, %v1888
        %v1890 = vsel %vm658, %v1786, 0.0
        %v1891 = vrot.slane %v1890, 4
        %v1892 = vadd.f32 %v1890, %v1891
        %v1893 = vrot.slane %v1892, 2
        %v1894 = vadd.f32 %v1892, %v1893
        %v1895 = vrot.slane %v1894, 1
        %v1896 = vadd.f32 %v1894, %v1895
        %v1897 = vsel %vm658, %v1790, 0.0
        %v1898 = vrot.slane %v1897, 4
        %v1899 = vadd.f32 %v1897, %v1898
        %v1900 = vrot.slane %v1899, 2
        %v1901 = vadd.f32 %v1899, %v1900
        %v1902 = vrot.slane %v1901, 1
        %v1903 = vadd.f32 %v1901, %v1902
        %v1904 = vsel %vm658, %v1794, 0.0
        %v1905 = vrot.slane %v1904, 4
        %v1906 = vadd.f32 %v1904, %v1905
        %v1907 = vrot.slane %v1906, 2
        %v1908 = vadd.f32 %v1906, %v1907
        %v1909 = vrot.slane %v1908, 1
        %v1910 = vadd.f32 %v1908, %v1909
        %v1911 = vsel %vm658, %v1798, 0.0
        %v1912 = vrot.slane %v1911, 4
        %v1913 = vadd.f32 %v1911, %v1912
        %v1914 = vrot.slane %v1913, 2
        %v1915 = vadd.f32 %v1913, %v1914
        %v1916 = vrot.slane %v1915, 1
        %v1917 = vadd.f32 %v1915, %v1916
        %v1918 = vsel %vm658, %v1802, 0.0
        %v1919 = vrot.slane %v1918, 4
        %v1920 = vadd.f32 %v1918, %v1919
        %v1921 = vrot.slane %v1920, 2
        %v1922 = vadd.f32 %v1920, %v1921
        %v1923 = vrot.slane %v1922, 1
        %v1924 = vadd.f32 %v1922, %v1923
        %v1925 = vsel %vm658, %v1806, 0.0
        %v1926 = vrot.slane %v1925, 4
        %v1927 = vadd.f32 %v1925, %v1926
        %v1928 = vrot.slane %v1927, 2
        %v1929 = vadd.f32 %v1927, %v1928
        %v1930 = vrot.slane %v1929, 1
        %v1931 = vadd.f32 %v1929, %v1930
        %v1932 = vsel %vm658, %v1810, 0.0
        %v1933 = vrot.slane %v1932, 4
        %v1934 = vadd.f32 %v1932, %v1933
        %v1935 = vrot.slane %v1934, 2
        %v1936 = vadd.f32 %v1934, %v1935
        %v1937 = vrot.slane %v1936, 1
        %v1938 = vadd.f32 %v1936, %v1937
        %v1939 = vrcp.pop 2048.0
        %v1940 = vmul.f32 2048.0, %v1939
        %v1941 = vsub.f32 1.0, %v1940
        %v1942 = vmul.f32 %v1939, %v1941
        %v1943 = vadd.f32 %v1939, %v1942
        %vm1944 = vweird.f32 %v1939
        %v1945 = vsel %vm1944, %v1939, %v1943
        %v1946 = vmul.f32 %v1833, %v1945
        %v1947 = vmul.f32 %v1840, %v1945
        %v1948 = vmul.f32 %v1847, %v1945
        %v1949 = vmul.f32 %v1854, %v1945
        %v1950 = vmul.f32 %v1861, %v1945
        %v1951 = vmul.f32 %v1868, %v1945
        %v1952 = vmul.f32 %v1875, %v1945
        %v1953 = vmul.f32 %v1882, %v1945
        %v1954 = vmul.f32 %v1889, %v1945
        %v1955 = vmul.f32 %v1896, %v1945
        %v1956 = vmul.f32 %v1903, %v1945
        %v1957 = vmul.f32 %v1910, %v1945
        %v1958 = vmul.f32 %v1917, %v1945
        %v1959 = vmul.f32 %v1924, %v1945
        %v1960 = vmul.f32 %v1931, %v1945
        %v1961 = vmul.f32 %v1938, %v1945
        %v1967 = vunpack.c.l.s4 269488144
        %v1968 = vunpack.c.0.s8 %v1967
        %v1969 = vperm.slane %v1715, %v1968
        %v1971 = vunpack.c.l.s4 842150450
        %v1972 = vunpack.c.0.s8 %v1971
        %v1973 = vperm.slane %v1715, %v1972
        %v1975 = vunpack.c.l.s4 1414812756
        %v1976 = vunpack.c.0.s8 %v1975
        %v1977 = vperm.slane %v1715, %v1976
        %v1979 = vunpack.c.l.s4 1987475062
        %v1980 = vunpack.c.0.s8 %v1979
        %v1981 = vperm.slane %v1715, %v1980
        %v1983 = vunpack.c.l.s4 269488144
        %v1984 = vunpack.c.0.s8 %v1983
        %v1985 = vperm.slane %v1724, %v1984
        %v1987 = vunpack.c.l.s4 842150450
        %v1988 = vunpack.c.0.s8 %v1987
        %v1989 = vperm.slane %v1724, %v1988
        %v1991 = vunpack.c.l.s4 1414812756
        %v1992 = vunpack.c.0.s8 %v1991
        %v1993 = vperm.slane %v1724, %v1992
        %v1995 = vunpack.c.l.s4 1987475062
        %v1996 = vunpack.c.0.s8 %v1995
        %v1997 = vperm.slane %v1724, %v1996
        %v1999 = vunpack.c.l.s4 269488144
        %v2000 = vunpack.c.0.s8 %v1999
        %v2001 = vperm.slane %v1733, %v2000
        %v2003 = vunpack.c.l.s4 842150450
        %v2004 = vunpack.c.0.s8 %v2003
        %v2005 = vperm.slane %v1733, %v2004
        %v2007 = vunpack.c.l.s4 1414812756
        %v2008 = vunpack.c.0.s8 %v2007
        %v2009 = vperm.slane %v1733, %v2008
        %v2011 = vunpack.c.l.s4 1987475062
        %v2012 = vunpack.c.0.s8 %v2011
        %v2013 = vperm.slane %v1733, %v2012
        %v2015 = vunpack.c.l.s4 269488144
        %v2016 = vunpack.c.0.s8 %v2015
        %v2017 = vperm.slane %v1742, %v2016
        %v2019 = vunpack.c.l.s4 842150450
        %v2020 = vunpack.c.0.s8 %v2019
        %v2021 = vperm.slane %v1742, %v2020
        %v2023 = vunpack.c.l.s4 1414812756
        %v2024 = vunpack.c.0.s8 %v2023
        %v2025 = vperm.slane %v1742, %v2024
        %v2027 = vunpack.c.l.s4 1987475062
        %v2028 = vunpack.c.0.s8 %v2027
        %v2029 = vperm.slane %v1742, %v2028
        %v2046 = vsel %vm658, %v1969, 0.0
        %v2047 = vrot.slane %v2046, 4
        %v2048 = vadd.f32 %v2046, %v2047
        %v2049 = vrot.slane %v2048, 2
        %v2050 = vadd.f32 %v2048, %v2049
        %v2051 = vrot.slane %v2050, 1
        %v2052 = vadd.f32 %v2050, %v2051
        %v2053 = vsel %vm658, %v1973, 0.0
        %v2054 = vrot.slane %v2053, 4
        %v2055 = vadd.f32 %v2053, %v2054
        %v2056 = vrot.slane %v2055, 2
        %v2057 = vadd.f32 %v2055, %v2056
        %v2058 = vrot.slane %v2057, 1
        %v2059 = vadd.f32 %v2057, %v2058
        %v2060 = vsel %vm658, %v1977, 0.0
        %v2061 = vrot.slane %v2060, 4
        %v2062 = vadd.f32 %v2060, %v2061
        %v2063 = vrot.slane %v2062, 2
        %v2064 = vadd.f32 %v2062, %v2063
        %v2065 = vrot.slane %v2064, 1
        %v2066 = vadd.f32 %v2064, %v2065
        %v2067 = vsel %vm658, %v1981, 0.0
        %v2068 = vrot.slane %v2067, 4
        %v2069 = vadd.f32 %v2067, %v2068
        %v2070 = vrot.slane %v2069, 2
        %v2071 = vadd.f32 %v2069, %v2070
        %v2072 = vrot.slane %v2071, 1
        %v2073 = vadd.f32 %v2071, %v2072
        %v2074 = vsel %vm658, %v1985, 0.0
        %v2075 = vrot.slane %v2074, 4
        %v2076 = vadd.f32 %v2074, %v2075
        %v2077 = vrot.slane %v2076, 2
        %v2078 = vadd.f32 %v2076, %v2077
        %v2079 = vrot.slane %v2078, 1
        %v2080 = vadd.f32 %v2078, %v2079
        %v2081 = vsel %vm658, %v1989, 0.0
        %v2082 = vrot.slane %v2081, 4
        %v2083 = vadd.f32 %v2081, %v2082
        %v2084 = vrot.slane %v2083, 2
        %v2085 = vadd.f32 %v2083, %v2084
        %v2086 = vrot.slane %v2085, 1
        %v2087 = vadd.f32 %v2085, %v2086
        %v2088 = vsel %vm658, %v1993, 0.0
        %v2089 = vrot.slane %v2088, 4
        %v2090 = vadd.f32 %v2088, %v2089
        %v2091 = vrot.slane %v2090, 2
        %v2092 = vadd.f32 %v2090, %v2091
        %v2093 = vrot.slane %v2092, 1
        %v2094 = vadd.f32 %v2092, %v2093
        %v2095 = vsel %vm658, %v1997, 0.0
        %v2096 = vrot.slane %v2095, 4
        %v2097 = vadd.f32 %v2095, %v2096
        %v2098 = vrot.slane %v2097, 2
        %v2099 = vadd.f32 %v2097, %v2098
        %v2100 = vrot.slane %v2099, 1
        %v2101 = vadd.f32 %v2099, %v2100
        %v2102 = vsel %vm658, %v2001, 0.0
        %v2103 = vrot.slane %v2102, 4
        %v2104 = vadd.f32 %v2102, %v2103
        %v2105 = vrot.slane %v2104, 2
        %v2106 = vadd.f32 %v2104, %v2105
        %v2107 = vrot.slane %v2106, 1
        %v2108 = vadd.f32 %v2106, %v2107
        %v2109 = vsel %vm658, %v2005, 0.0
        %v2110 = vrot.slane %v2109, 4
        %v2111 = vadd.f32 %v2109, %v2110
        %v2112 = vrot.slane %v2111, 2
        %v2113 = vadd.f32 %v2111, %v2112
        %v2114 = vrot.slane %v2113, 1
        %v2115 = vadd.f32 %v2113, %v2114
        %v2116 = vsel %vm658, %v2009, 0.0
        %v2117 = vrot.slane %v2116, 4
        %v2118 = vadd.f32 %v2116, %v2117
        %v2119 = vrot.slane %v2118, 2
        %v2120 = vadd.f32 %v2118, %v2119
        %v2121 = vrot.slane %v2120, 1
        %v2122 = vadd.f32 %v2120, %v2121
        %v2123 = vsel %vm658, %v2013, 0.0
        %v2124 = vrot.slane %v2123, 4
        %v2125 = vadd.f32 %v2123, %v2124
        %v2126 = vrot.slane %v2125, 2
        %v2127 = vadd.f32 %v2125, %v2126
        %v2128 = vrot.slane %v2127, 1
        %v2129 = vadd.f32 %v2127, %v2128
        %v2130 = vsel %vm658, %v2017, 0.0
        %v2131 = vrot.slane %v2130, 4
        %v2132 = vadd.f32 %v2130, %v2131
        %v2133 = vrot.slane %v2132, 2
        %v2134 = vadd.f32 %v2132, %v2133
        %v2135 = vrot.slane %v2134, 1
        %v2136 = vadd.f32 %v2134, %v2135
        %v2137 = vsel %vm658, %v2021, 0.0
        %v2138 = vrot.slane %v2137, 4
        %v2139 = vadd.f32 %v2137, %v2138
        %v2140 = vrot.slane %v2139, 2
        %v2141 = vadd.f32 %v2139, %v2140
        %v2142 = vrot.slane %v2141, 1
        %v2143 = vadd.f32 %v2141, %v2142
        %v2144 = vsel %vm658, %v2025, 0.0
        %v2145 = vrot.slane %v2144, 4
        %v2146 = vadd.f32 %v2144, %v2145
        %v2147 = vrot.slane %v2146, 2
        %v2148 = vadd.f32 %v2146, %v2147
        %v2149 = vrot.slane %v2148, 1
        %v2150 = vadd.f32 %v2148, %v2149
        %v2151 = vsel %vm658, %v2029, 0.0
        %v2152 = vrot.slane %v2151, 4
        %v2153 = vadd.f32 %v2151, %v2152
        %v2154 = vrot.slane %v2153, 2
        %v2155 = vadd.f32 %v2153, %v2154
        %v2156 = vrot.slane %v2155, 1
        %v2157 = vadd.f32 %v2155, %v2156
        %v2158 = vmul.f32 %v2052, %v1945
        %v2159 = vmul.f32 %v2059, %v1945
        %v2160 = vmul.f32 %v2066, %v1945
        %v2161 = vmul.f32 %v2073, %v1945
        %v2162 = vmul.f32 %v2080, %v1945
        %v2163 = vmul.f32 %v2087, %v1945
        %v2164 = vmul.f32 %v2094, %v1945
        %v2165 = vmul.f32 %v2101, %v1945
        %v2166 = vmul.f32 %v2108, %v1945
        %v2167 = vmul.f32 %v2115, %v1945
        %v2168 = vmul.f32 %v2122, %v1945
        %v2169 = vmul.f32 %v2129, %v1945
        %v2170 = vmul.f32 %v2136, %v1945
        %v2171 = vmul.f32 %v2143, %v1945
        %v2172 = vmul.f32 %v2150, %v1945
        %v2173 = vmul.f32 %v2157, %v1945
        %v2174 = vmul.f32 %v1946, %v1946
        %v2175 = vmul.f32 %v1947, %v1947
        %v2176 = vmul.f32 %v1948, %v1948
        %v2177 = vmul.f32 %v1949, %v1949
        %v2178 = vmul.f32 %v1950, %v1950
        %v2179 = vmul.f32 %v1951, %v1951
        %v2180 = vmul.f32 %v1952, %v1952
        %v2181 = vmul.f32 %v1953, %v1953
        %v2182 = vmul.f32 %v1954, %v1954
        %v2183 = vmul.f32 %v1955, %v1955
        %v2184 = vmul.f32 %v1956, %v1956
        %v2185 = vmul.f32 %v1957, %v1957
        %v2186 = vmul.f32 %v1958, %v1958
        %v2187 = vmul.f32 %v1959, %v1959
        %v2188 = vmul.f32 %v1960, %v1960
        %v2189 = vmul.f32 %v1961, %v1961
        %v2190 = vsub.f32 %v2158, %v2174
        %v2191 = vsub.f32 %v2159, %v2175
        %v2192 = vsub.f32 %v2160, %v2176
        %v2193 = vsub.f32 %v2161, %v2177
        %v2194 = vsub.f32 %v2162, %v2178
        %v2195 = vsub.f32 %v2163, %v2179
        %v2196 = vsub.f32 %v2164, %v2180
        %v2197 = vsub.f32 %v2165, %v2181
        %v2198 = vsub.f32 %v2166, %v2182
        %v2199 = vsub.f32 %v2167, %v2183
        %v2200 = vsub.f32 %v2168, %v2184
        %v2201 = vsub.f32 %v2169, %v2185
        %v2202 = vsub.f32 %v2170, %v2186
        %v2203 = vsub.f32 %v2171, %v2187
        %v2204 = vsub.f32 %v2172, %v2188
        %v2205 = vsub.f32 %v2173, %v2189
        %v2206 = vmax.f32 %v2190, 0.0
        %v2207 = vmax.f32 %v2191, 0.0
        %v2208 = vmax.f32 %v2192, 0.0
        %v2209 = vmax.f32 %v2193, 0.0
        %v2210 = vmax.f32 %v2194, 0.0
        %v2211 = vmax.f32 %v2195, 0.0
        %v2212 = vmax.f32 %v2196, 0.0
        %v2213 = vmax.f32 %v2197, 0.0
        %v2214 = vmax.f32 %v2198, 0.0
        %v2215 = vmax.f32 %v2199, 0.0
        %v2216 = vmax.f32 %v2200, 0.0
        %v2217 = vmax.f32 %v2201, 0.0
        %v2218 = vmax.f32 %v2202, 0.0
        %v2219 = vmax.f32 %v2203, 0.0
        %v2220 = vmax.f32 %v2204, 0.0
        %v2221 = vmax.f32 %v2205, 0.0
        %2238 = vst [vmem:[#allocation1] ss:$4 sm:$0xff] %v1946
        %s2239 = scalar_lea.vmem [#allocation1], 1
        %2240 = vst [vmem:[%s2239] ss:$4 sm:$0xff] %v1947
        %s2241 = scalar_lea.vmem [#allocation1], 2
        %2242 = vst [vmem:[%s2241] ss:$4 sm:$0xff] %v1948
        %s2243 = scalar_lea.vmem [#allocation1], 3
        %2244 = vst [vmem:[%s2243] ss:$4 sm:$0xff] %v1949
        %s2245 = scalar_lea.vmem [#allocation1], 32
        %2246 = vst [vmem:[%s2245] ss:$4 sm:$0xff] %v1946
        %s2247 = scalar_lea.vmem [#allocation1], 33
        %2248 = vst [vmem:[%s2247] ss:$4 sm:$0xff] %v1947
        %s2249 = scalar_lea.vmem [#allocation1], 34
        %2250 = vst [vmem:[%s2249] ss:$4 sm:$0xff] %v1948
        %s2251 = scalar_lea.vmem [#allocation1], 35
        %2252 = vst [vmem:[%s2251] ss:$4 sm:$0xff] %v1949
        %v2253 = vld.sshfl [vmem:[#allocation1] sm:$0xff pattern:$0x73625140]
        %v2254 = vld.sshfl [vmem:[#allocation1 + $0x8] sm:$0xff pattern:$0x73625140]
        %v2255 = vld.sshfl [vmem:[#allocation1 + $0x10] sm:$0xff pattern:$0x73625140]
        %v2256 = vld.sshfl [vmem:[#allocation1 + $0x18] sm:$0xff pattern:$0x73625140]
        %v2257 = vld.sshfl [vmem:[#allocation1 + $0x20] sm:$0xff pattern:$0x73625140]
        %v2258 = vld.sshfl [vmem:[#allocation1 + $0x28] sm:$0xff pattern:$0x73625140]
        %v2259 = vld.sshfl [vmem:[#allocation1 + $0x30] sm:$0xff pattern:$0x73625140]
        %v2260 = vld.sshfl [vmem:[#allocation1 + $0x38] sm:$0xff pattern:$0x73625140]
        %2261 = vst [vmem:[#allocation1] ss:$4 sm:$0xff] %v1950
        %2262 = vst [vmem:[%s2239] ss:$4 sm:$0xff] %v1951
        %2263 = vst [vmem:[%s2241] ss:$4 sm:$0xff] %v1952
        %2264 = vst [vmem:[%s2243] ss:$4 sm:$0xff] %v1953
        %2265 = vst [vmem:[%s2245] ss:$4 sm:$0xff] %v1950
        %2266 = vst [vmem:[%s2247] ss:$4 sm:$0xff] %v1951
        %2267 = vst [vmem:[%s2249] ss:$4 sm:$0xff] %v1952
        %2268 = vst [vmem:[%s2251] ss:$4 sm:$0xff] %v1953
        %v2269 = vld.sshfl [vmem:[#allocation1] sm:$0xff pattern:$0x73625140]
        %v2270 = vld.sshfl [vmem:[#allocation1 + $0x8] sm:$0xff pattern:$0x73625140]
        %v2271 = vld.sshfl [vmem:[#allocation1 + $0x10] sm:$0xff pattern:$0x73625140]
        %v2272 = vld.sshfl [vmem:[#allocation1 + $0x18] sm:$0xff pattern:$0x73625140]
        %v2273 = vld.sshfl [vmem:[#allocation1 + $0x20] sm:$0xff pattern:$0x73625140]
        %v2274 = vld.sshfl [vmem:[#allocation1 + $0x28] sm:$0xff pattern:$0x73625140]
        %v2275 = vld.sshfl [vmem:[#allocation1 + $0x30] sm:$0xff pattern:$0x73625140]
        %v2276 = vld.sshfl [vmem:[#allocation1 + $0x38] sm:$0xff pattern:$0x73625140]
        %2277 = vst [vmem:[#allocation1] ss:$4 sm:$0xff] %v1954
        %2278 = vst [vmem:[%s2239] ss:$4 sm:$0xff] %v1955
        %2279 = vst [vmem:[%s2241] ss:$4 sm:$0xff] %v1956
        %2280 = vst [vmem:[%s2243] ss:$4 sm:$0xff] %v1957
        %2281 = vst [vmem:[%s2245] ss:$4 sm:$0xff] %v1954
        %2282 = vst [vmem:[%s2247] ss:$4 sm:$0xff] %v1955
        %2283 = vst [vmem:[%s2249] ss:$4 sm:$0xff] %v1956
        %2284 = vst [vmem:[%s2251] ss:$4 sm:$0xff] %v1957
        %v2285 = vld.sshfl [vmem:[#allocation1] sm:$0xff pattern:$0x73625140]
        %v2286 = vld.sshfl [vmem:[#allocation1 + $0x8] sm:$0xff pattern:$0x73625140]
        %v2287 = vld.sshfl [vmem:[#allocation1 + $0x10] sm:$0xff pattern:$0x73625140]
        %v2288 = vld.sshfl [vmem:[#allocation1 + $0x18] sm:$0xff pattern:$0x73625140]
        %v2289 = vld.sshfl [vmem:[#allocation1 + $0x20] sm:$0xff pattern:$0x73625140]
        %v2290 = vld.sshfl [vmem:[#allocation1 + $0x28] sm:$0xff pattern:$0x73625140]
        %v2291 = vld.sshfl [vmem:[#allocation1 + $0x30] sm:$0xff pattern:$0x73625140]
        %v2292 = vld.sshfl [vmem:[#allocation1 + $0x38] sm:$0xff pattern:$0x73625140]
        %2293 = vst [vmem:[#allocation1] ss:$4 sm:$0xff] %v1958
        %2294 = vst [vmem:[%s2239] ss:$4 sm:$0xff] %v1959
        %2295 = vst [vmem:[%s2241] ss:$4 sm:$0xff] %v1960
        %2296 = vst [vmem:[%s2243] ss:$4 sm:$0xff] %v1961
        %2297 = vst [vmem:[%s2245] ss:$4 sm:$0xff] %v1958
        %2298 = vst [vmem:[%s2247] ss:$4 sm:$0xff] %v1959
        %2299 = vst [vmem:[%s2249] ss:$4 sm:$0xff] %v1960
        %2300 = vst [vmem:[%s2251] ss:$4 sm:$0xff] %v1961
        %v2301 = vld.sshfl [vmem:[#allocation1] sm:$0xff pattern:$0x73625140]
        %v2302 = vld.sshfl [vmem:[#allocation1 + $0x8] sm:$0xff pattern:$0x73625140]
        %v2303 = vld.sshfl [vmem:[#allocation1 + $0x10] sm:$0xff pattern:$0x73625140]
        %v2304 = vld.sshfl [vmem:[#allocation1 + $0x18] sm:$0xff pattern:$0x73625140]
        %v2305 = vld.sshfl [vmem:[#allocation1 + $0x20] sm:$0xff pattern:$0x73625140]
        %v2306 = vld.sshfl [vmem:[#allocation1 + $0x28] sm:$0xff pattern:$0x73625140]
        %v2307 = vld.sshfl [vmem:[#allocation1 + $0x30] sm:$0xff pattern:$0x73625140]
        %v2308 = vld.sshfl [vmem:[#allocation1 + $0x38] sm:$0xff pattern:$0x73625140]
        %v2341 = vsub.f32 %v1607, %v2253
        %v2342 = vsub.f32 %v1608, %v2254
        %v2343 = vsub.f32 %v1609, %v2255
        %v2344 = vsub.f32 %v1610, %v2256
        %v2345 = vsub.f32 %v1611, %v2257
        %v2346 = vsub.f32 %v1612, %v2258
        %v2347 = vsub.f32 %v1613, %v2259
        %v2348 = vsub.f32 %v1614, %v2260
        %v2349 = vsub.f32 %v1615, %v2269
        %v2350 = vsub.f32 %v1616, %v2270
        %v2351 = vsub.f32 %v1617, %v2271
        %v2352 = vsub.f32 %v1618, %v2272
        %v2353 = vsub.f32 %v1619, %v2273
        %v2354 = vsub.f32 %v1620, %v2274
        %v2355 = vsub.f32 %v1621, %v2275
        %v2356 = vsub.f32 %v1622, %v2276
        %v2357 = vsub.f32 %v1623, %v2285
        %v2358 = vsub.f32 %v1624, %v2286
        %v2359 = vsub.f32 %v1625, %v2287
        %v2360 = vsub.f32 %v1626, %v2288
        %v2361 = vsub.f32 %v1627, %v2289
        %v2362 = vsub.f32 %v1628, %v2290
        %v2363 = vsub.f32 %v1629, %v2291
        %v2364 = vsub.f32 %v1630, %v2292
        %v2365 = vsub.f32 %v1631, %v2301
        %v2366 = vsub.f32 %v1632, %v2302
        %v2367 = vsub.f32 %v1633, %v2303
        %v2368 = vsub.f32 %v1634, %v2304
        %v2369 = vsub.f32 %v1635, %v2305
        %v2370 = vsub.f32 %v1636, %v2306
        %v2371 = vsub.f32 %v1637, %v2307
        %v2372 = vsub.f32 %v1638, %v2308
        %v2373 = vadd.f32 %v2206, 1e-05
        %v2374 = vadd.f32 %v2207, 1e-05
        %v2375 = vadd.f32 %v2208, 1e-05
        %v2376 = vadd.f32 %v2209, 1e-05
        %v2377 = vadd.f32 %v2210, 1e-05
        %v2378 = vadd.f32 %v2211, 1e-05
        %v2379 = vadd.f32 %v2212, 1e-05
        %v2380 = vadd.f32 %v2213, 1e-05
        %v2381 = vadd.f32 %v2214, 1e-05
        %v2382 = vadd.f32 %v2215, 1e-05
        %v2383 = vadd.f32 %v2216, 1e-05
        %v2384 = vadd.f32 %v2217, 1e-05
        %v2385 = vadd.f32 %v2218, 1e-05
        %v2386 = vadd.f32 %v2219, 1e-05
        %v2387 = vadd.f32 %v2220, 1e-05
        %v2388 = vadd.f32 %v2221, 1e-05
        %v2389 = vrsqrt.pop %v2373
        %v2390 = vmul.f32 %v2389, %v2373
        %v2391 = vmul.f32 %v2390, %v2389
        %v2392 = vmul.f32 0.5, %v2391
        %v2393 = vsub.f32 1.5, %v2392
        %v2394 = vmul.f32 %v2389, %v2393
        %vm2395 = vweird.f32 %v2373
        %vm2396 = vweird.f32 %v2389
        %vm2397 = vmor %vm2395, %vm2396
        %v2398 = vsel %vm2397, %v2389, %v2394
        %v2399 = vrsqrt.pop %v2374
        %v2400 = vmul.f32 %v2399, %v2374
        %v2401 = vmul.f32 %v2400, %v2399
        %v2402 = vmul.f32 0.5, %v2401
        %v2403 = vsub.f32 1.5, %v2402
        %v2404 = vmul.f32 %v2399, %v2403
        %vm2405 = vweird.f32 %v2374
        %vm2406 = vweird.f32 %v2399
        %vm2407 = vmor %vm2405, %vm2406
        %v2408 = vsel %vm2407, %v2399, %v2404
        %v2409 = vrsqrt.pop %v2375
        %v2410 = vmul.f32 %v2409, %v2375
        %v2411 = vmul.f32 %v2410, %v2409
        %v2412 = vmul.f32 0.5, %v2411
        %v2413 = vsub.f32 1.5, %v2412
        %v2414 = vmul.f32 %v2409, %v2413
        %vm2415 = vweird.f32 %v2375
        %vm2416 = vweird.f32 %v2409
        %vm2417 = vmor %vm2415, %vm2416
        %v2418 = vsel %vm2417, %v2409, %v2414
        %v2419 = vrsqrt.pop %v2376
        %v2420 = vmul.f32 %v2419, %v2376
        %v2421 = vmul.f32 %v2420, %v2419
        %v2422 = vmul.f32 0.5, %v2421
        %v2423 = vsub.f32 1.5, %v2422
        %v2424 = vmul.f32 %v2419, %v2423
        %vm2425 = vweird.f32 %v2376
        %vm2426 = vweird.f32 %v2419
        %vm2427 = vmor %vm2425, %vm2426
        %v2428 = vsel %vm2427, %v2419, %v2424
        %v2429 = vrsqrt.pop %v2377
        %v2430 = vmul.f32 %v2429, %v2377
        %v2431 = vmul.f32 %v2430, %v2429
        %v2432 = vmul.f32 0.5, %v2431
        %v2433 = vsub.f32 1.5, %v2432
        %v2434 = vmul.f32 %v2429, %v2433
        %vm2435 = vweird.f32 %v2377
        %vm2436 = vweird.f32 %v2429
        %vm2437 = vmor %vm2435, %vm2436
        %v2438 = vsel %vm2437, %v2429, %v2434
        %v2439 = vrsqrt.pop %v2378
        %v2440 = vmul.f32 %v2439, %v2378
        %v2441 = vmul.f32 %v2440, %v2439
        %v2442 = vmul.f32 0.5, %v2441
        %v2443 = vsub.f32 1.5, %v2442
        %v2444 = vmul.f32 %v2439, %v2443
        %vm2445 = vweird.f32 %v2378
        %vm2446 = vweird.f32 %v2439
        %vm2447 = vmor %vm2445, %vm2446
        %v2448 = vsel %vm2447, %v2439, %v2444
        %v2449 = vrsqrt.pop %v2379
        %v2450 = vmul.f32 %v2449, %v2379
        %v2451 = vmul.f32 %v2450, %v2449
        %v2452 = vmul.f32 0.5, %v2451
        %v2453 = vsub.f32 1.5, %v2452
        %v2454 = vmul.f32 %v2449, %v2453
        %vm2455 = vweird.f32 %v2379
        %vm2456 = vweird.f32 %v2449
        %vm2457 = vmor %vm2455, %vm2456
        %v2458 = vsel %vm2457, %v2449, %v2454
        %v2459 = vrsqrt.pop %v2380
        %v2460 = vmul.f32 %v2459, %v2380
        %v2461 = vmul.f32 %v2460, %v2459
        %v2462 = vmul.f32 0.5, %v2461
        %v2463 = vsub.f32 1.5, %v2462
        %v2464 = vmul.f32 %v2459, %v2463
        %vm2465 = vweird.f32 %v2380
        %vm2466 = vweird.f32 %v2459
        %vm2467 = vmor %vm2465, %vm2466
        %v2468 = vsel %vm2467, %v2459, %v2464
        %v2469 = vrsqrt.pop %v2381
        %v2470 = vmul.f32 %v2469, %v2381
        %v2471 = vmul.f32 %v2470, %v2469
        %v2472 = vmul.f32 0.5, %v2471
        %v2473 = vsub.f32 1.5, %v2472
        %v2474 = vmul.f32 %v2469, %v2473
        %vm2475 = vweird.f32 %v2381
        %vm2476 = vweird.f32 %v2469
        %vm2477 = vmor %vm2475, %vm2476
        %v2478 = vsel %vm2477, %v2469, %v2474
        %v2479 = vrsqrt.pop %v2382
        %v2480 = vmul.f32 %v2479, %v2382
        %v2481 = vmul.f32 %v2480, %v2479
        %v2482 = vmul.f32 0.5, %v2481
        %v2483 = vsub.f32 1.5, %v2482
        %v2484 = vmul.f32 %v2479, %v2483
        %vm2485 = vweird.f32 %v2382
        %vm2486 = vweird.f32 %v2479
        %vm2487 = vmor %vm2485, %vm2486
        %v2488 = vsel %vm2487, %v2479, %v2484
        %v2489 = vrsqrt.pop %v2383
        %v2490 = vmul.f32 %v2489, %v2383
        %v2491 = vmul.f32 %v2490, %v2489
        %v2492 = vmul.f32 0.5, %v2491
        %v2493 = vsub.f32 1.5, %v2492
        %v2494 = vmul.f32 %v2489, %v2493
        %vm2495 = vweird.f32 %v2383
        %vm2496 = vweird.f32 %v2489
        %vm2497 = vmor %vm2495, %vm2496
        %v2498 = vsel %vm2497, %v2489, %v2494
        %v2499 = vrsqrt.pop %v2384
        %v2500 = vmul.f32 %v2499, %v2384
        %v2501 = vmul.f32 %v2500, %v2499
        %v2502 = vmul.f32 0.5, %v2501
        %v2503 = vsub.f32 1.5, %v2502
        %v2504 = vmul.f32 %v2499, %v2503
        %vm2505 = vweird.f32 %v2384
        %vm2506 = vweird.f32 %v2499
        %vm2507 = vmor %vm2505, %vm2506
        %v2508 = vsel %vm2507, %v2499, %v2504
        %v2509 = vrsqrt.pop %v2385
        %v2510 = vmul.f32 %v2509, %v2385
        %v2511 = vmul.f32 %v2510, %v2509
        %v2512 = vmul.f32 0.5, %v2511
        %v2513 = vsub.f32 1.5, %v2512
        %v2514 = vmul.f32 %v2509, %v2513
        %vm2515 = vweird.f32 %v2385
        %vm2516 = vweird.f32 %v2509
        %vm2517 = vmor %vm2515, %vm2516
        %v2518 = vsel %vm2517, %v2509, %v2514
        %v2519 = vrsqrt.pop %v2386
        %v2520 = vmul.f32 %v2519, %v2386
        %v2521 = vmul.f32 %v2520, %v2519
        %v2522 = vmul.f32 0.5, %v2521
        %v2523 = vsub.f32 1.5, %v2522
        %v2524 = vmul.f32 %v2519, %v2523
        %vm2525 = vweird.f32 %v2386
        %vm2526 = vweird.f32 %v2519
        %vm2527 = vmor %vm2525, %vm2526
        %v2528 = vsel %vm2527, %v2519, %v2524
        %v2529 = vrsqrt.pop %v2387
        %v2530 = vmul.f32 %v2529, %v2387
        %v2531 = vmul.f32 %v2530, %v2529
        %v2532 = vmul.f32 0.5, %v2531
        %v2533 = vsub.f32 1.5, %v2532
        %v2534 = vmul.f32 %v2529, %v2533
        %vm2535 = vweird.f32 %v2387
        %vm2536 = vweird.f32 %v2529
        %vm2537 = vmor %vm2535, %vm2536
        %v2538 = vsel %vm2537, %v2529, %v2534
        %v2539 = vrsqrt.pop %v2388
        %v2540 = vmul.f32 %v2539, %v2388
        %v2541 = vmul.f32 %v2540, %v2539
        %v2542 = vmul.f32 0.5, %v2541
        %v2543 = vsub.f32 1.5, %v2542
        %v2544 = vmul.f32 %v2539, %v2543
        %vm2545 = vweird.f32 %v2388
        %vm2546 = vweird.f32 %v2539
        %vm2547 = vmor %vm2545, %vm2546
        %v2548 = vsel %vm2547, %v2539, %v2544
        %2565 = vst [vmem:[#allocation1] ss:$4 sm:$0xff] %v2398
        %s2566 = scalar_lea.vmem [#allocation1], 1
        %2567 = vst [vmem:[%s2566] ss:$4 sm:$0xff] %v2408
        %s2568 = scalar_lea.vmem [#allocation1], 2
        %2569 = vst [vmem:[%s2568] ss:$4 sm:$0xff] %v2418
        %s2570 = scalar_lea.vmem [#allocation1], 3
        %2571 = vst [vmem:[%s2570] ss:$4 sm:$0xff] %v2428
        %s2572 = scalar_lea.vmem [#allocation1], 32
        %2573 = vst [vmem:[%s2572] ss:$4 sm:$0xff] %v2398
        %s2574 = scalar_lea.vmem [#allocation1], 33
        %2575 = vst [vmem:[%s2574] ss:$4 sm:$0xff] %v2408
        %s2576 = scalar_lea.vmem [#allocation1], 34
        %2577 = vst [vmem:[%s2576] ss:$4 sm:$0xff] %v2418
        %s2578 = scalar_lea.vmem [#allocation1], 35
        %2579 = vst [vmem:[%s2578] ss:$4 sm:$0xff] %v2428
        %v2580 = vld.sshfl [vmem:[#allocation1] sm:$0xff pattern:$0x73625140]
        %v2581 = vld.sshfl [vmem:[#allocation1 + $0x8] sm:$0xff pattern:$0x73625140]
        %v2582 = vld.sshfl [vmem:[#allocation1 + $0x10] sm:$0xff pattern:$0x73625140]
        %v2583 = vld.sshfl [vmem:[#allocation1 + $0x18] sm:$0xff pattern:$0x73625140]
        %v2584 = vld.sshfl [vmem:[#allocation1 + $0x20] sm:$0xff pattern:$0x73625140]
        %v2585 = vld.sshfl [vmem:[#allocation1 + $0x28] sm:$0xff pattern:$0x73625140]
        %v2586 = vld.sshfl [vmem:[#allocation1 + $0x30] sm:$0xff pattern:$0x73625140]
        %v2587 = vld.sshfl [vmem:[#allocation1 + $0x38] sm:$0xff pattern:$0x73625140]
        %2588 = vst [vmem:[#allocation1] ss:$4 sm:$0xff] %v2438
        %2589 = vst [vmem:[%s2566] ss:$4 sm:$0xff] %v2448
        %2590 = vst [vmem:[%s2568] ss:$4 sm:$0xff] %v2458
        %2591 = vst [vmem:[%s2570] ss:$4 sm:$0xff] %v2468
        %2592 = vst [vmem:[%s2572] ss:$4 sm:$0xff] %v2438
        %2593 = vst [vmem:[%s2574] ss:$4 sm:$0xff] %v2448
        %2594 = vst [vmem:[%s2576] ss:$4 sm:$0xff] %v2458
        %2595 = vst [vmem:[%s2578] ss:$4 sm:$0xff] %v2468
        %v2596 = vld.sshfl [vmem:[#allocation1] sm:$0xff pattern:$0x73625140]
        %v2597 = vld.sshfl [vmem:[#allocation1 + $0x8] sm:$0xff pattern:$0x73625140]
        %v2598 = vld.sshfl [vmem:[#allocation1 + $0x10] sm:$0xff pattern:$0x73625140]
        %v2599 = vld.sshfl [vmem:[#allocation1 + $0x18] sm:$0xff pattern:$0x73625140]
        %v2600 = vld.sshfl [vmem:[#allocation1 + $0x20] sm:$0xff pattern:$0x73625140]
        %v2601 = vld.sshfl [vmem:[#allocation1 + $0x28] sm:$0xff pattern:$0x73625140]
        %v2602 = vld.sshfl [vmem:[#allocation1 + $0x30] sm:$0xff pattern:$0x73625140]
        %v2603 = vld.sshfl [vmem:[#allocation1 + $0x38] sm:$0xff pattern:$0x73625140]
        %2604 = vst [vmem:[#allocation1] ss:$4 sm:$0xff] %v2478
        %2605 = vst [vmem:[%s2566] ss:$4 sm:$0xff] %v2488
        %2606 = vst [vmem:[%s2568] ss:$4 sm:$0xff] %v2498
        %2607 = vst [vmem:[%s2570] ss:$4 sm:$0xff] %v2508
        %2608 = vst [vmem:[%s2572] ss:$4 sm:$0xff] %v2478
        %2609 = vst [vmem:[%s2574] ss:$4 sm:$0xff] %v2488
        %2610 = vst [vmem:[%s2576] ss:$4 sm:$0xff] %v2498
        %2611 = vst [vmem:[%s2578] ss:$4 sm:$0xff] %v2508
        %v2612 = vld.sshfl [vmem:[#allocation1] sm:$0xff pattern:$0x73625140]
        %v2613 = vld.sshfl [vmem:[#allocation1 + $0x8] sm:$0xff pattern:$0x73625140]
        %v2614 = vld.sshfl [vmem:[#allocation1 + $0x10] sm:$0xff pattern:$0x73625140]
        %v2615 = vld.sshfl [vmem:[#allocation1 + $0x18] sm:$0xff pattern:$0x73625140]
        %v2616 = vld.sshfl [vmem:[#allocation1 + $0x20] sm:$0xff pattern:$0x73625140]
        %v2617 = vld.sshfl [vmem:[#allocation1 + $0x28] sm:$0xff pattern:$0x73625140]
        %v2618 = vld.sshfl [vmem:[#allocation1 + $0x30] sm:$0xff pattern:$0x73625140]
        %v2619 = vld.sshfl [vmem:[#allocation1 + $0x38] sm:$0xff pattern:$0x73625140]
        %2620 = vst [vmem:[#allocation1] ss:$4 sm:$0xff] %v2518
        %2621 = vst [vmem:[%s2566] ss:$4 sm:$0xff] %v2528
        %2622 = vst [vmem:[%s2568] ss:$4 sm:$0xff] %v2538
        %2623 = vst [vmem:[%s2570] ss:$4 sm:$0xff] %v2548
        %2624 = vst [vmem:[%s2572] ss:$4 sm:$0xff] %v2518
        %2625 = vst [vmem:[%s2574] ss:$4 sm:$0xff] %v2528
        %2626 = vst [vmem:[%s2576] ss:$4 sm:$0xff] %v2538
        %2627 = vst [vmem:[%s2578] ss:$4 sm:$0xff] %v2548
        %v2628 = vld.sshfl [vmem:[#allocation1] sm:$0xff pattern:$0x73625140]
        %v2629 = vld.sshfl [vmem:[#allocation1 + $0x8] sm:$0xff pattern:$0x73625140]
        %v2630 = vld.sshfl [vmem:[#allocation1 + $0x10] sm:$0xff pattern:$0x73625140]
        %v2631 = vld.sshfl [vmem:[#allocation1 + $0x18] sm:$0xff pattern:$0x73625140]
        %v2632 = vld.sshfl [vmem:[#allocation1 + $0x20] sm:$0xff pattern:$0x73625140]
        %v2633 = vld.sshfl [vmem:[#allocation1 + $0x28] sm:$0xff pattern:$0x73625140]
        %v2634 = vld.sshfl [vmem:[#allocation1 + $0x30] sm:$0xff pattern:$0x73625140]
        %v2635 = vld.sshfl [vmem:[#allocation1 + $0x38] sm:$0xff pattern:$0x73625140]
        %v2668 = vmul.f32 %v2341, %v2580
        %v2669 = vmul.f32 %v2342, %v2581
        %v2670 = vmul.f32 %v2343, %v2582
        %v2671 = vmul.f32 %v2344, %v2583
        %v2672 = vmul.f32 %v2345, %v2584
        %v2673 = vmul.f32 %v2346, %v2585
        %v2674 = vmul.f32 %v2347, %v2586
        %v2675 = vmul.f32 %v2348, %v2587
        %v2676 = vmul.f32 %v2349, %v2596
        %v2677 = vmul.f32 %v2350, %v2597
        %v2678 = vmul.f32 %v2351, %v2598
        %v2679 = vmul.f32 %v2352, %v2599
        %v2680 = vmul.f32 %v2353, %v2600
        %v2681 = vmul.f32 %v2354, %v2601
        %v2682 = vmul.f32 %v2355, %v2602
        %v2683 = vmul.f32 %v2356, %v2603
        %v2684 = vmul.f32 %v2357, %v2612
        %v2685 = vmul.f32 %v2358, %v2613
        %v2686 = vmul.f32 %v2359, %v2614
        %v2687 = vmul.f32 %v2360, %v2615
        %v2688 = vmul.f32 %v2361, %v2616
        %v2689 = vmul.f32 %v2362, %v2617
        %v2690 = vmul.f32 %v2363, %v2618
        %v2691 = vmul.f32 %v2364, %v2619
        %v2692 = vmul.f32 %v2365, %v2628
        %v2693 = vmul.f32 %v2366, %v2629
        %v2694 = vmul.f32 %v2367, %v2630
        %v2695 = vmul.f32 %v2368, %v2631
        %v2696 = vmul.f32 %v2369, %v2632
        %v2697 = vmul.f32 %v2370, %v2633
        %v2698 = vmul.f32 %v2371, %v2634
        %v2699 = vmul.f32 %v2372, %v2635
        %v2700 = vld [vmem:[%s6] sm:$0xf]
        %v2701 = vld [vmem:[%s6 + $0x4] sm:$0xf]
        %v2702 = vld [vmem:[%s6 + $0x8] sm:$0xf]
        %v2703 = vld [vmem:[%s6 + $0xc] sm:$0xf]
        %v2704 = vpack.c.bf16 %v2676, %v2668
        %v2705 = vpack.c.bf16 %v2677, %v2669
        %v2706 = vpack.c.bf16 %v2678, %v2670
        %v2707 = vpack.c.bf16 %v2679, %v2671
        %v2708 = vpack.c.bf16 %v2680, %v2672
        %v2709 = vpack.c.bf16 %v2681, %v2673
        %v2710 = vpack.c.bf16 %v2682, %v2674
        %v2711 = vpack.c.bf16 %v2683, %v2675
        %v2712 = vpack.c.bf16 %v2692, %v2684
        %v2713 = vpack.c.bf16 %v2693, %v2685
        %v2714 = vpack.c.bf16 %v2694, %v2686
        %v2715 = vpack.c.bf16 %v2695, %v2687
        %v2716 = vpack.c.bf16 %v2696, %v2688
        %v2717 = vpack.c.bf16 %v2697, %v2689
        %v2718 = vpack.c.bf16 %v2698, %v2690
        %v2719 = vpack.c.bf16 %v2699, %v2691
        %v2724 = vunpack.c.l.b16 %v2700
        %v2725 = vunpack.c.l.b16 %v2701
        %v2726 = vunpack.c.l.b16 %v2702
        %v2727 = vunpack.c.l.b16 %v2703
        %v2728 = vpack.c.b16 %v2725, %v2724
        %v2729 = vpack.c.b16 %v2727, %v2726
        %2730 = vrot.lane.b32.xlu0 %v2728, 96
        %v2731 = vpop.permute.xlu0 %2730
        %2732 = vrot.lane.b32.xlu0 %v2729, 96
        %v2733 = vpop.permute.xlu0 %2732
        %v2735 = vsel %vm1348, %v2731, 0
        %v2738 = vsel %vm1348, %v2733, 0
        %2740 = vmatpush.bf16.msra.mxu0 0
        %2741 = vmatpush.bf16.msra.mxu0 0
        %2742 = vmatpush.bf16.msra.mxu0 0
        %2743 = vmatpush.bf16.msra.mxu0 0
        %2744 = vmatpush.bf16.msra.mxu0 0
        %2745 = vmatpush.bf16.msra.mxu0 0
        %2746 = vmatpush.bf16.msra.mxu0 %v2712
        %2747 = vmatpush.bf16.msra.mxu0 %v2704
        %2748 = vmatmul.bf16.gmra.mxu0 %v2735
        %v2749 = vpop.f32.mrf.mxu0
        %v2750 = vadd.f32 0.0, %v2749
        %v2751 = vpop.f32.mrf.mxu0
        %v2752 = vadd.f32 0.0, %v2751
        %2753 = vmatmul.bf16.gmra.mxu0 %v2738
        %v2754 = vpop.f32.mrf.mxu0
        %v2755 = vadd.f32 0.0, %v2754
        %v2756 = vpop.f32.mrf.mxu0
        %v2757 = vadd.f32 0.0, %v2756
        %2758 = vdwg.mxu0
        %2759 = vmatpush.bf16.msra.mxu0 0
        %2760 = vmatpush.bf16.msra.mxu0 0
        %2761 = vmatpush.bf16.msra.mxu0 0
        %2762 = vmatpush.bf16.msra.mxu0 0
        %2763 = vmatpush.bf16.msra.mxu0 0
        %2764 = vmatpush.bf16.msra.mxu0 0
        %2765 = vmatpush.bf16.msra.mxu0 %v2713
        %2766 = vmatpush.bf16.msra.mxu0 %v2705
        %2767 = vmatmul.bf16.gmra.mxu0 %v2735
        %v2768 = vpop.f32.mrf.mxu0
        %v2769 = vadd.f32 0.0, %v2768
        %v2770 = vpop.f32.mrf.mxu0
        %v2771 = vadd.f32 0.0, %v2770
        %2772 = vmatmul.bf16.gmra.mxu0 %v2738
        %v2773 = vpop.f32.mrf.mxu0
        %v2774 = vadd.f32 0.0, %v2773
        %v2775 = vpop.f32.mrf.mxu0
        %v2776 = vadd.f32 0.0, %v2775
        %2777 = vdwg.mxu0
        %2778 = vmatpush.bf16.msra.mxu0 0
        %2779 = vmatpush.bf16.msra.mxu0 0
        %2780 = vmatpush.bf16.msra.mxu0 0
        %2781 = vmatpush.bf16.msra.mxu0 0
        %2782 = vmatpush.bf16.msra.mxu0 0
        %2783 = vmatpush.bf16.msra.mxu0 0
        %2784 = vmatpush.bf16.msra.mxu0 %v2714
        %2785 = vmatpush.bf16.msra.mxu0 %v2706
        %2786 = vmatmul.bf16.gmra.mxu0 %v2735
        %v2787 = vpop.f32.mrf.mxu0
        %v2788 = vadd.f32 0.0, %v2787
        %v2789 = vpop.f32.mrf.mxu0
        %v2790 = vadd.f32 0.0, %v2789
        %2791 = vmatmul.bf16.gmra.mxu0 %v2738
        %v2792 = vpop.f32.mrf.mxu0
        %v2793 = vadd.f32 0.0, %v2792
        %v2794 = vpop.f32.mrf.mxu0
        %v2795 = vadd.f32 0.0, %v2794
        %2796 = vdwg.mxu0
        %2797 = vmatpush.bf16.msra.mxu0 0
        %2798 = vmatpush.bf16.msra.mxu0 0
        %2799 = vmatpush.bf16.msra.mxu0 0
        %2800 = vmatpush.bf16.msra.mxu0 0
        %2801 = vmatpush.bf16.msra.mxu0 0
        %2802 = vmatpush.bf16.msra.mxu0 0
        %2803 = vmatpush.bf16.msra.mxu0 %v2715
        %2804 = vmatpush.bf16.msra.mxu0 %v2707
        %2805 = vmatmul.bf16.gmra.mxu0 %v2735
        %v2806 = vpop.f32.mrf.mxu0
        %v2807 = vadd.f32 0.0, %v2806
        %v2808 = vpop.f32.mrf.mxu0
        %v2809 = vadd.f32 0.0, %v2808
        %2810 = vmatmul.bf16.gmra.mxu0 %v2738
        %v2811 = vpop.f32.mrf.mxu0
        %v2812 = vadd.f32 0.0, %v2811
        %v2813 = vpop.f32.mrf.mxu0
        %v2814 = vadd.f32 0.0, %v2813
        %2815 = vdwg.mxu0
        %2816 = vmatpush.bf16.msra.mxu0 0
        %2817 = vmatpush.bf16.msra.mxu0 0
        %2818 = vmatpush.bf16.msra.mxu0 0
        %2819 = vmatpush.bf16.msra.mxu0 0
        %2820 = vmatpush.bf16.msra.mxu0 0
        %2821 = vmatpush.bf16.msra.mxu0 0
        %2822 = vmatpush.bf16.msra.mxu0 %v2716
        %2823 = vmatpush.bf16.msra.mxu0 %v2708
        %2824 = vmatmul.bf16.gmra.mxu0 %v2735
        %v2825 = vpop.f32.mrf.mxu0
        %v2826 = vadd.f32 0.0, %v2825
        %v2827 = vpop.f32.mrf.mxu0
        %v2828 = vadd.f32 0.0, %v2827
        %2829 = vmatmul.bf16.gmra.mxu0 %v2738
        %v2830 = vpop.f32.mrf.mxu0
        %v2831 = vadd.f32 0.0, %v2830
        %v2832 = vpop.f32.mrf.mxu0
        %v2833 = vadd.f32 0.0, %v2832
        %2834 = vdwg.mxu0
        %2835 = vmatpush.bf16.msra.mxu0 0
        %2836 = vmatpush.bf16.msra.mxu0 0
        %2837 = vmatpush.bf16.msra.mxu0 0
        %2838 = vmatpush.bf16.msra.mxu0 0
        %2839 = vmatpush.bf16.msra.mxu0 0
        %2840 = vmatpush.bf16.msra.mxu0 0
        %2841 = vmatpush.bf16.msra.mxu0 %v2717
        %2842 = vmatpush.bf16.msra.mxu0 %v2709
        %2843 = vmatmul.bf16.gmra.mxu0 %v2735
        %v2844 = vpop.f32.mrf.mxu0
        %v2845 = vadd.f32 0.0, %v2844
        %v2846 = vpop.f32.mrf.mxu0
        %v2847 = vadd.f32 0.0, %v2846
        %2848 = vmatmul.bf16.gmra.mxu0 %v2738
        %v2849 = vpop.f32.mrf.mxu0
        %v2850 = vadd.f32 0.0, %v2849
        %v2851 = vpop.f32.mrf.mxu0
        %v2852 = vadd.f32 0.0, %v2851
        %2853 = vdwg.mxu0
        %2854 = vmatpush.bf16.msra.mxu0 0
        %2855 = vmatpush.bf16.msra.mxu0 0
        %2856 = vmatpush.bf16.msra.mxu0 0
        %2857 = vmatpush.bf16.msra.mxu0 0
        %2858 = vmatpush.bf16.msra.mxu0 0
        %2859 = vmatpush.bf16.msra.mxu0 0
        %2860 = vmatpush.bf16.msra.mxu0 %v2718
        %2861 = vmatpush.bf16.msra.mxu0 %v2710
        %2862 = vmatmul.bf16.gmra.mxu0 %v2735
        %v2863 = vpop.f32.mrf.mxu0
        %v2864 = vadd.f32 0.0, %v2863
        %v2865 = vpop.f32.mrf.mxu0
        %v2866 = vadd.f32 0.0, %v2865
        %2867 = vmatmul.bf16.gmra.mxu0 %v2738
        %v2868 = vpop.f32.mrf.mxu0
        %v2869 = vadd.f32 0.0, %v2868
        %v2870 = vpop.f32.mrf.mxu0
        %v2871 = vadd.f32 0.0, %v2870
        %2872 = vdwg.mxu0
        %2873 = vmatpush.bf16.msra.mxu0 0
        %2874 = vmatpush.bf16.msra.mxu0 0
        %2875 = vmatpush.bf16.msra.mxu0 0
        %2876 = vmatpush.bf16.msra.mxu0 0
        %2877 = vmatpush.bf16.msra.mxu0 0
        %2878 = vmatpush.bf16.msra.mxu0 0
        %2879 = vmatpush.bf16.msra.mxu0 %v2719
        %2880 = vmatpush.bf16.msra.mxu0 %v2711
        %2881 = vmatmul.bf16.gmra.mxu0 %v2735
        %v2882 = vpop.f32.mrf.mxu0
        %v2883 = vadd.f32 0.0, %v2882
        %v2884 = vpop.f32.mrf.mxu0
        %v2885 = vadd.f32 0.0, %v2884
        %2886 = vmatmul.bf16.gmra.mxu0 %v2738
        %v2887 = vpop.f32.mrf.mxu0
        %v2888 = vadd.f32 0.0, %v2887
        %v2889 = vpop.f32.mrf.mxu0
        %v2890 = vadd.f32 0.0, %v2889
        %2891 = vdwg.mxu0
        %v2892 = vadd.f32 %v1365, %v2750
        %v2893 = vadd.f32 %v1365, %v2769
        %v2894 = vadd.f32 %v1365, %v2788
        %v2895 = vadd.f32 %v1365, %v2807
        %v2896 = vadd.f32 %v1365, %v2826
        %v2897 = vadd.f32 %v1365, %v2845
        %v2898 = vadd.f32 %v1365, %v2864
        %v2899 = vadd.f32 %v1365, %v2883
        %v2900 = vadd.f32 %v1367, %v2752
        %v2901 = vadd.f32 %v1367, %v2771
        %v2902 = vadd.f32 %v1367, %v2790
        %v2903 = vadd.f32 %v1367, %v2809
        %v2904 = vadd.f32 %v1367, %v2828
        %v2905 = vadd.f32 %v1367, %v2847
        %v2906 = vadd.f32 %v1367, %v2866
        %v2907 = vadd.f32 %v1367, %v2885
        %v2908 = vadd.f32 %v1370, %v2755
        %v2909 = vadd.f32 %v1370, %v2774
        %v2910 = vadd.f32 %v1370, %v2793
        %v2911 = vadd.f32 %v1370, %v2812
        %v2912 = vadd.f32 %v1370, %v2831
        %v2913 = vadd.f32 %v1370, %v2850
        %v2914 = vadd.f32 %v1370, %v2869
        %v2915 = vadd.f32 %v1370, %v2888
        %v2916 = vadd.f32 %v1372, %v2757
        %v2917 = vadd.f32 %v1372, %v2776
        %v2918 = vadd.f32 %v1372, %v2795
        %v2919 = vadd.f32 %v1372, %v2814
        %v2920 = vadd.f32 %v1372, %v2833
        %v2921 = vadd.f32 %v1372, %v2852
        %v2922 = vadd.f32 %v1372, %v2871
        %v2923 = vadd.f32 %v1372, %v2890
        %2925 = vset.pattern.permute.xlu0 0
        %2926 = vperm.xlu0 %2925, %v440
        %v2927 = vpop.permute.xlu0 %2926
        %2930 = vset.pattern.permute.xlu0 0
        %2931 = vperm.xlu0 %2930, %v441
        %v2932 = vpop.permute.xlu0 %2931
        %2935 = vset.pattern.permute.xlu0 0
        %2936 = vperm.xlu0 %2935, %v442
        %v2937 = vpop.permute.xlu0 %2936
        %2940 = vset.pattern.permute.xlu0 0
        %2941 = vperm.xlu0 %2940, %v443
        %v2942 = vpop.permute.xlu0 %2941
        %v2944 = vadd.f32 %v2892, %v2927
        %v2945 = vadd.f32 %v2893, %v2927
        %v2946 = vadd.f32 %v2894, %v2927
        %v2947 = vadd.f32 %v2895, %v2927
        %v2948 = vadd.f32 %v2896, %v2927
        %v2949 = vadd.f32 %v2897, %v2927
        %v2950 = vadd.f32 %v2898, %v2927
        %v2951 = vadd.f32 %v2899, %v2927
        %v2952 = vadd.f32 %v2900, %v2932
        %v2953 = vadd.f32 %v2901, %v2932
        %v2954 = vadd.f32 %v2902, %v2932
        %v2955 = vadd.f32 %v2903, %v2932
        %v2956 = vadd.f32 %v2904, %v2932
        %v2957 = vadd.f32 %v2905, %v2932
        %v2958 = vadd.f32 %v2906, %v2932
        %v2959 = vadd.f32 %v2907, %v2932
        %v2960 = vadd.f32 %v2908, %v2937
        %v2961 = vadd.f32 %v2909, %v2937
        %v2962 = vadd.f32 %v2910, %v2937
        %v2963 = vadd.f32 %v2911, %v2937
        %v2964 = vadd.f32 %v2912, %v2937
        %v2965 = vadd.f32 %v2913, %v2937
        %v2966 = vadd.f32 %v2914, %v2937
        %v2967 = vadd.f32 %v2915, %v2937
        %v2968 = vadd.f32 %v2916, %v2942
        %v2969 = vadd.f32 %v2917, %v2942
        %v2970 = vadd.f32 %v2918, %v2942
        %v2971 = vadd.f32 %v2919, %v2942
        %v2972 = vadd.f32 %v2920, %v2942
        %v2973 = vadd.f32 %v2921, %v2942
        %v2974 = vadd.f32 %v2922, %v2942
        %v2975 = vadd.f32 %v2923, %v2942
        %v2976 = vmax.f32 %v2944, 0.0
        %v2977 = vmax.f32 %v2945, 0.0
        %v2978 = vmax.f32 %v2946, 0.0
        %v2979 = vmax.f32 %v2947, 0.0
        %v2980 = vmax.f32 %v2948, 0.0
        %v2981 = vmax.f32 %v2949, 0.0
        %v2982 = vmax.f32 %v2950, 0.0
        %v2983 = vmax.f32 %v2951, 0.0
        %v2984 = vmax.f32 %v2952, 0.0
        %v2985 = vmax.f32 %v2953, 0.0
        %v2986 = vmax.f32 %v2954, 0.0
        %v2987 = vmax.f32 %v2955, 0.0
        %v2988 = vmax.f32 %v2956, 0.0
        %v2989 = vmax.f32 %v2957, 0.0
        %v2990 = vmax.f32 %v2958, 0.0
        %v2991 = vmax.f32 %v2959, 0.0
        %v2992 = vmax.f32 %v2960, 0.0
        %v2993 = vmax.f32 %v2961, 0.0
        %v2994 = vmax.f32 %v2962, 0.0
        %v2995 = vmax.f32 %v2963, 0.0
        %v2996 = vmax.f32 %v2964, 0.0
        %v2997 = vmax.f32 %v2965, 0.0
        %v2998 = vmax.f32 %v2966, 0.0
        %v2999 = vmax.f32 %v2967, 0.0
        %v3000 = vmax.f32 %v2968, 0.0
        %v3001 = vmax.f32 %v2969, 0.0
        %v3002 = vmax.f32 %v2970, 0.0
        %v3003 = vmax.f32 %v2971, 0.0
        %v3004 = vmax.f32 %v2972, 0.0
        %v3005 = vmax.f32 %v2973, 0.0
        %v3006 = vmax.f32 %v2974, 0.0
        %v3007 = vmax.f32 %v2975, 0.0
        %v3008 = vadd.f32 %v2976, %v2977
        %v3009 = vadd.f32 %v3008, %v2978
        %v3010 = vadd.f32 %v3009, %v2979
        %v3011 = vadd.f32 %v3010, %v2980
        %v3012 = vadd.f32 %v3011, %v2981
        %v3013 = vadd.f32 %v3012, %v2982
        %v3014 = vadd.f32 %v3013, %v2983
        %3015 = vadd.xlane.f32.xlu0 %v3014
        %v3016 = vpop.xlane.xlu0 %3015
        %v3017 = vadd.f32 %v2984, %v2985
        %v3018 = vadd.f32 %v3017, %v2986
        %v3019 = vadd.f32 %v3018, %v2987
        %v3020 = vadd.f32 %v3019, %v2988
        %v3021 = vadd.f32 %v3020, %v2989
        %v3022 = vadd.f32 %v3021, %v2990
        %v3023 = vadd.f32 %v3022, %v2991
        %3024 = vadd.xlane.f32.xlu0 %v3023
        %v3025 = vpop.xlane.xlu0 %3024
        %v3026 = vadd.f32 %v2992, %v2993
        %v3027 = vadd.f32 %v3026, %v2994
        %v3028 = vadd.f32 %v3027, %v2995
        %v3029 = vadd.f32 %v3028, %v2996
        %v3030 = vadd.f32 %v3029, %v2997
        %v3031 = vadd.f32 %v3030, %v2998
        %v3032 = vadd.f32 %v3031, %v2999
        %3033 = vadd.xlane.f32.xlu0 %v3032
        %v3034 = vpop.xlane.xlu0 %3033
        %v3035 = vadd.f32 %v3000, %v3001
        %v3036 = vadd.f32 %v3035, %v3002
        %v3037 = vadd.f32 %v3036, %v3003
        %v3038 = vadd.f32 %v3037, %v3004
        %v3039 = vadd.f32 %v3038, %v3005
        %v3040 = vadd.f32 %v3039, %v3006
        %v3041 = vadd.f32 %v3040, %v3007
        %3042 = vadd.xlane.f32.xlu0 %v3041
        %v3043 = vpop.xlane.xlu0 %3042
        %v3044 = vmul.f32 %v2976, %v2976
        %v3045 = vmul.f32 %v2977, %v2977
        %v3046 = vmul.f32 %v2978, %v2978
        %v3047 = vmul.f32 %v2979, %v2979
        %v3048 = vmul.f32 %v2980, %v2980
        %v3049 = vmul.f32 %v2981, %v2981
        %v3050 = vmul.f32 %v2982, %v2982
        %v3051 = vmul.f32 %v2983, %v2983
        %v3052 = vmul.f32 %v2984, %v2984
        %v3053 = vmul.f32 %v2985, %v2985
        %v3054 = vmul.f32 %v2986, %v2986
        %v3055 = vmul.f32 %v2987, %v2987
        %v3056 = vmul.f32 %v2988, %v2988
        %v3057 = vmul.f32 %v2989, %v2989
        %v3058 = vmul.f32 %v2990, %v2990
        %v3059 = vmul.f32 %v2991, %v2991
        %v3060 = vmul.f32 %v2992, %v2992
        %v3061 = vmul.f32 %v2993, %v2993
        %v3062 = vmul.f32 %v2994, %v2994
        %v3063 = vmul.f32 %v2995, %v2995
        %v3064 = vmul.f32 %v2996, %v2996
        %v3065 = vmul.f32 %v2997, %v2997
        %v3066 = vmul.f32 %v2998, %v2998
        %v3067 = vmul.f32 %v2999, %v2999
        %v3068 = vmul.f32 %v3000, %v3000
        %v3069 = vmul.f32 %v3001, %v3001
        %v3070 = vmul.f32 %v3002, %v3002
        %v3071 = vmul.f32 %v3003, %v3003
        %v3072 = vmul.f32 %v3004, %v3004
        %v3073 = vmul.f32 %v3005, %v3005
        %v3074 = vmul.f32 %v3006, %v3006
        %v3075 = vmul.f32 %v3007, %v3007
        %v3076 = vadd.f32 %v3044, %v3045
        %v3077 = vadd.f32 %v3076, %v3046
        %v3078 = vadd.f32 %v3077, %v3047
        %v3079 = vadd.f32 %v3078, %v3048
        %v3080 = vadd.f32 %v3079, %v3049
        %v3081 = vadd.f32 %v3080, %v3050
        %v3082 = vadd.f32 %v3081, %v3051
        %3083 = vadd.xlane.f32.xlu0 %v3082
        %v3084 = vpop.xlane.xlu0 %3083
        %v3085 = vadd.f32 %v3052, %v3053
        %v3086 = vadd.f32 %v3085, %v3054
        %v3087 = vadd.f32 %v3086, %v3055
        %v3088 = vadd.f32 %v3087, %v3056
        %v3089 = vadd.f32 %v3088, %v3057
        %v3090 = vadd.f32 %v3089, %v3058
        %v3091 = vadd.f32 %v3090, %v3059
        %3092 = vadd.xlane.f32.xlu0 %v3091
        %v3093 = vpop.xlane.xlu0 %3092
        %v3094 = vadd.f32 %v3060, %v3061
        %v3095 = vadd.f32 %v3094, %v3062
        %v3096 = vadd.f32 %v3095, %v3063
        %v3097 = vadd.f32 %v3096, %v3064
        %v3098 = vadd.f32 %v3097, %v3065
        %v3099 = vadd.f32 %v3098, %v3066
        %v3100 = vadd.f32 %v3099, %v3067
        %3101 = vadd.xlane.f32.xlu0 %v3100
        %v3102 = vpop.xlane.xlu0 %3101
        %v3103 = vadd.f32 %v3068, %v3069
        %v3104 = vadd.f32 %v3103, %v3070
        %v3105 = vadd.f32 %v3104, %v3071
        %v3106 = vadd.f32 %v3105, %v3072
        %v3107 = vadd.f32 %v3106, %v3073
        %v3108 = vadd.f32 %v3107, %v3074
        %v3109 = vadd.f32 %v3108, %v3075
        %3110 = vadd.xlane.f32.xlu0 %v3109
        %v3111 = vpop.xlane.xlu0 %3110
        %v3112 = vrcp.pop 1024.0
        %v3113 = vmul.f32 1024.0, %v3112
        %v3114 = vsub.f32 1.0, %v3113
        %v3115 = vmul.f32 %v3112, %v3114
        %v3116 = vadd.f32 %v3112, %v3115
        %vm3117 = vweird.f32 %v3112
        %v3118 = vsel %vm3117, %v3112, %v3116
        %v3119 = vmul.f32 %v3016, %v3118
        %v3120 = vmul.f32 %v3025, %v3118
        %v3121 = vmul.f32 %v3034, %v3118
        %v3122 = vmul.f32 %v3043, %v3118
        %v3123 = vmul.f32 %v3084, %v3118
        %v3124 = vmul.f32 %v3093, %v3118
        %v3125 = vmul.f32 %v3102, %v3118
        %v3126 = vmul.f32 %v3111, %v3118
        %v3127 = vmul.f32 %v3119, %v3119
        %v3128 = vmul.f32 %v3120, %v3120
        %v3129 = vmul.f32 %v3121, %v3121
        %v3130 = vmul.f32 %v3122, %v3122
        %v3131 = vsub.f32 %v3123, %v3127
        %v3132 = vsub.f32 %v3124, %v3128
        %v3133 = vsub.f32 %v3125, %v3129
        %v3134 = vsub.f32 %v3126, %v3130
        %v3135 = vmax.f32 %v3131, 0.0
        %v3136 = vmax.f32 %v3132, 0.0
        %v3137 = vmax.f32 %v3133, 0.0
        %v3138 = vmax.f32 %v3134, 0.0
        %v3139 = vsub.f32 %v2976, %v3119
        %v3140 = vsub.f32 %v2977, %v3119
        %v3141 = vsub.f32 %v2978, %v3119
        %v3142 = vsub.f32 %v2979, %v3119
        %v3143 = vsub.f32 %v2980, %v3119
        %v3144 = vsub.f32 %v2981, %v3119
        %v3145 = vsub.f32 %v2982, %v3119
        %v3146 = vsub.f32 %v2983, %v3119
        %v3147 = vsub.f32 %v2984, %v3120
        %v3148 = vsub.f32 %v2985, %v3120
        %v3149 = vsub.f32 %v2986, %v3120
        %v3150 = vsub.f32 %v2987, %v3120
        %v3151 = vsub.f32 %v2988, %v3120
        %v3152 = vsub.f32 %v2989, %v3120
        %v3153 = vsub.f32 %v2990, %v3120
        %v3154 = vsub.f32 %v2991, %v3120
        %v3155 = vsub.f32 %v2992, %v3121
        %v3156 = vsub.f32 %v2993, %v3121
        %v3157 = vsub.f32 %v2994, %v3121
        %v3158 = vsub.f32 %v2995, %v3121
        %v3159 = vsub.f32 %v2996, %v3121
        %v3160 = vsub.f32 %v2997, %v3121
        %v3161 = vsub.f32 %v2998, %v3121
        %v3162 = vsub.f32 %v2999, %v3121
        %v3163 = vsub.f32 %v3000, %v3122
        %v3164 = vsub.f32 %v3001, %v3122
        %v3165 = vsub.f32 %v3002, %v3122
        %v3166 = vsub.f32 %v3003, %v3122
        %v3167 = vsub.f32 %v3004, %v3122
        %v3168 = vsub.f32 %v3005, %v3122
        %v3169 = vsub.f32 %v3006, %v3122
        %v3170 = vsub.f32 %v3007, %v3122
        %v3171 = vadd.f32 %v3135, 1e-05
        %v3172 = vadd.f32 %v3136, 1e-05
        %v3173 = vadd.f32 %v3137, 1e-05
        %v3174 = vadd.f32 %v3138, 1e-05
        %v3175 = vrsqrt.pop %v3171
        %v3176 = vmul.f32 %v3175, %v3171
        %v3177 = vmul.f32 %v3176, %v3175
        %v3178 = vmul.f32 0.5, %v3177
        %v3179 = vsub.f32 1.5, %v3178
        %v3180 = vmul.f32 %v3175, %v3179
        %vm3181 = vweird.f32 %v3171
        %vm3182 = vweird.f32 %v3175
        %vm3183 = vmor %vm3181, %vm3182
        %v3184 = vsel %vm3183, %v3175, %v3180
        %v3185 = vrsqrt.pop %v3172
        %v3186 = vmul.f32 %v3185, %v3172
        %v3187 = vmul.f32 %v3186, %v3185
        %v3188 = vmul.f32 0.5, %v3187
        %v3189 = vsub.f32 1.5, %v3188
        %v3190 = vmul.f32 %v3185, %v3189
        %vm3191 = vweird.f32 %v3172
        %vm3192 = vweird.f32 %v3185
        %vm3193 = vmor %vm3191, %vm3192
        %v3194 = vsel %vm3193, %v3185, %v3190
        %v3195 = vrsqrt.pop %v3173
        %v3196 = vmul.f32 %v3195, %v3173
        %v3197 = vmul.f32 %v3196, %v3195
        %v3198 = vmul.f32 0.5, %v3197
        %v3199 = vsub.f32 1.5, %v3198
        %v3200 = vmul.f32 %v3195, %v3199
        %vm3201 = vweird.f32 %v3173
        %vm3202 = vweird.f32 %v3195
        %vm3203 = vmor %vm3201, %vm3202
        %v3204 = vsel %vm3203, %v3195, %v3200
        %v3205 = vrsqrt.pop %v3174
        %v3206 = vmul.f32 %v3205, %v3174
        %v3207 = vmul.f32 %v3206, %v3205
        %v3208 = vmul.f32 0.5, %v3207
        %v3209 = vsub.f32 1.5, %v3208
        %v3210 = vmul.f32 %v3205, %v3209
        %vm3211 = vweird.f32 %v3174
        %vm3212 = vweird.f32 %v3205
        %vm3213 = vmor %vm3211, %vm3212
        %v3214 = vsel %vm3213, %v3205, %v3210
        %v3215 = vmul.f32 %v3139, %v3184
        %v3216 = vmul.f32 %v3140, %v3184
        %v3217 = vmul.f32 %v3141, %v3184
        %v3218 = vmul.f32 %v3142, %v3184
        %v3219 = vmul.f32 %v3143, %v3184
        %v3220 = vmul.f32 %v3144, %v3184
        %v3221 = vmul.f32 %v3145, %v3184
        %v3222 = vmul.f32 %v3146, %v3184
        %v3223 = vmul.f32 %v3147, %v3194
        %v3224 = vmul.f32 %v3148, %v3194
        %v3225 = vmul.f32 %v3149, %v3194
        %v3226 = vmul.f32 %v3150, %v3194
        %v3227 = vmul.f32 %v3151, %v3194
        %v3228 = vmul.f32 %v3152, %v3194
        %v3229 = vmul.f32 %v3153, %v3194
        %v3230 = vmul.f32 %v3154, %v3194
        %v3231 = vmul.f32 %v3155, %v3204
        %v3232 = vmul.f32 %v3156, %v3204
        %v3233 = vmul.f32 %v3157, %v3204
        %v3234 = vmul.f32 %v3158, %v3204
        %v3235 = vmul.f32 %v3159, %v3204
        %v3236 = vmul.f32 %v3160, %v3204
        %v3237 = vmul.f32 %v3161, %v3204
        %v3238 = vmul.f32 %v3162, %v3204
        %v3239 = vmul.f32 %v3163, %v3214
        %v3240 = vmul.f32 %v3164, %v3214
        %v3241 = vmul.f32 %v3165, %v3214
        %v3242 = vmul.f32 %v3166, %v3214
        %v3243 = vmul.f32 %v3167, %v3214
        %v3244 = vmul.f32 %v3168, %v3214
        %v3245 = vmul.f32 %v3169, %v3214
        %v3246 = vmul.f32 %v3170, %v3214
        %v3247 = vld [vmem:[%s7] sm:$0xf]
        %v3248 = vld [vmem:[%s7 + $0x4] sm:$0xf]
        %v3249 = vld [vmem:[%s7 + $0x8] sm:$0xf]
        %v3250 = vld [vmem:[%s7 + $0xc] sm:$0xf]
        %v3251 = vpack.c.bf16 %v3223, %v3215
        %v3252 = vpack.c.bf16 %v3224, %v3216
        %v3253 = vpack.c.bf16 %v3225, %v3217
        %v3254 = vpack.c.bf16 %v3226, %v3218
        %v3255 = vpack.c.bf16 %v3227, %v3219
        %v3256 = vpack.c.bf16 %v3228, %v3220
        %v3257 = vpack.c.bf16 %v3229, %v3221
        %v3258 = vpack.c.bf16 %v3230, %v3222
        %v3259 = vpack.c.bf16 %v3239, %v3231
        %v3260 = vpack.c.bf16 %v3240, %v3232
        %v3261 = vpack.c.bf16 %v3241, %v3233
        %v3262 = vpack.c.bf16 %v3242, %v3234
        %v3263 = vpack.c.bf16 %v3243, %v3235
        %v3264 = vpack.c.bf16 %v3244, %v3236
        %v3265 = vpack.c.bf16 %v3245, %v3237
        %v3266 = vpack.c.bf16 %v3246, %v3238
        %3268 = vset.pattern.permute.xlu0 0
        %3269 = vperm.xlu0 %3268, %v444
        %v3270 = vpop.permute.xlu0 %3269
        %3273 = vset.pattern.permute.xlu0 0
        %3274 = vperm.xlu0 %3273, %v445
        %v3275 = vpop.permute.xlu0 %3274
        %3278 = vset.pattern.permute.xlu0 0
        %3279 = vperm.xlu0 %3278, %v446
        %v3280 = vpop.permute.xlu0 %3279
        %3283 = vset.pattern.permute.xlu0 0
        %3284 = vperm.xlu0 %3283, %v447
        %v3285 = vpop.permute.xlu0 %3284
        %v3291 = vunpack.c.l.b16 %v3247
        %v3292 = vunpack.c.l.b16 %v3248
        %v3293 = vunpack.c.l.b16 %v3249
        %v3294 = vunpack.c.l.b16 %v3250
        %v3295 = vpack.c.b16 %v3292, %v3291
        %v3296 = vpack.c.b16 %v3294, %v3293
        %v3298 = vsel %vm1348, %v3295, 0
        %v3301 = vsel %vm1348, %v3296, 0
        %3303 = vmatpush.bf16.msra.mxu0 0
        %3304 = vmatpush.bf16.msra.mxu0 0
        %3305 = vmatpush.bf16.msra.mxu0 0
        %3306 = vmatpush.bf16.msra.mxu0 0
        %3307 = vmatpush.bf16.msra.mxu0 0
        %3308 = vmatpush.bf16.msra.mxu0 0
        %3309 = vmatpush.bf16.msra.mxu0 %v3259
        %3310 = vmatpush.bf16.msra.mxu0 %v3251
        %3311 = vmatmul.bf16.gmra.mxu0 %v3298
        %v3312 = vpop.f32.mrf.mxu0
        %v3313 = vadd.f32 %v3270, %v3312
        %v3314 = vpop.f32.mrf.mxu0
        %v3315 = vadd.f32 %v3275, %v3314
        %3316 = vmatmul.bf16.gmra.mxu0 %v3301
        %v3317 = vpop.f32.mrf.mxu0
        %v3318 = vadd.f32 %v3280, %v3317
        %v3319 = vpop.f32.mrf.mxu0
        %v3320 = vadd.f32 %v3285, %v3319
        %3321 = vdwg.mxu0
        %3322 = vmatpush.bf16.msra.mxu0 0
        %3323 = vmatpush.bf16.msra.mxu0 0
        %3324 = vmatpush.bf16.msra.mxu0 0
        %3325 = vmatpush.bf16.msra.mxu0 0
        %3326 = vmatpush.bf16.msra.mxu0 0
        %3327 = vmatpush.bf16.msra.mxu0 0
        %3328 = vmatpush.bf16.msra.mxu0 %v3260
        %3329 = vmatpush.bf16.msra.mxu0 %v3252
        %3330 = vmatmul.bf16.gmra.mxu0 %v3298
        %v3331 = vpop.f32.mrf.mxu0
        %v3332 = vadd.f32 %v3270, %v3331
        %v3333 = vpop.f32.mrf.mxu0
        %v3334 = vadd.f32 %v3275, %v3333
        %3335 = vmatmul.bf16.gmra.mxu0 %v3301
        %v3336 = vpop.f32.mrf.mxu0
        %v3337 = vadd.f32 %v3280, %v3336
        %v3338 = vpop.f32.mrf.mxu0
        %v3339 = vadd.f32 %v3285, %v3338
        %3340 = vdwg.mxu0
        %3341 = vmatpush.bf16.msra.mxu0 0
        %3342 = vmatpush.bf16.msra.mxu0 0
        %3343 = vmatpush.bf16.msra.mxu0 0
        %3344 = vmatpush.bf16.msra.mxu0 0
        %3345 = vmatpush.bf16.msra.mxu0 0
        %3346 = vmatpush.bf16.msra.mxu0 0
        %3347 = vmatpush.bf16.msra.mxu0 %v3261
        %3348 = vmatpush.bf16.msra.mxu0 %v3253
        %3349 = vmatmul.bf16.gmra.mxu0 %v3298
        %v3350 = vpop.f32.mrf.mxu0
        %v3351 = vadd.f32 %v3270, %v3350
        %v3352 = vpop.f32.mrf.mxu0
        %v3353 = vadd.f32 %v3275, %v3352
        %3354 = vmatmul.bf16.gmra.mxu0 %v3301
        %v3355 = vpop.f32.mrf.mxu0
        %v3356 = vadd.f32 %v3280, %v3355
        %v3357 = vpop.f32.mrf.mxu0
        %v3358 = vadd.f32 %v3285, %v3357
        %3359 = vdwg.mxu0
        %3360 = vmatpush.bf16.msra.mxu0 0
        %3361 = vmatpush.bf16.msra.mxu0 0
        %3362 = vmatpush.bf16.msra.mxu0 0
        %3363 = vmatpush.bf16.msra.mxu0 0
        %3364 = vmatpush.bf16.msra.mxu0 0
        %3365 = vmatpush.bf16.msra.mxu0 0
        %3366 = vmatpush.bf16.msra.mxu0 %v3262
        %3367 = vmatpush.bf16.msra.mxu0 %v3254
        %3368 = vmatmul.bf16.gmra.mxu0 %v3298
        %v3369 = vpop.f32.mrf.mxu0
        %v3370 = vadd.f32 %v3270, %v3369
        %v3371 = vpop.f32.mrf.mxu0
        %v3372 = vadd.f32 %v3275, %v3371
        %3373 = vmatmul.bf16.gmra.mxu0 %v3301
        %v3374 = vpop.f32.mrf.mxu0
        %v3375 = vadd.f32 %v3280, %v3374
        %v3376 = vpop.f32.mrf.mxu0
        %v3377 = vadd.f32 %v3285, %v3376
        %3378 = vdwg.mxu0
        %3379 = vmatpush.bf16.msra.mxu0 0
        %3380 = vmatpush.bf16.msra.mxu0 0
        %3381 = vmatpush.bf16.msra.mxu0 0
        %3382 = vmatpush.bf16.msra.mxu0 0
        %3383 = vmatpush.bf16.msra.mxu0 0
        %3384 = vmatpush.bf16.msra.mxu0 0
        %3385 = vmatpush.bf16.msra.mxu0 %v3263
        %3386 = vmatpush.bf16.msra.mxu0 %v3255
        %3387 = vmatmul.bf16.gmra.mxu0 %v3298
        %v3388 = vpop.f32.mrf.mxu0
        %v3389 = vadd.f32 %v3270, %v3388
        %v3390 = vpop.f32.mrf.mxu0
        %v3391 = vadd.f32 %v3275, %v3390
        %3392 = vmatmul.bf16.gmra.mxu0 %v3301
        %v3393 = vpop.f32.mrf.mxu0
        %v3394 = vadd.f32 %v3280, %v3393
        %v3395 = vpop.f32.mrf.mxu0
        %v3396 = vadd.f32 %v3285, %v3395
        %3397 = vdwg.mxu0
        %3398 = vmatpush.bf16.msra.mxu0 0
        %3399 = vmatpush.bf16.msra.mxu0 0
        %3400 = vmatpush.bf16.msra.mxu0 0
        %3401 = vmatpush.bf16.msra.mxu0 0
        %3402 = vmatpush.bf16.msra.mxu0 0
        %3403 = vmatpush.bf16.msra.mxu0 0
        %3404 = vmatpush.bf16.msra.mxu0 %v3264
        %3405 = vmatpush.bf16.msra.mxu0 %v3256
        %3406 = vmatmul.bf16.gmra.mxu0 %v3298
        %v3407 = vpop.f32.mrf.mxu0
        %v3408 = vadd.f32 %v3270, %v3407
        %v3409 = vpop.f32.mrf.mxu0
        %v3410 = vadd.f32 %v3275, %v3409
        %3411 = vmatmul.bf16.gmra.mxu0 %v3301
        %v3412 = vpop.f32.mrf.mxu0
        %v3413 = vadd.f32 %v3280, %v3412
        %v3414 = vpop.f32.mrf.mxu0
        %v3415 = vadd.f32 %v3285, %v3414
        %3416 = vdwg.mxu0
        %3417 = vmatpush.bf16.msra.mxu0 0
        %3418 = vmatpush.bf16.msra.mxu0 0
        %3419 = vmatpush.bf16.msra.mxu0 0
        %3420 = vmatpush.bf16.msra.mxu0 0
        %3421 = vmatpush.bf16.msra.mxu0 0
        %3422 = vmatpush.bf16.msra.mxu0 0
        %3423 = vmatpush.bf16.msra.mxu0 %v3265
        %3424 = vmatpush.bf16.msra.mxu0 %v3257
        %3425 = vmatmul.bf16.gmra.mxu0 %v3298
        %v3426 = vpop.f32.mrf.mxu0
        %v3427 = vadd.f32 %v3270, %v3426
        %v3428 = vpop.f32.mrf.mxu0
        %v3429 = vadd.f32 %v3275, %v3428
        %3430 = vmatmul.bf16.gmra.mxu0 %v3301
        %v3431 = vpop.f32.mrf.mxu0
        %v3432 = vadd.f32 %v3280, %v3431
        %v3433 = vpop.f32.mrf.mxu0
        %v3434 = vadd.f32 %v3285, %v3433
        %3435 = vdwg.mxu0
        %3436 = vmatpush.bf16.msra.mxu0 0
        %3437 = vmatpush.bf16.msra.mxu0 0
        %3438 = vmatpush.bf16.msra.mxu0 0
        %3439 = vmatpush.bf16.msra.mxu0 0
        %3440 = vmatpush.bf16.msra.mxu0 0
        %3441 = vmatpush.bf16.msra.mxu0 0
        %3442 = vmatpush.bf16.msra.mxu0 %v3266
        %3443 = vmatpush.bf16.msra.mxu0 %v3258
        %3444 = vmatmul.bf16.gmra.mxu0 %v3298
        %v3445 = vpop.f32.mrf.mxu0
        %v3446 = vadd.f32 %v3270, %v3445
        %v3447 = vpop.f32.mrf.mxu0
        %v3448 = vadd.f32 %v3275, %v3447
        %3449 = vmatmul.bf16.gmra.mxu0 %v3301
        %v3450 = vpop.f32.mrf.mxu0
        %v3451 = vadd.f32 %v3280, %v3450
        %v3452 = vpop.f32.mrf.mxu0
        %v3453 = vadd.f32 %v3285, %v3452
        %3454 = vdwg.mxu0
        %v3455 = vld [vmem:[%s8] sm:$0xf]
        %v3456 = vld [vmem:[%s8 + $0x4] sm:$0xf]
        %v3457 = vld [vmem:[%s8 + $0x8] sm:$0xf]
        %v3458 = vld [vmem:[%s8 + $0xc] sm:$0xf]
        %3460 = vset.pattern.permute.xlu0 0
        %3461 = vperm.xlu0 %3460, %v448
        %v3462 = vpop.permute.xlu0 %3461
        %3465 = vset.pattern.permute.xlu0 0
        %3466 = vperm.xlu0 %3465, %v449
        %v3467 = vpop.permute.xlu0 %3466
        %3470 = vset.pattern.permute.xlu0 0
        %3471 = vperm.xlu0 %3470, %v450
        %v3472 = vpop.permute.xlu0 %3471
        %3475 = vset.pattern.permute.xlu0 0
        %3476 = vperm.xlu0 %3475, %v451
        %v3477 = vpop.permute.xlu0 %3476
        %v3483 = vunpack.c.l.b16 %v3455
        %v3484 = vunpack.c.l.b16 %v3456
        %v3485 = vunpack.c.l.b16 %v3457
        %v3486 = vunpack.c.l.b16 %v3458
        %v3487 = vpack.c.b16 %v3484, %v3483
        %v3488 = vpack.c.b16 %v3486, %v3485
        %v3505 = vunpack.c.l.b16 %v469
        %v3506 = vunpack.c.h.b16 %v469
        %v3507 = vunpack.c.l.b16 %v470
        %v3508 = vunpack.c.h.b16 %v470
        %v3509 = vunpack.c.l.b16 %v471
        %v3510 = vunpack.c.h.b16 %v471
        %v3511 = vunpack.c.l.b16 %v472
        %v3512 = vunpack.c.h.b16 %v472
        %v3513 = vunpack.c.l.b16 %v473
        %v3514 = vunpack.c.h.b16 %v473
        %v3515 = vunpack.c.l.b16 %v474
        %v3516 = vunpack.c.h.b16 %v474
        %v3517 = vunpack.c.l.b16 %v475
        %v3518 = vunpack.c.h.b16 %v475
        %v3519 = vunpack.c.l.b16 %v476
        %v3520 = vunpack.c.h.b16 %v476
        %v3521 = vunpack.c.l.b16 %v477
        %v3522 = vunpack.c.h.b16 %v477
        %v3523 = vunpack.c.l.b16 %v478
        %v3524 = vunpack.c.h.b16 %v478
        %v3525 = vunpack.c.l.b16 %v479
        %v3526 = vunpack.c.h.b16 %v479
        %v3527 = vunpack.c.l.b16 %v480
        %v3528 = vunpack.c.h.b16 %v480
        %v3529 = vunpack.c.l.b16 %v481
        %v3530 = vunpack.c.h.b16 %v481
        %v3531 = vunpack.c.l.b16 %v482
        %v3532 = vunpack.c.h.b16 %v482
        %v3533 = vunpack.c.l.b16 %v483
        %v3534 = vunpack.c.h.b16 %v483
        %v3535 = vunpack.c.l.b16 %v484
        %v3536 = vunpack.c.h.b16 %v484
        %v3537 = vpack.c.b16 %v3513, %v3505
        %v3538 = vpack.c.b16 %v3514, %v3506
        %v3539 = vpack.c.b16 %v3515, %v3507
        %v3540 = vpack.c.b16 %v3516, %v3508
        %v3541 = vpack.c.b16 %v3517, %v3509
        %v3542 = vpack.c.b16 %v3518, %v3510
        %v3543 = vpack.c.b16 %v3519, %v3511
        %v3544 = vpack.c.b16 %v3520, %v3512
        %v3545 = vpack.c.b16 %v3529, %v3521
        %v3546 = vpack.c.b16 %v3530, %v3522
        %v3547 = vpack.c.b16 %v3531, %v3523
        %v3548 = vpack.c.b16 %v3532, %v3524
        %v3549 = vpack.c.b16 %v3533, %v3525
        %v3550 = vpack.c.b16 %v3534, %v3526
        %v3551 = vpack.c.b16 %v3535, %v3527
        %v3552 = vpack.c.b16 %v3536, %v3528
        %v3570 = vsel %vm1348, %v3487, 0
        %v3573 = vsel %vm1348, %v3488, 0
        %3575 = vmatpush.bf16.msra.mxu0 0
        %3576 = vmatpush.bf16.msra.mxu0 0
        %3577 = vmatpush.bf16.msra.mxu0 0
        %3578 = vmatpush.bf16.msra.mxu0 0
        %3579 = vmatpush.bf16.msra.mxu0 0
        %3580 = vmatpush.bf16.msra.mxu0 0
        %3581 = vmatpush.bf16.msra.mxu0 %v3545
        %3582 = vmatpush.bf16.msra.mxu0 %v3537
        %3583 = vmatmul.bf16.gmra.mxu0 %v3570
        %v3584 = vpop.f32.mrf.mxu0
        %v3585 = vadd.f32 %v3462, %v3584
        %v3586 = vpop.f32.mrf.mxu0
        %v3587 = vadd.f32 %v3467, %v3586
        %3588 = vmatmul.bf16.gmra.mxu0 %v3573
        %v3589 = vpop.f32.mrf.mxu0
        %v3590 = vadd.f32 %v3472, %v3589
        %v3591 = vpop.f32.mrf.mxu0
        %v3592 = vadd.f32 %v3477, %v3591
        %3593 = vdwg.mxu0
        %3594 = vmatpush.bf16.msra.mxu0 0
        %3595 = vmatpush.bf16.msra.mxu0 0
        %3596 = vmatpush.bf16.msra.mxu0 0
        %3597 = vmatpush.bf16.msra.mxu0 0
        %3598 = vmatpush.bf16.msra.mxu0 0
        %3599 = vmatpush.bf16.msra.mxu0 0
        %3600 = vmatpush.bf16.msra.mxu0 %v3546
        %3601 = vmatpush.bf16.msra.mxu0 %v3538
        %3602 = vmatmul.bf16.gmra.mxu0 %v3570
        %v3603 = vpop.f32.mrf.mxu0
        %v3604 = vadd.f32 %v3462, %v3603
        %v3605 = vpop.f32.mrf.mxu0
        %v3606 = vadd.f32 %v3467, %v3605
        %3607 = vmatmul.bf16.gmra.mxu0 %v3573
        %v3608 = vpop.f32.mrf.mxu0
        %v3609 = vadd.f32 %v3472, %v3608
        %v3610 = vpop.f32.mrf.mxu0
        %v3611 = vadd.f32 %v3477, %v3610
        %3612 = vdwg.mxu0
        %3613 = vmatpush.bf16.msra.mxu0 0
        %3614 = vmatpush.bf16.msra.mxu0 0
        %3615 = vmatpush.bf16.msra.mxu0 0
        %3616 = vmatpush.bf16.msra.mxu0 0
        %3617 = vmatpush.bf16.msra.mxu0 0
        %3618 = vmatpush.bf16.msra.mxu0 0
        %3619 = vmatpush.bf16.msra.mxu0 %v3547
        %3620 = vmatpush.bf16.msra.mxu0 %v3539
        %3621 = vmatmul.bf16.gmra.mxu0 %v3570
        %v3622 = vpop.f32.mrf.mxu0
        %v3623 = vadd.f32 %v3462, %v3622
        %v3624 = vpop.f32.mrf.mxu0
        %v3625 = vadd.f32 %v3467, %v3624
        %3626 = vmatmul.bf16.gmra.mxu0 %v3573
        %v3627 = vpop.f32.mrf.mxu0
        %v3628 = vadd.f32 %v3472, %v3627
        %v3629 = vpop.f32.mrf.mxu0
        %v3630 = vadd.f32 %v3477, %v3629
        %3631 = vdwg.mxu0
        %3632 = vmatpush.bf16.msra.mxu0 0
        %3633 = vmatpush.bf16.msra.mxu0 0
        %3634 = vmatpush.bf16.msra.mxu0 0
        %3635 = vmatpush.bf16.msra.mxu0 0
        %3636 = vmatpush.bf16.msra.mxu0 0
        %3637 = vmatpush.bf16.msra.mxu0 0
        %3638 = vmatpush.bf16.msra.mxu0 %v3548
        %3639 = vmatpush.bf16.msra.mxu0 %v3540
        %3640 = vmatmul.bf16.gmra.mxu0 %v3570
        %v3641 = vpop.f32.mrf.mxu0
        %v3642 = vadd.f32 %v3462, %v3641
        %v3643 = vpop.f32.mrf.mxu0
        %v3644 = vadd.f32 %v3467, %v3643
        %3645 = vmatmul.bf16.gmra.mxu0 %v3573
        %v3646 = vpop.f32.mrf.mxu0
        %v3647 = vadd.f32 %v3472, %v3646
        %v3648 = vpop.f32.mrf.mxu0
        %v3649 = vadd.f32 %v3477, %v3648
        %3650 = vdwg.mxu0
        %3651 = vmatpush.bf16.msra.mxu0 0
        %3652 = vmatpush.bf16.msra.mxu0 0
        %3653 = vmatpush.bf16.msra.mxu0 0
        %3654 = vmatpush.bf16.msra.mxu0 0
        %3655 = vmatpush.bf16.msra.mxu0 0
        %3656 = vmatpush.bf16.msra.mxu0 0
        %3657 = vmatpush.bf16.msra.mxu0 %v3549
        %3658 = vmatpush.bf16.msra.mxu0 %v3541
        %3659 = vmatmul.bf16.gmra.mxu0 %v3570
        %v3660 = vpop.f32.mrf.mxu0
        %v3661 = vadd.f32 %v3462, %v3660
        %v3662 = vpop.f32.mrf.mxu0
        %v3663 = vadd.f32 %v3467, %v3662
        %3664 = vmatmul.bf16.gmra.mxu0 %v3573
        %v3665 = vpop.f32.mrf.mxu0
        %v3666 = vadd.f32 %v3472, %v3665
        %v3667 = vpop.f32.mrf.mxu0
        %v3668 = vadd.f32 %v3477, %v3667
        %3669 = vdwg.mxu0
        %3670 = vmatpush.bf16.msra.mxu0 0
        %3671 = vmatpush.bf16.msra.mxu0 0
        %3672 = vmatpush.bf16.msra.mxu0 0
        %3673 = vmatpush.bf16.msra.mxu0 0
        %3674 = vmatpush.bf16.msra.mxu0 0
        %3675 = vmatpush.bf16.msra.mxu0 0
        %3676 = vmatpush.bf16.msra.mxu0 %v3550
        %3677 = vmatpush.bf16.msra.mxu0 %v3542
        %3678 = vmatmul.bf16.gmra.mxu0 %v3570
        %v3679 = vpop.f32.mrf.mxu0
        %v3680 = vadd.f32 %v3462, %v3679
        %v3681 = vpop.f32.mrf.mxu0
        %v3682 = vadd.f32 %v3467, %v3681
        %3683 = vmatmul.bf16.gmra.mxu0 %v3573
        %v3684 = vpop.f32.mrf.mxu0
        %v3685 = vadd.f32 %v3472, %v3684
        %v3686 = vpop.f32.mrf.mxu0
        %v3687 = vadd.f32 %v3477, %v3686
        %3688 = vdwg.mxu0
        %3689 = vmatpush.bf16.msra.mxu0 0
        %3690 = vmatpush.bf16.msra.mxu0 0
        %3691 = vmatpush.bf16.msra.mxu0 0
        %3692 = vmatpush.bf16.msra.mxu0 0
        %3693 = vmatpush.bf16.msra.mxu0 0
        %3694 = vmatpush.bf16.msra.mxu0 0
        %3695 = vmatpush.bf16.msra.mxu0 %v3551
        %3696 = vmatpush.bf16.msra.mxu0 %v3543
        %3697 = vmatmul.bf16.gmra.mxu0 %v3570
        %v3698 = vpop.f32.mrf.mxu0
        %v3699 = vadd.f32 %v3462, %v3698
        %v3700 = vpop.f32.mrf.mxu0
        %v3701 = vadd.f32 %v3467, %v3700
        %3702 = vmatmul.bf16.gmra.mxu0 %v3573
        %v3703 = vpop.f32.mrf.mxu0
        %v3704 = vadd.f32 %v3472, %v3703
        %v3705 = vpop.f32.mrf.mxu0
        %v3706 = vadd.f32 %v3477, %v3705
        %3707 = vdwg.mxu0
        %3708 = vmatpush.bf16.msra.mxu0 0
        %3709 = vmatpush.bf16.msra.mxu0 0
        %3710 = vmatpush.bf16.msra.mxu0 0
        %3711 = vmatpush.bf16.msra.mxu0 0
        %3712 = vmatpush.bf16.msra.mxu0 0
        %3713 = vmatpush.bf16.msra.mxu0 0
        %3714 = vmatpush.bf16.msra.mxu0 %v3552
        %3715 = vmatpush.bf16.msra.mxu0 %v3544
        %3716 = vmatmul.bf16.gmra.mxu0 %v3570
        %v3717 = vpop.f32.mrf.mxu0
        %v3718 = vadd.f32 %v3462, %v3717
        %v3719 = vpop.f32.mrf.mxu0
        %v3720 = vadd.f32 %v3467, %v3719
        %3721 = vmatmul.bf16.gmra.mxu0 %v3573
        %v3722 = vpop.f32.mrf.mxu0
        %v3723 = vadd.f32 %v3472, %v3722
        %v3724 = vpop.f32.mrf.mxu0
        %v3725 = vadd.f32 %v3477, %v3724
        %3726 = vdwg.mxu0
        %v3727 = vadd.f32 %v3585, %v3604
        %v3728 = vadd.f32 %v3727, %v3623
        %v3729 = vadd.f32 %v3728, %v3642
        %v3730 = vadd.f32 %v3729, %v3661
        %v3731 = vadd.f32 %v3730, %v3680
        %v3732 = vadd.f32 %v3731, %v3699
        %v3733 = vadd.f32 %v3732, %v3718
        %3734 = vadd.xlane.f32.xlu0 %v3733
        %v3735 = vpop.xlane.xlu0 %3734
        %v3736 = vadd.f32 %v3587, %v3606
        %v3737 = vadd.f32 %v3736, %v3625
        %v3738 = vadd.f32 %v3737, %v3644
        %v3739 = vadd.f32 %v3738, %v3663
        %v3740 = vadd.f32 %v3739, %v3682
        %v3741 = vadd.f32 %v3740, %v3701
        %v3742 = vadd.f32 %v3741, %v3720
        %3743 = vadd.xlane.f32.xlu0 %v3742
        %v3744 = vpop.xlane.xlu0 %3743
        %v3745 = vadd.f32 %v3590, %v3609
        %v3746 = vadd.f32 %v3745, %v3628
        %v3747 = vadd.f32 %v3746, %v3647
        %v3748 = vadd.f32 %v3747, %v3666
        %v3749 = vadd.f32 %v3748, %v3685
        %v3750 = vadd.f32 %v3749, %v3704
        %v3751 = vadd.f32 %v3750, %v3723
        %3752 = vadd.xlane.f32.xlu0 %v3751
        %v3753 = vpop.xlane.xlu0 %3752
        %v3754 = vadd.f32 %v3592, %v3611
        %v3755 = vadd.f32 %v3754, %v3630
        %v3756 = vadd.f32 %v3755, %v3649
        %v3757 = vadd.f32 %v3756, %v3668
        %v3758 = vadd.f32 %v3757, %v3687
        %v3759 = vadd.f32 %v3758, %v3706
        %v3760 = vadd.f32 %v3759, %v3725
        %3761 = vadd.xlane.f32.xlu0 %v3760
        %v3762 = vpop.xlane.xlu0 %3761
        %v3763 = vmul.f32 %v3585, %v3585
        %v3764 = vmul.f32 %v3604, %v3604
        %v3765 = vmul.f32 %v3623, %v3623
        %v3766 = vmul.f32 %v3642, %v3642
        %v3767 = vmul.f32 %v3661, %v3661
        %v3768 = vmul.f32 %v3680, %v3680
        %v3769 = vmul.f32 %v3699, %v3699
        %v3770 = vmul.f32 %v3718, %v3718
        %v3771 = vmul.f32 %v3587, %v3587
        %v3772 = vmul.f32 %v3606, %v3606
        %v3773 = vmul.f32 %v3625, %v3625
        %v3774 = vmul.f32 %v3644, %v3644
        %v3775 = vmul.f32 %v3663, %v3663
        %v3776 = vmul.f32 %v3682, %v3682
        %v3777 = vmul.f32 %v3701, %v3701
        %v3778 = vmul.f32 %v3720, %v3720
        %v3779 = vmul.f32 %v3590, %v3590
        %v3780 = vmul.f32 %v3609, %v3609
        %v3781 = vmul.f32 %v3628, %v3628
        %v3782 = vmul.f32 %v3647, %v3647
        %v3783 = vmul.f32 %v3666, %v3666
        %v3784 = vmul.f32 %v3685, %v3685
        %v3785 = vmul.f32 %v3704, %v3704
        %v3786 = vmul.f32 %v3723, %v3723
        %v3787 = vmul.f32 %v3592, %v3592
        %v3788 = vmul.f32 %v3611, %v3611
        %v3789 = vmul.f32 %v3630, %v3630
        %v3790 = vmul.f32 %v3649, %v3649
        %v3791 = vmul.f32 %v3668, %v3668
        %v3792 = vmul.f32 %v3687, %v3687
        %v3793 = vmul.f32 %v3706, %v3706
        %v3794 = vmul.f32 %v3725, %v3725
        %v3795 = vadd.f32 %v3763, %v3764
        %v3796 = vadd.f32 %v3795, %v3765
        %v3797 = vadd.f32 %v3796, %v3766
        %v3798 = vadd.f32 %v3797, %v3767
        %v3799 = vadd.f32 %v3798, %v3768
        %v3800 = vadd.f32 %v3799, %v3769
        %v3801 = vadd.f32 %v3800, %v3770
        %3802 = vadd.xlane.f32.xlu0 %v3801
        %v3803 = vpop.xlane.xlu0 %3802
        %v3804 = vadd.f32 %v3771, %v3772
        %v3805 = vadd.f32 %v3804, %v3773
        %v3806 = vadd.f32 %v3805, %v3774
        %v3807 = vadd.f32 %v3806, %v3775
        %v3808 = vadd.f32 %v3807, %v3776
        %v3809 = vadd.f32 %v3808, %v3777
        %v3810 = vadd.f32 %v3809, %v3778
        %3811 = vadd.xlane.f32.xlu0 %v3810
        %v3812 = vpop.xlane.xlu0 %3811
        %v3813 = vadd.f32 %v3779, %v3780
        %v3814 = vadd.f32 %v3813, %v3781
        %v3815 = vadd.f32 %v3814, %v3782
        %v3816 = vadd.f32 %v3815, %v3783
        %v3817 = vadd.f32 %v3816, %v3784
        %v3818 = vadd.f32 %v3817, %v3785
        %v3819 = vadd.f32 %v3818, %v3786
        %3820 = vadd.xlane.f32.xlu0 %v3819
        %v3821 = vpop.xlane.xlu0 %3820
        %v3822 = vadd.f32 %v3787, %v3788
        %v3823 = vadd.f32 %v3822, %v3789
        %v3824 = vadd.f32 %v3823, %v3790
        %v3825 = vadd.f32 %v3824, %v3791
        %v3826 = vadd.f32 %v3825, %v3792
        %v3827 = vadd.f32 %v3826, %v3793
        %v3828 = vadd.f32 %v3827, %v3794
        %3829 = vadd.xlane.f32.xlu0 %v3828
        %v3830 = vpop.xlane.xlu0 %3829
        %v3831 = vmul.f32 %v3735, %v3118
        %v3832 = vmul.f32 %v3744, %v3118
        %v3833 = vmul.f32 %v3753, %v3118
        %v3834 = vmul.f32 %v3762, %v3118
        %v3835 = vmul.f32 %v3803, %v3118
        %v3836 = vmul.f32 %v3812, %v3118
        %v3837 = vmul.f32 %v3821, %v3118
        %v3838 = vmul.f32 %v3830, %v3118
        %v3839 = vmul.f32 %v3831, %v3831
        %v3840 = vmul.f32 %v3832, %v3832
        %v3841 = vmul.f32 %v3833, %v3833
        %v3842 = vmul.f32 %v3834, %v3834
        %v3843 = vsub.f32 %v3835, %v3839
        %v3844 = vsub.f32 %v3836, %v3840
        %v3845 = vsub.f32 %v3837, %v3841
        %v3846 = vsub.f32 %v3838, %v3842
        %v3847 = vmax.f32 %v3843, 0.0
        %v3848 = vmax.f32 %v3844, 0.0
        %v3849 = vmax.f32 %v3845, 0.0
        %v3850 = vmax.f32 %v3846, 0.0
        %v3851 = vsub.f32 %v3585, %v3831
        %v3852 = vsub.f32 %v3604, %v3831
        %v3853 = vsub.f32 %v3623, %v3831
        %v3854 = vsub.f32 %v3642, %v3831
        %v3855 = vsub.f32 %v3661, %v3831
        %v3856 = vsub.f32 %v3680, %v3831
        %v3857 = vsub.f32 %v3699, %v3831
        %v3858 = vsub.f32 %v3718, %v3831
        %v3859 = vsub.f32 %v3587, %v3832
        %v3860 = vsub.f32 %v3606, %v3832
        %v3861 = vsub.f32 %v3625, %v3832
        %v3862 = vsub.f32 %v3644, %v3832
        %v3863 = vsub.f32 %v3663, %v3832
        %v3864 = vsub.f32 %v3682, %v3832
        %v3865 = vsub.f32 %v3701, %v3832
        %v3866 = vsub.f32 %v3720, %v3832
        %v3867 = vsub.f32 %v3590, %v3833
        %v3868 = vsub.f32 %v3609, %v3833
        %v3869 = vsub.f32 %v3628, %v3833
        %v3870 = vsub.f32 %v3647, %v3833
        %v3871 = vsub.f32 %v3666, %v3833
        %v3872 = vsub.f32 %v3685, %v3833
        %v3873 = vsub.f32 %v3704, %v3833
        %v3874 = vsub.f32 %v3723, %v3833
        %v3875 = vsub.f32 %v3592, %v3834
        %v3876 = vsub.f32 %v3611, %v3834
        %v3877 = vsub.f32 %v3630, %v3834
        %v3878 = vsub.f32 %v3649, %v3834
        %v3879 = vsub.f32 %v3668, %v3834
        %v3880 = vsub.f32 %v3687, %v3834
        %v3881 = vsub.f32 %v3706, %v3834
        %v3882 = vsub.f32 %v3725, %v3834
        %v3883 = vadd.f32 %v3847, 1e-05
        %v3884 = vadd.f32 %v3848, 1e-05
        %v3885 = vadd.f32 %v3849, 1e-05
        %v3886 = vadd.f32 %v3850, 1e-05
        %v3887 = vrsqrt.pop %v3883
        %v3888 = vmul.f32 %v3887, %v3883
        %v3889 = vmul.f32 %v3888, %v3887
        %v3890 = vmul.f32 0.5, %v3889
        %v3891 = vsub.f32 1.5, %v3890
        %v3892 = vmul.f32 %v3887, %v3891
        %vm3893 = vweird.f32 %v3883
        %vm3894 = vweird.f32 %v3887
        %vm3895 = vmor %vm3893, %vm3894
        %v3896 = vsel %vm3895, %v3887, %v3892
        %v3897 = vrsqrt.pop %v3884
        %v3898 = vmul.f32 %v3897, %v3884
        %v3899 = vmul.f32 %v3898, %v3897
        %v3900 = vmul.f32 0.5, %v3899
        %v3901 = vsub.f32 1.5, %v3900
        %v3902 = vmul.f32 %v3897, %v3901
        %vm3903 = vweird.f32 %v3884
        %vm3904 = vweird.f32 %v3897
        %vm3905 = vmor %vm3903, %vm3904
        %v3906 = vsel %vm3905, %v3897, %v3902
        %v3907 = vrsqrt.pop %v3885
        %v3908 = vmul.f32 %v3907, %v3885
        %v3909 = vmul.f32 %v3908, %v3907
        %v3910 = vmul.f32 0.5, %v3909
        %v3911 = vsub.f32 1.5, %v3910
        %v3912 = vmul.f32 %v3907, %v3911
        %vm3913 = vweird.f32 %v3885
        %vm3914 = vweird.f32 %v3907
        %vm3915 = vmor %vm3913, %vm3914
        %v3916 = vsel %vm3915, %v3907, %v3912
        %v3917 = vrsqrt.pop %v3886
        %v3918 = vmul.f32 %v3917, %v3886
        %v3919 = vmul.f32 %v3918, %v3917
        %v3920 = vmul.f32 0.5, %v3919
        %v3921 = vsub.f32 1.5, %v3920
        %v3922 = vmul.f32 %v3917, %v3921
        %vm3923 = vweird.f32 %v3886
        %vm3924 = vweird.f32 %v3917
        %vm3925 = vmor %vm3923, %vm3924
        %v3926 = vsel %vm3925, %v3917, %v3922
        %v3927 = vmul.f32 %v3851, %v3896
        %v3928 = vmul.f32 %v3852, %v3896
        %v3929 = vmul.f32 %v3853, %v3896
        %v3930 = vmul.f32 %v3854, %v3896
        %v3931 = vmul.f32 %v3855, %v3896
        %v3932 = vmul.f32 %v3856, %v3896
        %v3933 = vmul.f32 %v3857, %v3896
        %v3934 = vmul.f32 %v3858, %v3896
        %v3935 = vmul.f32 %v3859, %v3906
        %v3936 = vmul.f32 %v3860, %v3906
        %v3937 = vmul.f32 %v3861, %v3906
        %v3938 = vmul.f32 %v3862, %v3906
        %v3939 = vmul.f32 %v3863, %v3906
        %v3940 = vmul.f32 %v3864, %v3906
        %v3941 = vmul.f32 %v3865, %v3906
        %v3942 = vmul.f32 %v3866, %v3906
        %v3943 = vmul.f32 %v3867, %v3916
        %v3944 = vmul.f32 %v3868, %v3916
        %v3945 = vmul.f32 %v3869, %v3916
        %v3946 = vmul.f32 %v3870, %v3916
        %v3947 = vmul.f32 %v3871, %v3916
        %v3948 = vmul.f32 %v3872, %v3916
        %v3949 = vmul.f32 %v3873, %v3916
        %v3950 = vmul.f32 %v3874, %v3916
        %v3951 = vmul.f32 %v3875, %v3926
        %v3952 = vmul.f32 %v3876, %v3926
        %v3953 = vmul.f32 %v3877, %v3926
        %v3954 = vmul.f32 %v3878, %v3926
        %v3955 = vmul.f32 %v3879, %v3926
        %v3956 = vmul.f32 %v3880, %v3926
        %v3957 = vmul.f32 %v3881, %v3926
        %v3958 = vmul.f32 %v3882, %v3926
        %3960 = vset.pattern.permute.xlu0 0
        %3961 = vperm.xlu0 %3960, %v452
        %v3962 = vpop.permute.xlu0 %3961
        %3965 = vset.pattern.permute.xlu0 0
        %3966 = vperm.xlu0 %3965, %v453
        %v3967 = vpop.permute.xlu0 %3966
        %3970 = vset.pattern.permute.xlu0 0
        %3971 = vperm.xlu0 %3970, %v454
        %v3972 = vpop.permute.xlu0 %3971
        %3975 = vset.pattern.permute.xlu0 0
        %3976 = vperm.xlu0 %3975, %v455
        %v3977 = vpop.permute.xlu0 %3976
        %v3979 = vmul.f32 %v3927, %v3962
        %v3980 = vmul.f32 %v3928, %v3962
        %v3981 = vmul.f32 %v3929, %v3962
        %v3982 = vmul.f32 %v3930, %v3962
        %v3983 = vmul.f32 %v3931, %v3962
        %v3984 = vmul.f32 %v3932, %v3962
        %v3985 = vmul.f32 %v3933, %v3962
        %v3986 = vmul.f32 %v3934, %v3962
        %v3987 = vmul.f32 %v3935, %v3967
        %v3988 = vmul.f32 %v3936, %v3967
        %v3989 = vmul.f32 %v3937, %v3967
        %v3990 = vmul.f32 %v3938, %v3967
        %v3991 = vmul.f32 %v3939, %v3967
        %v3992 = vmul.f32 %v3940, %v3967
        %v3993 = vmul.f32 %v3941, %v3967
        %v3994 = vmul.f32 %v3942, %v3967
        %v3995 = vmul.f32 %v3943, %v3972
        %v3996 = vmul.f32 %v3944, %v3972
        %v3997 = vmul.f32 %v3945, %v3972
        %v3998 = vmul.f32 %v3946, %v3972
        %v3999 = vmul.f32 %v3947, %v3972
        %v4000 = vmul.f32 %v3948, %v3972
        %v4001 = vmul.f32 %v3949, %v3972
        %v4002 = vmul.f32 %v3950, %v3972
        %v4003 = vmul.f32 %v3951, %v3977
        %v4004 = vmul.f32 %v3952, %v3977
        %v4005 = vmul.f32 %v3953, %v3977
        %v4006 = vmul.f32 %v3954, %v3977
        %v4007 = vmul.f32 %v3955, %v3977
        %v4008 = vmul.f32 %v3956, %v3977
        %v4009 = vmul.f32 %v3957, %v3977
        %v4010 = vmul.f32 %v3958, %v3977
        %4012 = vset.pattern.permute.xlu0 0
        %4013 = vperm.xlu0 %4012, %v456
        %v4014 = vpop.permute.xlu0 %4013
        %4017 = vset.pattern.permute.xlu0 0
        %4018 = vperm.xlu0 %4017, %v457
        %v4019 = vpop.permute.xlu0 %4018
        %4022 = vset.pattern.permute.xlu0 0
        %4023 = vperm.xlu0 %4022, %v458
        %v4024 = vpop.permute.xlu0 %4023
        %4027 = vset.pattern.permute.xlu0 0
        %4028 = vperm.xlu0 %4027, %v459
        %v4029 = vpop.permute.xlu0 %4028
        %v4031 = vadd.f32 %v3979, %v4014
        %v4032 = vadd.f32 %v3980, %v4014
        %v4033 = vadd.f32 %v3981, %v4014
        %v4034 = vadd.f32 %v3982, %v4014
        %v4035 = vadd.f32 %v3983, %v4014
        %v4036 = vadd.f32 %v3984, %v4014
        %v4037 = vadd.f32 %v3985, %v4014
        %v4038 = vadd.f32 %v3986, %v4014
        %v4039 = vadd.f32 %v3987, %v4019
        %v4040 = vadd.f32 %v3988, %v4019
        %v4041 = vadd.f32 %v3989, %v4019
        %v4042 = vadd.f32 %v3990, %v4019
        %v4043 = vadd.f32 %v3991, %v4019
        %v4044 = vadd.f32 %v3992, %v4019
        %v4045 = vadd.f32 %v3993, %v4019
        %v4046 = vadd.f32 %v3994, %v4019
        %v4047 = vadd.f32 %v3995, %v4024
        %v4048 = vadd.f32 %v3996, %v4024
        %v4049 = vadd.f32 %v3997, %v4024
        %v4050 = vadd.f32 %v3998, %v4024
        %v4051 = vadd.f32 %v3999, %v4024
        %v4052 = vadd.f32 %v4000, %v4024
        %v4053 = vadd.f32 %v4001, %v4024
        %v4054 = vadd.f32 %v4002, %v4024
        %v4055 = vadd.f32 %v4003, %v4029
        %v4056 = vadd.f32 %v4004, %v4029
        %v4057 = vadd.f32 %v4005, %v4029
        %v4058 = vadd.f32 %v4006, %v4029
        %v4059 = vadd.f32 %v4007, %v4029
        %v4060 = vadd.f32 %v4008, %v4029
        %v4061 = vadd.f32 %v4009, %v4029
        %v4062 = vadd.f32 %v4010, %v4029
        %v4063 = vmax.f32 %v4031, 0.0
        %v4064 = vmax.f32 %v4032, 0.0
        %v4065 = vmax.f32 %v4033, 0.0
        %v4066 = vmax.f32 %v4034, 0.0
        %v4067 = vmax.f32 %v4035, 0.0
        %v4068 = vmax.f32 %v4036, 0.0
        %v4069 = vmax.f32 %v4037, 0.0
        %v4070 = vmax.f32 %v4038, 0.0
        %v4071 = vmax.f32 %v4039, 0.0
        %v4072 = vmax.f32 %v4040, 0.0
        %v4073 = vmax.f32 %v4041, 0.0
        %v4074 = vmax.f32 %v4042, 0.0
        %v4075 = vmax.f32 %v4043, 0.0
        %v4076 = vmax.f32 %v4044, 0.0
        %v4077 = vmax.f32 %v4045, 0.0
        %v4078 = vmax.f32 %v4046, 0.0
        %v4079 = vmax.f32 %v4047, 0.0
        %v4080 = vmax.f32 %v4048, 0.0
        %v4081 = vmax.f32 %v4049, 0.0
        %v4082 = vmax.f32 %v4050, 0.0
        %v4083 = vmax.f32 %v4051, 0.0
        %v4084 = vmax.f32 %v4052, 0.0
        %v4085 = vmax.f32 %v4053, 0.0
        %v4086 = vmax.f32 %v4054, 0.0
        %v4087 = vmax.f32 %v4055, 0.0
        %v4088 = vmax.f32 %v4056, 0.0
        %v4089 = vmax.f32 %v4057, 0.0
        %v4090 = vmax.f32 %v4058, 0.0
        %v4091 = vmax.f32 %v4059, 0.0
        %v4092 = vmax.f32 %v4060, 0.0
        %v4093 = vmax.f32 %v4061, 0.0
        %v4094 = vmax.f32 %v4062, 0.0
        %vm4095 = vcmp.gt.s32.totalorder %v485, 0
        %v4096 = vsel %vm4095, 1, 0
        %v4097 = vperm.slane %v4096, 0
        %vm4098 = vcmp.eq.s32.totalorder %v4097, 1
        %v4099 = vsel %vm4098, %v3313, -1e+09
        %v4100 = vsel %vm4098, %v3315, -1e+09
        %v4101 = vsel %vm4098, %v3318, -1e+09
        %v4102 = vsel %vm4098, %v3320, -1e+09
        %vm4103 = vcmp.gt.s32.totalorder %v485, 1
        %v4104 = vsel %vm4103, 1, 0
        %v4105 = vperm.slane %v4104, 0
        %vm4106 = vcmp.eq.s32.totalorder %v4105, 1
        %v4107 = vsel %vm4106, %v3332, -1e+09
        %v4108 = vsel %vm4106, %v3334, -1e+09
        %v4109 = vsel %vm4106, %v3337, -1e+09
        %v4110 = vsel %vm4106, %v3339, -1e+09
        %vm4111 = vcmp.gt.s32.totalorder %v485, 2
        %v4112 = vsel %vm4111, 1, 0
        %v4113 = vperm.slane %v4112, 0
        %vm4114 = vcmp.eq.s32.totalorder %v4113, 1
        %v4115 = vsel %vm4114, %v3351, -1e+09
        %v4116 = vsel %vm4114, %v3353, -1e+09
        %v4117 = vsel %vm4114, %v3356, -1e+09
        %v4118 = vsel %vm4114, %v3358, -1e+09
        %vm4119 = vcmp.gt.s32.totalorder %v485, 3
        %v4120 = vsel %vm4119, 1, 0
        %v4121 = vperm.slane %v4120, 0
        %vm4122 = vcmp.eq.s32.totalorder %v4121, 1
        %v4123 = vsel %vm4122, %v3370, -1e+09
        %v4124 = vsel %vm4122, %v3372, -1e+09
        %v4125 = vsel %vm4122, %v3375, -1e+09
        %v4126 = vsel %vm4122, %v3377, -1e+09
        %vm4127 = vcmp.gt.s32.totalorder %v485, 4
        %v4128 = vsel %vm4127, 1, 0
        %v4129 = vperm.slane %v4128, 0
        %vm4130 = vcmp.eq.s32.totalorder %v4129, 1
        %v4131 = vsel %vm4130, %v3389, -1e+09
        %v4132 = vsel %vm4130, %v3391, -1e+09
        %v4133 = vsel %vm4130, %v3394, -1e+09
        %v4134 = vsel %vm4130, %v3396, -1e+09
        %vm4135 = vcmp.gt.s32.totalorder %v485, 5
        %v4136 = vsel %vm4135, 1, 0
        %v4137 = vperm.slane %v4136, 0
        %vm4138 = vcmp.eq.s32.totalorder %v4137, 1
        %v4139 = vsel %vm4138, %v3408, -1e+09
        %v4140 = vsel %vm4138, %v3410, -1e+09
        %v4141 = vsel %vm4138, %v3413, -1e+09
        %v4142 = vsel %vm4138, %v3415, -1e+09
        %vm4143 = vcmp.gt.s32.totalorder %v485, 6
        %v4144 = vsel %vm4143, 1, 0
        %v4145 = vperm.slane %v4144, 0
        %vm4146 = vcmp.eq.s32.totalorder %v4145, 1
        %v4147 = vsel %vm4146, %v3427, -1e+09
        %v4148 = vsel %vm4146, %v3429, -1e+09
        %v4149 = vsel %vm4146, %v3432, -1e+09
        %v4150 = vsel %vm4146, %v3434, -1e+09
        %vm4151 = vcmp.gt.s32.totalorder %v485, 7
        %v4152 = vsel %vm4151, 1, 0
        %v4153 = vperm.slane %v4152, 0
        %vm4154 = vcmp.eq.s32.totalorder %v4153, 1
        %v4155 = vsel %vm4154, %v3446, -1e+09
        %v4156 = vsel %vm4154, %v3448, -1e+09
        %v4157 = vsel %vm4154, %v3451, -1e+09
        %v4158 = vsel %vm4154, %v3453, -1e+09
        %v4159 = vmax.f32 %v4099, %v4107
        %v4160 = vmax.f32 %v4100, %v4108
        %v4161 = vmax.f32 %v4101, %v4109
        %v4162 = vmax.f32 %v4102, %v4110
        %v4163 = vmax.f32 %v4159, %v4115
        %v4164 = vmax.f32 %v4160, %v4116
        %v4165 = vmax.f32 %v4161, %v4117
        %v4166 = vmax.f32 %v4162, %v4118
        %v4167 = vmax.f32 %v4163, %v4123
        %v4168 = vmax.f32 %v4164, %v4124
        %v4169 = vmax.f32 %v4165, %v4125
        %v4170 = vmax.f32 %v4166, %v4126
        %v4171 = vmax.f32 %v4167, %v4131
        %v4172 = vmax.f32 %v4168, %v4132
        %v4173 = vmax.f32 %v4169, %v4133
        %v4174 = vmax.f32 %v4170, %v4134
        %v4175 = vmax.f32 %v4171, %v4139
        %v4176 = vmax.f32 %v4172, %v4140
        %v4177 = vmax.f32 %v4173, %v4141
        %v4178 = vmax.f32 %v4174, %v4142
        %v4179 = vmax.f32 %v4175, %v4147
        %v4180 = vmax.f32 %v4176, %v4148
        %v4181 = vmax.f32 %v4177, %v4149
        %v4182 = vmax.f32 %v4178, %v4150
        %v4183 = vmax.f32 %v4179, %v4155
        %v4184 = vmax.f32 %v4180, %v4156
        %v4185 = vmax.f32 %v4181, %v4157
        %v4186 = vmax.f32 %v4182, %v4158
        %v4187 = vsub.f32 %v4099, %v4183
        %v4188 = vsub.f32 %v4100, %v4184
        %v4189 = vsub.f32 %v4101, %v4185
        %v4190 = vsub.f32 %v4102, %v4186
        %v4191 = vmul.f32 %v4187, 1.442695
        %v4192 = vpow.pop %v4191
        %v4193 = vmul.f32 %v4188, 1.442695
        %v4194 = vpow.pop %v4193
        %v4195 = vmul.f32 %v4189, 1.442695
        %v4196 = vpow.pop %v4195
        %v4197 = vmul.f32 %v4190, 1.442695
        %v4198 = vpow.pop %v4197
        %v4199 = vadd.f32 %v4192, 0.0
        %v4200 = vadd.f32 %v4194, 0.0
        %v4201 = vadd.f32 %v4196, 0.0
        %v4202 = vadd.f32 %v4198, 0.0
        %v4203 = vmul.f32 %v4192, %v4063
        %v4204 = vmul.f32 %v4194, %v4071
        %v4205 = vmul.f32 %v4196, %v4079
        %v4206 = vmul.f32 %v4198, %v4087
        %v4207 = vadd.f32 %v4203, 0.0
        %v4208 = vadd.f32 %v4204, 0.0
        %v4209 = vadd.f32 %v4205, 0.0
        %v4210 = vadd.f32 %v4206, 0.0
        %v4211 = vsub.f32 %v4107, %v4183
        %v4212 = vsub.f32 %v4108, %v4184
        %v4213 = vsub.f32 %v4109, %v4185
        %v4214 = vsub.f32 %v4110, %v4186
        %v4215 = vmul.f32 %v4211, 1.442695
        %v4216 = vpow.pop %v4215
        %v4217 = vmul.f32 %v4212, 1.442695
        %v4218 = vpow.pop %v4217
        %v4219 = vmul.f32 %v4213, 1.442695
        %v4220 = vpow.pop %v4219
        %v4221 = vmul.f32 %v4214, 1.442695
        %v4222 = vpow.pop %v4221
        %v4223 = vadd.f32 %v4199, %v4216
        %v4224 = vadd.f32 %v4200, %v4218
        %v4225 = vadd.f32 %v4201, %v4220
        %v4226 = vadd.f32 %v4202, %v4222
        %v4227 = vmul.f32 %v4216, %v4064
        %v4228 = vmul.f32 %v4218, %v4072
        %v4229 = vmul.f32 %v4220, %v4080
        %v4230 = vmul.f32 %v4222, %v4088
        %v4231 = vadd.f32 %v4207, %v4227
        %v4232 = vadd.f32 %v4208, %v4228
        %v4233 = vadd.f32 %v4209, %v4229
        %v4234 = vadd.f32 %v4210, %v4230
        %v4235 = vsub.f32 %v4115, %v4183
        %v4236 = vsub.f32 %v4116, %v4184
        %v4237 = vsub.f32 %v4117, %v4185
        %v4238 = vsub.f32 %v4118, %v4186
        %v4239 = vmul.f32 %v4235, 1.442695
        %v4240 = vpow.pop %v4239
        %v4241 = vmul.f32 %v4236, 1.442695
        %v4242 = vpow.pop %v4241
        %v4243 = vmul.f32 %v4237, 1.442695
        %v4244 = vpow.pop %v4243
        %v4245 = vmul.f32 %v4238, 1.442695
        %v4246 = vpow.pop %v4245
        %v4247 = vadd.f32 %v4223, %v4240
        %v4248 = vadd.f32 %v4224, %v4242
        %v4249 = vadd.f32 %v4225, %v4244
        %v4250 = vadd.f32 %v4226, %v4246
        %v4251 = vmul.f32 %v4240, %v4065
        %v4252 = vmul.f32 %v4242, %v4073
        %v4253 = vmul.f32 %v4244, %v4081
        %v4254 = vmul.f32 %v4246, %v4089
        %v4255 = vadd.f32 %v4231, %v4251
        %v4256 = vadd.f32 %v4232, %v4252
        %v4257 = vadd.f32 %v4233, %v4253
        %v4258 = vadd.f32 %v4234, %v4254
        %v4259 = vsub.f32 %v4123, %v4183
        %v4260 = vsub.f32 %v4124, %v4184
        %v4261 = vsub.f32 %v4125, %v4185
        %v4262 = vsub.f32 %v4126, %v4186
        %v4263 = vmul.f32 %v4259, 1.442695
        %v4264 = vpow.pop %v4263
        %v4265 = vmul.f32 %v4260, 1.442695
        %v4266 = vpow.pop %v4265
        %v4267 = vmul.f32 %v4261, 1.442695
        %v4268 = vpow.pop %v4267
        %v4269 = vmul.f32 %v4262, 1.442695
        %v4270 = vpow.pop %v4269
        %v4271 = vadd.f32 %v4247, %v4264
        %v4272 = vadd.f32 %v4248, %v4266
        %v4273 = vadd.f32 %v4249, %v4268
        %v4274 = vadd.f32 %v4250, %v4270
        %v4275 = vmul.f32 %v4264, %v4066
        %v4276 = vmul.f32 %v4266, %v4074
        %v4277 = vmul.f32 %v4268, %v4082
        %v4278 = vmul.f32 %v4270, %v4090
        %v4279 = vadd.f32 %v4255, %v4275
        %v4280 = vadd.f32 %v4256, %v4276
        %v4281 = vadd.f32 %v4257, %v4277
        %v4282 = vadd.f32 %v4258, %v4278
        %v4283 = vsub.f32 %v4131, %v4183
        %v4284 = vsub.f32 %v4132, %v4184
        %v4285 = vsub.f32 %v4133, %v4185
        %v4286 = vsub.f32 %v4134, %v4186
        %v4287 = vmul.f32 %v4283, 1.442695
        %v4288 = vpow.pop %v4287
        %v4289 = vmul.f32 %v4284, 1.442695
        %v4290 = vpow.pop %v4289
        %v4291 = vmul.f32 %v4285, 1.442695
        %v4292 = vpow.pop %v4291
        %v4293 = vmul.f32 %v4286, 1.442695
        %v4294 = vpow.pop %v4293
        %v4295 = vadd.f32 %v4271, %v4288
        %v4296 = vadd.f32 %v4272, %v4290
        %v4297 = vadd.f32 %v4273, %v4292
        %v4298 = vadd.f32 %v4274, %v4294
        %v4299 = vmul.f32 %v4288, %v4067
        %v4300 = vmul.f32 %v4290, %v4075
        %v4301 = vmul.f32 %v4292, %v4083
        %v4302 = vmul.f32 %v4294, %v4091
        %v4303 = vadd.f32 %v4279, %v4299
        %v4304 = vadd.f32 %v4280, %v4300
        %v4305 = vadd.f32 %v4281, %v4301
        %v4306 = vadd.f32 %v4282, %v4302
        %v4307 = vsub.f32 %v4139, %v4183
        %v4308 = vsub.f32 %v4140, %v4184
        %v4309 = vsub.f32 %v4141, %v4185
        %v4310 = vsub.f32 %v4142, %v4186
        %v4311 = vmul.f32 %v4307, 1.442695
        %v4312 = vpow.pop %v4311
        %v4313 = vmul.f32 %v4308, 1.442695
        %v4314 = vpow.pop %v4313
        %v4315 = vmul.f32 %v4309, 1.442695
        %v4316 = vpow.pop %v4315
        %v4317 = vmul.f32 %v4310, 1.442695
        %v4318 = vpow.pop %v4317
        %v4319 = vadd.f32 %v4295, %v4312
        %v4320 = vadd.f32 %v4296, %v4314
        %v4321 = vadd.f32 %v4297, %v4316
        %v4322 = vadd.f32 %v4298, %v4318
        %v4323 = vmul.f32 %v4312, %v4068
        %v4324 = vmul.f32 %v4314, %v4076
        %v4325 = vmul.f32 %v4316, %v4084
        %v4326 = vmul.f32 %v4318, %v4092
        %v4327 = vadd.f32 %v4303, %v4323
        %v4328 = vadd.f32 %v4304, %v4324
        %v4329 = vadd.f32 %v4305, %v4325
        %v4330 = vadd.f32 %v4306, %v4326
        %v4331 = vsub.f32 %v4147, %v4183
        %v4332 = vsub.f32 %v4148, %v4184
        %v4333 = vsub.f32 %v4149, %v4185
        %v4334 = vsub.f32 %v4150, %v4186
        %v4335 = vmul.f32 %v4331, 1.442695
        %v4336 = vpow.pop %v4335
        %v4337 = vmul.f32 %v4332, 1.442695
        %v4338 = vpow.pop %v4337
        %v4339 = vmul.f32 %v4333, 1.442695
        %v4340 = vpow.pop %v4339
        %v4341 = vmul.f32 %v4334, 1.442695
        %v4342 = vpow.pop %v4341
        %v4343 = vadd.f32 %v4319, %v4336
        %v4344 = vadd.f32 %v4320, %v4338
        %v4345 = vadd.f32 %v4321, %v4340
        %v4346 = vadd.f32 %v4322, %v4342
        %v4347 = vmul.f32 %v4336, %v4069
        %v4348 = vmul.f32 %v4338, %v4077
        %v4349 = vmul.f32 %v4340, %v4085
        %v4350 = vmul.f32 %v4342, %v4093
        %v4351 = vadd.f32 %v4327, %v4347
        %v4352 = vadd.f32 %v4328, %v4348
        %v4353 = vadd.f32 %v4329, %v4349
        %v4354 = vadd.f32 %v4330, %v4350
        %v4355 = vsub.f32 %v4155, %v4183
        %v4356 = vsub.f32 %v4156, %v4184
        %v4357 = vsub.f32 %v4157, %v4185
        %v4358 = vsub.f32 %v4158, %v4186
        %v4359 = vmul.f32 %v4355, 1.442695
        %v4360 = vpow.pop %v4359
        %v4361 = vmul.f32 %v4356, 1.442695
        %v4362 = vpow.pop %v4361
        %v4363 = vmul.f32 %v4357, 1.442695
        %v4364 = vpow.pop %v4363
        %v4365 = vmul.f32 %v4358, 1.442695
        %v4366 = vpow.pop %v4365
        %v4367 = vadd.f32 %v4343, %v4360
        %v4368 = vadd.f32 %v4344, %v4362
        %v4369 = vadd.f32 %v4345, %v4364
        %v4370 = vadd.f32 %v4346, %v4366
        %v4371 = vmul.f32 %v4360, %v4070
        %v4372 = vmul.f32 %v4362, %v4078
        %v4373 = vmul.f32 %v4364, %v4086
        %v4374 = vmul.f32 %v4366, %v4094
        %v4375 = vadd.f32 %v4351, %v4371
        %v4376 = vadd.f32 %v4352, %v4372
        %v4377 = vadd.f32 %v4353, %v4373
        %v4378 = vadd.f32 %v4354, %v4374
        %v4379 = vrcp.pop %v4367
        %v4380 = vrcp.pop %v4368
        %v4381 = vrcp.pop %v4369
        %v4382 = vrcp.pop %v4370
        %v4383 = vmul.f32 %v4375, %v4379
        %v4384 = vmul.f32 %v4376, %v4380
        %v4385 = vmul.f32 %v4377, %v4381
        %v4386 = vmul.f32 %v4378, %v4382
        %4387 = vst [vmem:[%s418] sm:$0xff] %v4383
        %4388 = vst [vmem:[%s418 + $0x8] sm:$0xff] %v4384
        %4389 = vst [vmem:[%s418 + $0x10] sm:$0xff] %v4385
        %4390 = vst [vmem:[%s418 + $0x18] sm:$0xff] %v4386
        %s4391 = sand.u32 %s265, 1
        %s4392 = scalar_lea.sflag [#allocation4], %s4391
        %s4393 = sand.u32 %s265, 1
        %s4394 = smul.addr %s4393, 32
        %s4395 = scalar_lea.vmem [#allocation5], %s4394
        // Predicated region
        $region65: #{tpu_custom_call.1} parent=59 // pred_check
          %p4396 = pneg %p275
        $region66: #{tpu_custom_call.1} parent=59 // pred_check_branch
          %4398 = sbr.rel (%p4396) target = $region68
        $region67: #{tpu_custom_call.1} parent=59 // pred_region
          %4400 = vsyncadd %s4392, 0
          %s4401 = smul.addr %s27, 4
          %s4402 = smul.addr %s4401, 8
          %s4403 = scalar_lea.hbm %s10, %s4402
          %s4404 = sshll.u32 %s4395, 4
          %s4405 = int_to_ptr.vmem [resolvable:$true] %s4404
          %s4406 = sshll.u32 %s4403, 4
          %s4407 = int_to_ptr.hbm [resolvable:$true] %s4406
          %4412 = dma.vmem_to_hbm [thread:$0]  %s4405, 512, %s4407, %s4392, 128, 128, 8
        $region68: #{tpu_custom_call.1} parent=59 // pred_fallthru
          _
      $region60: #{tpu_custom_call.1} parent=5 // pred_fallthru
        _
      %p4413 = scmp.le.s32.totalorder 2, %s22
      // Predicated region
      $region69: #{tpu_custom_call.1} parent=5 // pred_check
        %p4414 = pneg %p4413
      $region70: #{tpu_custom_call.1} parent=5 // pred_check_branch
        %4416 = sbr.rel (%p4414) target = $region72
      $region71: #{tpu_custom_call.1} parent=5 // pred_region
        %s4417 = ssub.s32 %s22, 2
        // Predicated region
        $region73: #{tpu_custom_call.1} parent=71 // pred_check
          %p4418 = pneg %p281
        $region74: #{tpu_custom_call.1} parent=71 // pred_check_branch
          %4420 = sbr.rel (%p4418) target = $region76
        $region75: #{tpu_custom_call.1} parent=71 // pred_region
          %s4421 = sand.u32 %s266, 1
          %s4422 = scalar_lea.sflag [#allocation4], %s4421
          %s4423 = sand.u32 %s266, 1
          %s4424 = smul.addr %s4423, 32
          %s4425 = scalar_lea.vmem [#allocation5], %s4424
          %4427 = dma.done %s4422, 512
        $region76: #{tpu_custom_call.1} parent=71 // pred_fallthru
          _
      $region72: #{tpu_custom_call.1} parent=5 // pred_fallthru
        _
    $region6: #{tpu_custom_call.1} parent=1 // loop_footer
      %s26 = sadd.s32 1, %s22
    $region7: #{tpu_custom_call.1} parent=1 // loop_footer_branch
      %21 = sbr.rel target = $region3
    $region8: #{tpu_custom_call.1} parent=1 // loop_exit
      _
    %4428 = vsyncpa [#allocation3], 1
    %s4429 = scalar_lea.sflag [#allocation3], 1
    %4430 = vsyncpa %s4429, 1
    %4431 = vsyncpa [#allocation4], 1
    %s4432 = scalar_lea.sflag [#allocation4], 1
    %4433 = vsyncpa %s4432, 1

</llo_original>
